<compile_context>
chip_gen: v7x
topology: tpu7x:2x2x1
jax: 0.10.0
libtpu: 0.0.40
codegen_flags: <defaults>
</compile_context>

<pallas_src>
import functools
import math

import jax
import jax.numpy as jnp
from jax.experimental import pallas as pl
from jax.experimental.pallas import tpu as pltpu

_LANE = 128
# bf16 operands hit the fast MXU path on v5e/v6e/v7x; accumulation is f32.
_MATMUL_DTYPE = jnp.bfloat16


# ----------------------------------------------------------------------------
# In-kernel helpers
# ----------------------------------------------------------------------------

def _mm(a, b, *, trans_b=False):
    """MXU matmul: operands cast to _MATMUL_DTYPE, f32 accumulation."""
    a = a.astype(_MATMUL_DTYPE)
    b = b.astype(_MATMUL_DTYPE)
    dims = (((1,), (1,)), ((), ())) if trans_b else (((1,), (0,)), ((), ()))
    return jax.lax.dot_general(a, b, dims, preferred_element_type=jnp.float32)


def _layernorm(x, g, b):
    # Single-pass: var = E[x^2] - E[x]^2 (both reductions from the same operand).
    mu = jnp.mean(x, axis=-1, keepdims=True)
    ms = jnp.mean(x * x, axis=-1, keepdims=True)
    var = ms - mu * mu
    return (x - mu) * jax.lax.rsqrt(var + 1e-5) * g + b


def _gelu_new(x):  # GPT-2 "gelu_new" (tanh approximation); tanh lands on EUP
    c = math.sqrt(2.0 / math.pi)
    return 0.5 * x * (1.0 + jnp.tanh(c * (x + 0.044715 * x * x * x)))


# ----------------------------------------------------------------------------
# Fused, layer-streamed kernel.  grid = (B, n_layer):
#   axis 0 (batch)  -> "parallel"  (v7x second TC)
#   axis 1 (layer)  -> "arbitrary" (carried activation in VMEM scratch)
# ----------------------------------------------------------------------------

def _gpt2_fused_kernel(
    src_ref, in_w_ref, in_b_ref, wpe_ref,
    ln1_g_ref, ln1_b_ref,
    wq_ref, wk_ref, wv_ref, bq_ref, bk_ref, bv_ref,
    wo_ref, bo_ref,
    ln2_g_ref, ln2_b_ref,
    fc_w_ref, fc_b_ref, mlp_w_ref, mlp_b_ref,
    lnf_g_ref, lnf_b_ref,
    out1_w_ref, out1_b_ref, out2_w_ref, out2_b_ref,
    o_ref, x_ref,
    *, n_head,
):
    layer = pl.program_id(1)
    num_layers = pl.num_programs(1)

    # ---- layer-0 prologue: in_layer + positional embedding -----------------
    @pl.when(layer == 0)
    def _():
        x_ref[...] = (_mm(src_ref[...], in_w_ref[...]) + in_b_ref[...]
                      + wpe_ref[...])
        # TODO(synk): GPT-2 embedding dropout omitted (eval-mode identity).

    x = x_ref[...]                              # [T, D] f32 for this batch
    T, D = x.shape
    hd = D // n_head
    scale = 1.0 / math.sqrt(hd)

    # Causal mask generated in-kernel (no HBM DMA, no VMEM residency).
    row = jax.lax.broadcasted_iota(jnp.int32, (T, T), 0)
    col = jax.lax.broadcasted_iota(jnp.int32, (T, T), 1)
    bias = jnp.where(row >= col, 0.0, -1e30).astype(jnp.float32)

    # ---- causal multi-head self-attention (pre-LN) --------------------------
    h = _layernorm(x, ln1_g_ref[...], ln1_b_ref[...])
    attn = None
    for hh in range(n_head):                    # static unroll; head-major W
        q = _mm(h, wq_ref[hh]) + bq_ref[hh]     # [T, hd]
        k = _mm(h, wk_ref[hh]) + bk_ref[hh]     # [T, hd]
        v = _mm(h, wv_ref[hh]) + bv_ref[hh]     # [T, hd]
        s = _mm(q, k, trans_b=True) * scale + bias          # [T, T] f32
        s = s - jnp.max(s, axis=-1, keepdims=True)
        p = jnp.exp(s)
        p = p * pl.reciprocal(jnp.sum(p, axis=-1, keepdims=True), approx=True)
        o = _mm(p, v)                           # [T, hd]
        # Fused output projection: attn = sum_h o_h @ W_proj[h]  (no concat)
        c = _mm(o, wo_ref[hh])                  # [T, D]
        attn = c if attn is None else attn + c
    x = x + attn + bo_ref[...]                  # residual + proj bias

    # ---- MLP (pre-LN, gelu_new) ---------------------------------------------
    h2 = _layernorm(x, ln2_g_ref[...], ln2_b_ref[...])
    m = _gelu_new(_mm(h2, fc_w_ref[...]) + fc_b_ref[...])
    x = x + _mm(m, mlp_w_ref[...]) + mlp_b_ref[...]          # residual
    x_ref[...] = x                              # carry to next layer

    # ---- last-layer epilogue: ln_f + out1 + ReLU + out2 ---------------------
    @pl.when(layer == num_layers - 1)
    def _():
        z = _layernorm(x, lnf_g_ref[...], lnf_b_ref[...])
        y = jnp.maximum(_mm(z, out1_w_ref[...]) + out1_b_ref[...], 0.0)
        # TODO(synk): out_layer1_dropout omitted (eval-mode identity).
        o_ref[...] = (_mm(y, out2_w_ref[...]) + out2_b_ref[...]).astype(o_ref.dtype)


# ----------------------------------------------------------------------------
# Parameter construction (deterministic, synthetic — no checkpoint load).
# Matmul weights are pre-cast to bf16 ONCE here; head-major layout; the tiny
# output head is lane-padded to 128 here (not per call).
# ----------------------------------------------------------------------------

def init_params(key, *, src_dim, trg_dim, hidden_out, d_model, n_head,
                n_layer, max_pos):
    hd = d_model // n_head
    keys = iter(jax.random.split(key, 16))
    f32 = jnp.float32

    def w(shape):
        return (jax.random.normal(next(keys), shape, f32) * 0.02).astype(
            _MATMUL_DTYPE)

    n_pad = ((trg_dim + _LANE - 1) // _LANE) * _LANE

    return {
        "in_w": w((src_dim, d_model)),
        "in_b": jnp.zeros((1, d_model), f32),
        "wpe": jax.random.normal(next(keys), (max_pos, d_model), f32) * 0.02,
        # stacked per-layer GPT-2 block weights, leading dim = n_layer
        "ln1_g": jnp.ones((n_layer, 1, d_model), f32),
        "ln1_b": jnp.zeros((n_layer, 1, d_model), f32),
        "wq": w((n_layer, n_head, d_model, hd)),
        "wk": w((n_layer, n_head, d_model, hd)),
        "wv": w((n_layer, n_head, d_model, hd)),
        "bq": jnp.zeros((n_layer, n_head, 1, hd), f32),
        "bk": jnp.zeros((n_layer, n_head, 1, hd), f32),
        "bv": jnp.zeros((n_layer, n_head, 1, hd), f32),
        "wo": w((n_layer, n_head, hd, d_model)),
        "bo": jnp.zeros((n_layer, 1, d_model), f32),
        "ln2_g": jnp.ones((n_layer, 1, d_model), f32),
        "ln2_b": jnp.zeros((n_layer, 1, d_model), f32),
        "fc_w": w((n_layer, d_model, 4 * d_model)),
        "fc_b": jnp.zeros((n_layer, 1, 4 * d_model), f32),
        "mlp_w": w((n_layer, 4 * d_model, d_model)),
        "mlp_b": jnp.zeros((n_layer, 1, d_model), f32),
        # final LN + output head
        "lnf_g": jnp.ones((1, d_model), f32),
        "lnf_b": jnp.zeros((1, d_model), f32),
        "out1_w": w((d_model, hidden_out)),
        "out1_b": jnp.zeros((1, hidden_out), f32),
        "out2_w": jnp.pad(w((hidden_out, trg_dim)),
                          ((0, 0), (0, n_pad - trg_dim))),
        "out2_b": jnp.zeros((1, n_pad), f32),
    }


# ----------------------------------------------------------------------------
# Forward pass (mirrors PretrainedGPT2.forward, inference mode)
# ----------------------------------------------------------------------------

def pretrained_gpt2_forward(params, src, *, n_head, trg_dim):
    B, T, S = src.shape
    D = params["in_w"].shape[1]
    H = n_head
    hd = D // H
    D4 = params["fc_w"].shape[-1]
    HID = params["out1_w"].shape[1]
    n_pad = params["out2_w"].shape[1]
    n_layer = params["fc_w"].shape[0]
    M = B * T

    # Index maps: grid = (batch b, layer l).
    per_batch = lambda b, l: (b, 0)
    const2 = lambda b, l: (0, 0)
    layer3 = lambda b, l: (l, 0, 0)
    layer4 = lambda b, l: (l, 0, 0, 0)

    in_specs = [
        pl.BlockSpec((T, S), per_batch),                # src (rows of batch b)
        pl.BlockSpec((S, D), const2),                   # in_w
        pl.BlockSpec((1, D), const2),                   # in_b
        pl.BlockSpec((T, D), const2),                   # wpe[:T] via BlockSpec
        pl.BlockSpec((None, 1, D), layer3),             # ln1_g
        pl.BlockSpec((None, 1, D), layer3),             # ln1_b
        pl.BlockSpec((None, H, D, hd), layer4),         # wq
        pl.BlockSpec((None, H, D, hd), layer4),         # wk
        pl.BlockSpec((None, H, D, hd), layer4),         # wv
        pl.BlockSpec((None, H, 1, hd), layer4),         # bq
        pl.BlockSpec((None, H, 1, hd), layer4),         # bk
        pl.BlockSpec((None, H, 1, hd), layer4),         # bv
        pl.BlockSpec((None, H, hd, D), layer4),         # wo
        pl.BlockSpec((None, 1, D), layer3),             # bo
        pl.BlockSpec((None, 1, D), layer3),             # ln2_g
        pl.BlockSpec((None, 1, D), layer3),             # ln2_b
        pl.BlockSpec((None, D, D4), layer3),            # fc_w
        pl.BlockSpec((None, 1, D4), layer3),            # fc_b
        pl.BlockSpec((None, D4, D), layer3),            # mlp_w
        pl.BlockSpec((None, 1, D), layer3),             # mlp_b
        pl.BlockSpec((1, D), const2),                   # lnf_g
        pl.BlockSpec((1, D), const2),                   # lnf_b
        pl.BlockSpec((D, HID), const2),                 # out1_w
        pl.BlockSpec((1, HID), const2),                 # out1_b
        pl.BlockSpec((HID, n_pad), const2),             # out2_w (lane-padded)
        pl.BlockSpec((1, n_pad), const2),               # out2_b (lane-padded)
    ]

    kernel = functools.partial(_gpt2_fused_kernel, n_head=n_head)
    out = pl.pallas_call(
        kernel,
        out_shape=jax.ShapeDtypeStruct((M, n_pad), jnp.float32),
        grid_spec=pltpu.PrefetchScalarGridSpec(
            num_scalar_prefetch=0,
            grid=(B, n_layer),
            in_specs=in_specs,
            out_specs=pl.BlockSpec((T, n_pad), per_batch),
            scratch_shapes=[pltpu.VMEM((T, D), jnp.float32)],  # carried x
        ),
        compiler_params=pltpu.CompilerParams(
            dimension_semantics=("parallel", "arbitrary")),
    )(
        src.reshape(M, S),
        params["in_w"], params["in_b"], params["wpe"],
        params["ln1_g"], params["ln1_b"],
        params["wq"], params["wk"], params["wv"],
        params["bq"], params["bk"], params["bv"],
        params["wo"], params["bo"],
        params["ln2_g"], params["ln2_b"],
        params["fc_w"], params["fc_b"], params["mlp_w"], params["mlp_b"],
        params["lnf_g"], params["lnf_b"],
        params["out1_w"], params["out1_b"],
        params["out2_w"], params["out2_b"],
    )
    return out[:, :trg_dim].reshape(B, T, trg_dim)


# ----------------------------------------------------------------------------
# Main
# ----------------------------------------------------------------------------

if __name__ == "__main__":
    B, T = 2, 8
    SRC_DIM, TRG_DIM = 16, 8
    D_MODEL, N_HEAD, N_LAYER = 64, 4, 2
    HIDDEN_OUT = 32
    MAX_POS = 32

    key = jax.random.PRNGKey(0)
    k_src, k_par = jax.random.split(key)
    src = jax.random.normal(k_src, (B, T, SRC_DIM), jnp.float32)

    params = init_params(
        k_par,
        src_dim=SRC_DIM,
        trg_dim=TRG_DIM,
        hidden_out=HIDDEN_OUT,
        d_model=D_MODEL,
        n_head=N_HEAD,
        n_layer=N_LAYER,
        max_pos=MAX_POS,
    )

    fwd = jax.jit(functools.partial(pretrained_gpt2_forward,
                                    n_head=N_HEAD, trg_dim=TRG_DIM))
    out = jax.block_until_ready(fwd(params, src))

    assert out.shape == (B, T, TRG_DIM), out.shape
    assert bool(jnp.all(jnp.isfinite(out)))
    print("KERNEL_OK")
</pallas_src>

<mosaic_0001>
module attributes {stable_mosaic.version = 11 : i64} {
  func.func @_gpt2_fused_kernel(%arg0: i32, %arg1: i32, %arg2: memref<8x16xf32, #tpu.memory_space<vmem>>, %arg3: memref<16x64xbf16, #tpu.memory_space<vmem>>, %arg4: memref<1x64xf32, #tpu.memory_space<vmem>>, %arg5: memref<8x64xf32, #tpu.memory_space<vmem>>, %arg6: memref<1x1x64xf32, #tpu.memory_space<vmem>>, %arg7: memref<1x1x64xf32, #tpu.memory_space<vmem>>, %arg8: memref<1x4x64x16xbf16, #tpu.memory_space<vmem>>, %arg9: memref<1x4x64x16xbf16, #tpu.memory_space<vmem>>, %arg10: memref<1x4x64x16xbf16, #tpu.memory_space<vmem>>, %arg11: memref<1x4x1x16xf32, #tpu.memory_space<vmem>>, %arg12: memref<1x4x1x16xf32, #tpu.memory_space<vmem>>, %arg13: memref<1x4x1x16xf32, #tpu.memory_space<vmem>>, %arg14: memref<1x4x16x64xbf16, #tpu.memory_space<vmem>>, %arg15: memref<1x1x64xf32, #tpu.memory_space<vmem>>, %arg16: memref<1x1x64xf32, #tpu.memory_space<vmem>>, %arg17: memref<1x1x64xf32, #tpu.memory_space<vmem>>, %arg18: memref<1x64x256xbf16, #tpu.memory_space<vmem>>, %arg19: memref<1x1x256xf32, #tpu.memory_space<vmem>>, %arg20: memref<1x256x64xbf16, #tpu.memory_space<vmem>>, %arg21: memref<1x1x64xf32, #tpu.memory_space<vmem>>, %arg22: memref<1x64xf32, #tpu.memory_space<vmem>>, %arg23: memref<1x64xf32, #tpu.memory_space<vmem>>, %arg24: memref<64x32xbf16, #tpu.memory_space<vmem>>, %arg25: memref<1x32xf32, #tpu.memory_space<vmem>>, %arg26: memref<32x128xbf16, #tpu.memory_space<vmem>>, %arg27: memref<1x128xf32, #tpu.memory_space<vmem>>, %arg28: memref<8x128xf32, #tpu.memory_space<vmem>>, %arg29: memref<8x64xf32, #tpu.memory_space<vmem>>) attributes {dimension_semantics = [#tpu.dimension_semantics<parallel>, #tpu.dimension_semantics<arbitrary>], iteration_bounds = array<i64: 2, 2>, scalar_prefetch = 0 : i64, scratch_operands = 1 : i64, tpu.core_type = #tpu.core_type<tc>, window_params = [{transform_indices = @transform_0, window_bounds = array<i64: 8, 16>}, {pipeline_mode = #tpu.pipeline_mode<synchronous>, transform_indices = @transform_1, window_bounds = array<i64: 16, 64>}, {pipeline_mode = #tpu.pipeline_mode<synchronous>, transform_indices = @transform_2, window_bounds = array<i64: 1, 64>}, {transform_indices = @transform_3, window_bounds = array<i64: 8, 64>}, {transform_indices = @transform_4, window_bounds = array<i64: 1, 1, 64>}, {transform_indices = @transform_5, window_bounds = array<i64: 1, 1, 64>}, {transform_indices = @transform_6, window_bounds = array<i64: 1, 4, 64, 16>}, {transform_indices = @transform_7, window_bounds = array<i64: 1, 4, 64, 16>}, {transform_indices = @transform_8, window_bounds = array<i64: 1, 4, 64, 16>}, {transform_indices = @transform_9, window_bounds = array<i64: 1, 4, 1, 16>}, {transform_indices = @transform_10, window_bounds = array<i64: 1, 4, 1, 16>}, {transform_indices = @transform_11, window_bounds = array<i64: 1, 4, 1, 16>}, {transform_indices = @transform_12, window_bounds = array<i64: 1, 4, 16, 64>}, {transform_indices = @transform_13, window_bounds = array<i64: 1, 1, 64>}, {transform_indices = @transform_14, window_bounds = array<i64: 1, 1, 64>}, {transform_indices = @transform_15, window_bounds = array<i64: 1, 1, 64>}, {transform_indices = @transform_16, window_bounds = array<i64: 1, 64, 256>}, {transform_indices = @transform_17, window_bounds = array<i64: 1, 1, 256>}, {transform_indices = @transform_18, window_bounds = array<i64: 1, 256, 64>}, {transform_indices = @transform_19, window_bounds = array<i64: 1, 1, 64>}, {pipeline_mode = #tpu.pipeline_mode<synchronous>, transform_indices = @transform_20, window_bounds = array<i64: 1, 64>}, {pipeline_mode = #tpu.pipeline_mode<synchronous>, transform_indices = @transform_21, window_bounds = array<i64: 1, 64>}, {pipeline_mode = #tpu.pipeline_mode<synchronous>, transform_indices = @transform_22, window_bounds = array<i64: 64, 32>}, {pipeline_mode = #tpu.pipeline_mode<synchronous>, transform_indices = @transform_23, window_bounds = array<i64: 1, 32>}, {pipeline_mode = #tpu.pipeline_mode<synchronous>, transform_indices = @transform_24, window_bounds = array<i64: 32, 128>}, {pipeline_mode = #tpu.pipeline_mode<synchronous>, transform_indices = @transform_25, window_bounds = array<i64: 1, 128>}, {transform_indices = @transform_26, window_bounds = array<i64: 8, 128>}]} {
    %c0_i32 = arith.constant 0 : i32
    %0 = arith.cmpi eq, %arg1, %c0_i32 : i32
    %1 = arith.extui %0 : i1 to i32
    %c0_i32_0 = arith.constant 0 : i32
    %2 = arith.cmpi ne, %1, %c0_i32_0 : i32
    scf.if %2 {
      %c0_194 = arith.constant 0 : index
      %c0_195 = arith.constant 0 : index
      %292 = vector.load %arg2[%c0_194, %c0_195] : memref<8x16xf32, #tpu.memory_space<vmem>>, vector<8x16xf32>
      %c0_196 = arith.constant 0 : index
      %c0_197 = arith.constant 0 : index
      %293 = vector.load %arg3[%c0_196, %c0_197] : memref<16x64xbf16, #tpu.memory_space<vmem>>, vector<16x64xbf16>
      %294 = arith.truncf %292 : vector<8x16xf32> to vector<8x16xbf16>
      %cst_198 = arith.constant dense<0.000000e+00> : vector<8x64xf32>
      %295 = tpu.matmul %294, %293, %cst_198 {dimension_numbers = #tpu.dot_dimension_numbers<[1], [0], [0], [1], [0, 0, 1, 1], [], []>} : vector<8x16xbf16>, vector<16x64xbf16>, vector<8x64xf32> -> vector<8x64xf32>
      %c0_199 = arith.constant 0 : index
      %c0_200 = arith.constant 0 : index
      %296 = vector.load %arg4[%c0_199, %c0_200] : memref<1x64xf32, #tpu.memory_space<vmem>>, vector<1x64xf32>
      %297 = vector.broadcast %296 : vector<1x64xf32> to vector<8x64xf32>
      %298 = arith.addf %295, %297 : vector<8x64xf32>
      %c0_201 = arith.constant 0 : index
      %c0_202 = arith.constant 0 : index
      %299 = vector.load %arg5[%c0_201, %c0_202] : memref<8x64xf32, #tpu.memory_space<vmem>>, vector<8x64xf32>
      %300 = arith.addf %298, %299 : vector<8x64xf32>
      %c0_203 = arith.constant 0 : index
      %c0_204 = arith.constant 0 : index
      %301 = vector.load %arg29[%c0_203, %c0_204] : memref<8x64xf32, #tpu.memory_space<vmem>>, vector<8x64xf32>
      tpu.vector_store %arg29[%c0_203, %c0_204], %300 {strides = array<i32>} : memref<8x64xf32, #tpu.memory_space<vmem>>, vector<8x64xf32>,
    } else {
    }
    %c0 = arith.constant 0 : index
    %c0_1 = arith.constant 0 : index
    %3 = vector.load %arg29[%c0, %c0_1] : memref<8x64xf32, #tpu.memory_space<vmem>>, vector<8x64xf32>
    %4 = tpu.iota {dimensions = array<i32: 0>} : vector<8x8xi32>
    %5 = tpu.iota {dimensions = array<i32: 1>} : vector<8x8xi32>
    %6 = arith.cmpi sge, %4, %5 : vector<8x8xi32>
    %cst = arith.constant 0.000000e+00 : f32
    %cst_2 = arith.constant -1.000000e+30 : f32
    %7 = vector.broadcast %cst : f32 to vector<8x8xf32>
    %8 = vector.broadcast %cst_2 : f32 to vector<8x8xf32>
    %9 = arith.select %6, %7, %8 : vector<8x8xi1>, vector<8x8xf32>
    %c0_3 = arith.constant 0 : index
    %c0_4 = arith.constant 0 : index
    %c0_5 = arith.constant 0 : index
    %10 = vector.load %arg6[%c0_3, %c0_4, %c0_5] : memref<1x1x64xf32, #tpu.memory_space<vmem>>, vector<1x1x64xf32>
    %11 = vector.shape_cast %10 : vector<1x1x64xf32> to vector<1x64xf32>
    %c0_6 = arith.constant 0 : index
    %c0_7 = arith.constant 0 : index
    %c0_8 = arith.constant 0 : index
    %12 = vector.load %arg7[%c0_6, %c0_7, %c0_8] : memref<1x1x64xf32, #tpu.memory_space<vmem>>, vector<1x1x64xf32>
    %13 = vector.shape_cast %12 : vector<1x1x64xf32> to vector<1x64xf32>
    %cst_9 = arith.constant dense<0.000000e+00> : vector<8xf32>
    %14 = vector.multi_reduction <add>, %3, %cst_9 [1] : vector<8x64xf32> to vector<8xf32>
    %15 = vector.shape_cast %14 : vector<8xf32> to vector<8x1xf32>
    %cst_10 = arith.constant 6.400000e+01 : f32
    %16 = vector.broadcast %cst_10 : f32 to vector<8x1xf32>
    %17 = arith.divf %15, %16 : vector<8x1xf32>
    %18 = arith.mulf %3, %3 : vector<8x64xf32>
    %cst_11 = arith.constant dense<0.000000e+00> : vector<8xf32>
    %19 = vector.multi_reduction <add>, %18, %cst_11 [1] : vector<8x64xf32> to vector<8xf32>
    %20 = vector.shape_cast %19 : vector<8xf32> to vector<8x1xf32>
    %cst_12 = arith.constant 6.400000e+01 : f32
    %21 = vector.broadcast %cst_12 : f32 to vector<8x1xf32>
    %22 = arith.divf %20, %21 : vector<8x1xf32>
    %23 = arith.mulf %17, %17 : vector<8x1xf32>
    %24 = arith.subf %22, %23 : vector<8x1xf32>
    %25 = vector.broadcast %17 : vector<8x1xf32> to vector<8x64xf32>
    %26 = arith.subf %3, %25 : vector<8x64xf32>
    %cst_13 = arith.constant 9.99999974E-6 : f32
    %27 = vector.broadcast %cst_13 : f32 to vector<8x1xf32>
    %28 = arith.addf %24, %27 : vector<8x1xf32>
    %29 = math.rsqrt %28 : vector<8x1xf32>
    %30 = vector.broadcast %29 : vector<8x1xf32> to vector<8x64xf32>
    %31 = arith.mulf %26, %30 : vector<8x64xf32>
    %32 = vector.broadcast %11 : vector<1x64xf32> to vector<8x64xf32>
    %33 = arith.mulf %31, %32 : vector<8x64xf32>
    %34 = vector.broadcast %13 : vector<1x64xf32> to vector<8x64xf32>
    %35 = arith.addf %33, %34 : vector<8x64xf32>
    %c0_14 = arith.constant 0 : index
    %c0_15 = arith.constant 0 : index
    %c0_16 = arith.constant 0 : index
    %c0_17 = arith.constant 0 : index
    %36 = vector.load %arg8[%c0_14, %c0_15, %c0_16, %c0_17] : memref<1x4x64x16xbf16, #tpu.memory_space<vmem>>, vector<1x1x64x16xbf16>
    %37 = vector.shape_cast %36 : vector<1x1x64x16xbf16> to vector<64x16xbf16>
    %38 = arith.truncf %35 : vector<8x64xf32> to vector<8x64xbf16>
    %cst_18 = arith.constant dense<0.000000e+00> : vector<8x16xf32>
    %39 = tpu.matmul %38, %37, %cst_18 {dimension_numbers = #tpu.dot_dimension_numbers<[1], [0], [0], [1], [0, 0, 1, 1], [], []>} : vector<8x64xbf16>, vector<64x16xbf16>, vector<8x16xf32> -> vector<8x16xf32>
    %c0_19 = arith.constant 0 : index
    %c0_20 = arith.constant 0 : index
    %c0_21 = arith.constant 0 : index
    %c0_22 = arith.constant 0 : index
    %40 = vector.load %arg11[%c0_19, %c0_20, %c0_21, %c0_22] : memref<1x4x1x16xf32, #tpu.memory_space<vmem>>, vector<1x1x1x16xf32>
    %41 = vector.shape_cast %40 : vector<1x1x1x16xf32> to vector<1x16xf32>
    %42 = vector.broadcast %41 : vector<1x16xf32> to vector<8x16xf32>
    %43 = arith.addf %39, %42 : vector<8x16xf32>
    %c0_23 = arith.constant 0 : index
    %c0_24 = arith.constant 0 : index
    %c0_25 = arith.constant 0 : index
    %c0_26 = arith.constant 0 : index
    %44 = vector.load %arg9[%c0_23, %c0_24, %c0_25, %c0_26] : memref<1x4x64x16xbf16, #tpu.memory_space<vmem>>, vector<1x1x64x16xbf16>
    %45 = vector.shape_cast %44 : vector<1x1x64x16xbf16> to vector<64x16xbf16>
    %46 = arith.truncf %35 : vector<8x64xf32> to vector<8x64xbf16>
    %cst_27 = arith.constant dense<0.000000e+00> : vector<8x16xf32>
    %47 = tpu.matmul %46, %45, %cst_27 {dimension_numbers = #tpu.dot_dimension_numbers<[1], [0], [0], [1], [0, 0, 1, 1], [], []>} : vector<8x64xbf16>, vector<64x16xbf16>, vector<8x16xf32> -> vector<8x16xf32>
    %c0_28 = arith.constant 0 : index
    %c0_29 = arith.constant 0 : index
    %c0_30 = arith.constant 0 : index
    %c0_31 = arith.constant 0 : index
    %48 = vector.load %arg12[%c0_28, %c0_29, %c0_30, %c0_31] : memref<1x4x1x16xf32, #tpu.memory_space<vmem>>, vector<1x1x1x16xf32>
    %49 = vector.shape_cast %48 : vector<1x1x1x16xf32> to vector<1x16xf32>
    %50 = vector.broadcast %49 : vector<1x16xf32> to vector<8x16xf32>
    %51 = arith.addf %47, %50 : vector<8x16xf32>
    %c0_32 = arith.constant 0 : index
    %c0_33 = arith.constant 0 : index
    %c0_34 = arith.constant 0 : index
    %c0_35 = arith.constant 0 : index
    %52 = vector.load %arg10[%c0_32, %c0_33, %c0_34, %c0_35] : memref<1x4x64x16xbf16, #tpu.memory_space<vmem>>, vector<1x1x64x16xbf16>
    %53 = vector.shape_cast %52 : vector<1x1x64x16xbf16> to vector<64x16xbf16>
    %54 = arith.truncf %35 : vector<8x64xf32> to vector<8x64xbf16>
    %cst_36 = arith.constant dense<0.000000e+00> : vector<8x16xf32>
    %55 = tpu.matmul %54, %53, %cst_36 {dimension_numbers = #tpu.dot_dimension_numbers<[1], [0], [0], [1], [0, 0, 1, 1], [], []>} : vector<8x64xbf16>, vector<64x16xbf16>, vector<8x16xf32> -> vector<8x16xf32>
    %c0_37 = arith.constant 0 : index
    %c0_38 = arith.constant 0 : index
    %c0_39 = arith.constant 0 : index
    %c0_40 = arith.constant 0 : index
    %56 = vector.load %arg13[%c0_37, %c0_38, %c0_39, %c0_40] : memref<1x4x1x16xf32, #tpu.memory_space<vmem>>, vector<1x1x1x16xf32>
    %57 = vector.shape_cast %56 : vector<1x1x1x16xf32> to vector<1x16xf32>
    %58 = vector.broadcast %57 : vector<1x16xf32> to vector<8x16xf32>
    %59 = arith.addf %55, %58 : vector<8x16xf32>
    %60 = arith.truncf %43 : vector<8x16xf32> to vector<8x16xbf16>
    %61 = arith.truncf %51 : vector<8x16xf32> to vector<8x16xbf16>
    %cst_41 = arith.constant dense<0.000000e+00> : vector<8x8xf32>
    %62 = tpu.matmul %60, %61, %cst_41 {dimension_numbers = #tpu.dot_dimension_numbers<[1], [1], [0], [0], [0, 0, 1, 0], [], []>} : vector<8x16xbf16>, vector<8x16xbf16>, vector<8x8xf32> -> vector<8x8xf32>
    %cst_42 = arith.constant 2.500000e-01 : f32
    %63 = vector.broadcast %cst_42 : f32 to vector<8x8xf32>
    %64 = arith.mulf %62, %63 : vector<8x8xf32>
    %65 = arith.addf %64, %9 : vector<8x8xf32>
    %cst_43 = arith.constant dense<0xFF800000> : vector<8xf32>
    %66 = vector.multi_reduction <maximumf>, %65, %cst_43 [1] : vector<8x8xf32> to vector<8xf32>
    %67 = vector.shape_cast %66 : vector<8xf32> to vector<8x1xf32>
    %68 = vector.broadcast %67 : vector<8x1xf32> to vector<8x8xf32>
    %69 = arith.subf %65, %68 : vector<8x8xf32>
    %70 = math.exp %69 : vector<8x8xf32>
    %cst_44 = arith.constant dense<0.000000e+00> : vector<8xf32>
    %71 = vector.multi_reduction <add>, %70, %cst_44 [1] : vector<8x8xf32> to vector<8xf32>
    %72 = vector.shape_cast %71 : vector<8xf32> to vector<8x1xf32>
    %73 = tpu.reciprocal %72 {approx = true} : vector<8x1xf32> -> vector<8x1xf32>
    %74 = vector.broadcast %73 : vector<8x1xf32> to vector<8x8xf32>
    %75 = arith.mulf %70, %74 : vector<8x8xf32>
    %76 = arith.truncf %75 : vector<8x8xf32> to vector<8x8xbf16>
    %77 = arith.truncf %59 : vector<8x16xf32> to vector<8x16xbf16>
    %cst_45 = arith.constant dense<0.000000e+00> : vector<8x16xf32>
    %78 = tpu.matmul %76, %77, %cst_45 {dimension_numbers = #tpu.dot_dimension_numbers<[1], [0], [0], [1], [0, 0, 1, 1], [], []>} : vector<8x8xbf16>, vector<8x16xbf16>, vector<8x16xf32> -> vector<8x16xf32>
    %c0_46 = arith.constant 0 : index
    %c0_47 = arith.constant 0 : index
    %c0_48 = arith.constant 0 : index
    %c0_49 = arith.constant 0 : index
    %79 = vector.load %arg14[%c0_46, %c0_47, %c0_48, %c0_49] : memref<1x4x16x64xbf16, #tpu.memory_space<vmem>>, vector<1x1x16x64xbf16>
    %80 = vector.shape_cast %79 : vector<1x1x16x64xbf16> to vector<16x64xbf16>
    %81 = arith.truncf %78 : vector<8x16xf32> to vector<8x16xbf16>
    %cst_50 = arith.constant dense<0.000000e+00> : vector<8x64xf32>
    %82 = tpu.matmul %81, %80, %cst_50 {dimension_numbers = #tpu.dot_dimension_numbers<[1], [0], [0], [1], [0, 0, 1, 1], [], []>} : vector<8x16xbf16>, vector<16x64xbf16>, vector<8x64xf32> -> vector<8x64xf32>
    %c0_51 = arith.constant 0 : index
    %c1 = arith.constant 1 : index
    %c0_52 = arith.constant 0 : index
    %c0_53 = arith.constant 0 : index
    %83 = vector.load %arg8[%c0_51, %c1, %c0_52, %c0_53] : memref<1x4x64x16xbf16, #tpu.memory_space<vmem>>, vector<1x1x64x16xbf16>
    %84 = vector.shape_cast %83 : vector<1x1x64x16xbf16> to vector<64x16xbf16>
    %85 = arith.truncf %35 : vector<8x64xf32> to vector<8x64xbf16>
    %cst_54 = arith.constant dense<0.000000e+00> : vector<8x16xf32>
    %86 = tpu.matmul %85, %84, %cst_54 {dimension_numbers = #tpu.dot_dimension_numbers<[1], [0], [0], [1], [0, 0, 1, 1], [], []>} : vector<8x64xbf16>, vector<64x16xbf16>, vector<8x16xf32> -> vector<8x16xf32>
    %c0_55 = arith.constant 0 : index
    %c1_56 = arith.constant 1 : index
    %c0_57 = arith.constant 0 : index
    %c0_58 = arith.constant 0 : index
    %87 = vector.load %arg11[%c0_55, %c1_56, %c0_57, %c0_58] : memref<1x4x1x16xf32, #tpu.memory_space<vmem>>, vector<1x1x1x16xf32>
    %88 = vector.shape_cast %87 : vector<1x1x1x16xf32> to vector<1x16xf32>
    %89 = vector.broadcast %88 : vector<1x16xf32> to vector<8x16xf32>
    %90 = arith.addf %86, %89 : vector<8x16xf32>
    %c0_59 = arith.constant 0 : index
    %c1_60 = arith.constant 1 : index
    %c0_61 = arith.constant 0 : index
    %c0_62 = arith.constant 0 : index
    %91 = vector.load %arg9[%c0_59, %c1_60, %c0_61, %c0_62] : memref<1x4x64x16xbf16, #tpu.memory_space<vmem>>, vector<1x1x64x16xbf16>
    %92 = vector.shape_cast %91 : vector<1x1x64x16xbf16> to vector<64x16xbf16>
    %93 = arith.truncf %35 : vector<8x64xf32> to vector<8x64xbf16>
    %cst_63 = arith.constant dense<0.000000e+00> : vector<8x16xf32>
    %94 = tpu.matmul %93, %92, %cst_63 {dimension_numbers = #tpu.dot_dimension_numbers<[1], [0], [0], [1], [0, 0, 1, 1], [], []>} : vector<8x64xbf16>, vector<64x16xbf16>, vector<8x16xf32> -> vector<8x16xf32>
    %c0_64 = arith.constant 0 : index
    %c1_65 = arith.constant 1 : index
    %c0_66 = arith.constant 0 : index
    %c0_67 = arith.constant 0 : index
    %95 = vector.load %arg12[%c0_64, %c1_65, %c0_66, %c0_67] : memref<1x4x1x16xf32, #tpu.memory_space<vmem>>, vector<1x1x1x16xf32>
    %96 = vector.shape_cast %95 : vector<1x1x1x16xf32> to vector<1x16xf32>
    %97 = vector.broadcast %96 : vector<1x16xf32> to vector<8x16xf32>
    %98 = arith.addf %94, %97 : vector<8x16xf32>
    %c0_68 = arith.constant 0 : index
    %c1_69 = arith.constant 1 : index
    %c0_70 = arith.constant 0 : index
    %c0_71 = arith.constant 0 : index
    %99 = vector.load %arg10[%c0_68, %c1_69, %c0_70, %c0_71] : memref<1x4x64x16xbf16, #tpu.memory_space<vmem>>, vector<1x1x64x16xbf16>
    %100 = vector.shape_cast %99 : vector<1x1x64x16xbf16> to vector<64x16xbf16>
    %101 = arith.truncf %35 : vector<8x64xf32> to vector<8x64xbf16>
    %cst_72 = arith.constant dense<0.000000e+00> : vector<8x16xf32>
    %102 = tpu.matmul %101, %100, %cst_72 {dimension_numbers = #tpu.dot_dimension_numbers<[1], [0], [0], [1], [0, 0, 1, 1], [], []>} : vector<8x64xbf16>, vector<64x16xbf16>, vector<8x16xf32> -> vector<8x16xf32>
    %c0_73 = arith.constant 0 : index
    %c1_74 = arith.constant 1 : index
    %c0_75 = arith.constant 0 : index
    %c0_76 = arith.constant 0 : index
    %103 = vector.load %arg13[%c0_73, %c1_74, %c0_75, %c0_76] : memref<1x4x1x16xf32, #tpu.memory_space<vmem>>, vector<1x1x1x16xf32>
    %104 = vector.shape_cast %103 : vector<1x1x1x16xf32> to vector<1x16xf32>
    %105 = vector.broadcast %104 : vector<1x16xf32> to vector<8x16xf32>
    %106 = arith.addf %102, %105 : vector<8x16xf32>
    %107 = arith.truncf %90 : vector<8x16xf32> to vector<8x16xbf16>
    %108 = arith.truncf %98 : vector<8x16xf32> to vector<8x16xbf16>
    %cst_77 = arith.constant dense<0.000000e+00> : vector<8x8xf32>
    %109 = tpu.matmul %107, %108, %cst_77 {dimension_numbers = #tpu.dot_dimension_numbers<[1], [1], [0], [0], [0, 0, 1, 0], [], []>} : vector<8x16xbf16>, vector<8x16xbf16>, vector<8x8xf32> -> vector<8x8xf32>
    %cst_78 = arith.constant 2.500000e-01 : f32
    %110 = vector.broadcast %cst_78 : f32 to vector<8x8xf32>
    %111 = arith.mulf %109, %110 : vector<8x8xf32>
    %112 = arith.addf %111, %9 : vector<8x8xf32>
    %cst_79 = arith.constant dense<0xFF800000> : vector<8xf32>
    %113 = vector.multi_reduction <maximumf>, %112, %cst_79 [1] : vector<8x8xf32> to vector<8xf32>
    %114 = vector.shape_cast %113 : vector<8xf32> to vector<8x1xf32>
    %115 = vector.broadcast %114 : vector<8x1xf32> to vector<8x8xf32>
    %116 = arith.subf %112, %115 : vector<8x8xf32>
    %117 = math.exp %116 : vector<8x8xf32>
    %cst_80 = arith.constant dense<0.000000e+00> : vector<8xf32>
    %118 = vector.multi_reduction <add>, %117, %cst_80 [1] : vector<8x8xf32> to vector<8xf32>
    %119 = vector.shape_cast %118 : vector<8xf32> to vector<8x1xf32>
    %120 = tpu.reciprocal %119 {approx = true} : vector<8x1xf32> -> vector<8x1xf32>
    %121 = vector.broadcast %120 : vector<8x1xf32> to vector<8x8xf32>
    %122 = arith.mulf %117, %121 : vector<8x8xf32>
    %123 = arith.truncf %122 : vector<8x8xf32> to vector<8x8xbf16>
    %124 = arith.truncf %106 : vector<8x16xf32> to vector<8x16xbf16>
    %cst_81 = arith.constant dense<0.000000e+00> : vector<8x16xf32>
    %125 = tpu.matmul %123, %124, %cst_81 {dimension_numbers = #tpu.dot_dimension_numbers<[1], [0], [0], [1], [0, 0, 1, 1], [], []>} : vector<8x8xbf16>, vector<8x16xbf16>, vector<8x16xf32> -> vector<8x16xf32>
    %c0_82 = arith.constant 0 : index
    %c1_83 = arith.constant 1 : index
    %c0_84 = arith.constant 0 : index
    %c0_85 = arith.constant 0 : index
    %126 = vector.load %arg14[%c0_82, %c1_83, %c0_84, %c0_85] : memref<1x4x16x64xbf16, #tpu.memory_space<vmem>>, vector<1x1x16x64xbf16>
    %127 = vector.shape_cast %126 : vector<1x1x16x64xbf16> to vector<16x64xbf16>
    %128 = arith.truncf %125 : vector<8x16xf32> to vector<8x16xbf16>
    %cst_86 = arith.constant dense<0.000000e+00> : vector<8x64xf32>
    %129 = tpu.matmul %128, %127, %cst_86 {dimension_numbers = #tpu.dot_dimension_numbers<[1], [0], [0], [1], [0, 0, 1, 1], [], []>} : vector<8x16xbf16>, vector<16x64xbf16>, vector<8x64xf32> -> vector<8x64xf32>
    %130 = arith.addf %82, %129 : vector<8x64xf32>
    %c0_87 = arith.constant 0 : index
    %c2 = arith.constant 2 : index
    %c0_88 = arith.constant 0 : index
    %c0_89 = arith.constant 0 : index
    %131 = vector.load %arg8[%c0_87, %c2, %c0_88, %c0_89] : memref<1x4x64x16xbf16, #tpu.memory_space<vmem>>, vector<1x1x64x16xbf16>
    %132 = vector.shape_cast %131 : vector<1x1x64x16xbf16> to vector<64x16xbf16>
    %133 = arith.truncf %35 : vector<8x64xf32> to vector<8x64xbf16>
    %cst_90 = arith.constant dense<0.000000e+00> : vector<8x16xf32>
    %134 = tpu.matmul %133, %132, %cst_90 {dimension_numbers = #tpu.dot_dimension_numbers<[1], [0], [0], [1], [0, 0, 1, 1], [], []>} : vector<8x64xbf16>, vector<64x16xbf16>, vector<8x16xf32> -> vector<8x16xf32>
    %c0_91 = arith.constant 0 : index
    %c2_92 = arith.constant 2 : index
    %c0_93 = arith.constant 0 : index
    %c0_94 = arith.constant 0 : index
    %135 = vector.load %arg11[%c0_91, %c2_92, %c0_93, %c0_94] : memref<1x4x1x16xf32, #tpu.memory_space<vmem>>, vector<1x1x1x16xf32>
    %136 = vector.shape_cast %135 : vector<1x1x1x16xf32> to vector<1x16xf32>
    %137 = vector.broadcast %136 : vector<1x16xf32> to vector<8x16xf32>
    %138 = arith.addf %134, %137 : vector<8x16xf32>
    %c0_95 = arith.constant 0 : index
    %c2_96 = arith.constant 2 : index
    %c0_97 = arith.constant 0 : index
    %c0_98 = arith.constant 0 : index
    %139 = vector.load %arg9[%c0_95, %c2_96, %c0_97, %c0_98] : memref<1x4x64x16xbf16, #tpu.memory_space<vmem>>, vector<1x1x64x16xbf16>
    %140 = vector.shape_cast %139 : vector<1x1x64x16xbf16> to vector<64x16xbf16>
    %141 = arith.truncf %35 : vector<8x64xf32> to vector<8x64xbf16>
    %cst_99 = arith.constant dense<0.000000e+00> : vector<8x16xf32>
    %142 = tpu.matmul %141, %140, %cst_99 {dimension_numbers = #tpu.dot_dimension_numbers<[1], [0], [0], [1], [0, 0, 1, 1], [], []>} : vector<8x64xbf16>, vector<64x16xbf16>, vector<8x16xf32> -> vector<8x16xf32>
    %c0_100 = arith.constant 0 : index
    %c2_101 = arith.constant 2 : index
    %c0_102 = arith.constant 0 : index
    %c0_103 = arith.constant 0 : index
    %143 = vector.load %arg12[%c0_100, %c2_101, %c0_102, %c0_103] : memref<1x4x1x16xf32, #tpu.memory_space<vmem>>, vector<1x1x1x16xf32>
    %144 = vector.shape_cast %143 : vector<1x1x1x16xf32> to vector<1x16xf32>
    %145 = vector.broadcast %144 : vector<1x16xf32> to vector<8x16xf32>
    %146 = arith.addf %142, %145 : vector<8x16xf32>
    %c0_104 = arith.constant 0 : index
    %c2_105 = arith.constant 2 : index
    %c0_106 = arith.constant 0 : index
    %c0_107 = arith.constant 0 : index
    %147 = vector.load %arg10[%c0_104, %c2_105, %c0_106, %c0_107] : memref<1x4x64x16xbf16, #tpu.memory_space<vmem>>, vector<1x1x64x16xbf16>
    %148 = vector.shape_cast %147 : vector<1x1x64x16xbf16> to vector<64x16xbf16>
    %149 = arith.truncf %35 : vector<8x64xf32> to vector<8x64xbf16>
    %cst_108 = arith.constant dense<0.000000e+00> : vector<8x16xf32>
    %150 = tpu.matmul %149, %148, %cst_108 {dimension_numbers = #tpu.dot_dimension_numbers<[1], [0], [0], [1], [0, 0, 1, 1], [], []>} : vector<8x64xbf16>, vector<64x16xbf16>, vector<8x16xf32> -> vector<8x16xf32>
    %c0_109 = arith.constant 0 : index
    %c2_110 = arith.constant 2 : index
    %c0_111 = arith.constant 0 : index
    %c0_112 = arith.constant 0 : index
    %151 = vector.load %arg13[%c0_109, %c2_110, %c0_111, %c0_112] : memref<1x4x1x16xf32, #tpu.memory_space<vmem>>, vector<1x1x1x16xf32>
    %152 = vector.shape_cast %151 : vector<1x1x1x16xf32> to vector<1x16xf32>
    %153 = vector.broadcast %152 : vector<1x16xf32> to vector<8x16xf32>
    %154 = arith.addf %150, %153 : vector<8x16xf32>
    %155 = arith.truncf %138 : vector<8x16xf32> to vector<8x16xbf16>
    %156 = arith.truncf %146 : vector<8x16xf32> to vector<8x16xbf16>
    %cst_113 = arith.constant dense<0.000000e+00> : vector<8x8xf32>
    %157 = tpu.matmul %155, %156, %cst_113 {dimension_numbers = #tpu.dot_dimension_numbers<[1], [1], [0], [0], [0, 0, 1, 0], [], []>} : vector<8x16xbf16>, vector<8x16xbf16>, vector<8x8xf32> -> vector<8x8xf32>
    %cst_114 = arith.constant 2.500000e-01 : f32
    %158 = vector.broadcast %cst_114 : f32 to vector<8x8xf32>
    %159 = arith.mulf %157, %158 : vector<8x8xf32>
    %160 = arith.addf %159, %9 : vector<8x8xf32>
    %cst_115 = arith.constant dense<0xFF800000> : vector<8xf32>
    %161 = vector.multi_reduction <maximumf>, %160, %cst_115 [1] : vector<8x8xf32> to vector<8xf32>
    %162 = vector.shape_cast %161 : vector<8xf32> to vector<8x1xf32>
    %163 = vector.broadcast %162 : vector<8x1xf32> to vector<8x8xf32>
    %164 = arith.subf %160, %163 : vector<8x8xf32>
    %165 = math.exp %164 : vector<8x8xf32>
    %cst_116 = arith.constant dense<0.000000e+00> : vector<8xf32>
    %166 = vector.multi_reduction <add>, %165, %cst_116 [1] : vector<8x8xf32> to vector<8xf32>
    %167 = vector.shape_cast %166 : vector<8xf32> to vector<8x1xf32>
    %168 = tpu.reciprocal %167 {approx = true} : vector<8x1xf32> -> vector<8x1xf32>
    %169 = vector.broadcast %168 : vector<8x1xf32> to vector<8x8xf32>
    %170 = arith.mulf %165, %169 : vector<8x8xf32>
    %171 = arith.truncf %170 : vector<8x8xf32> to vector<8x8xbf16>
    %172 = arith.truncf %154 : vector<8x16xf32> to vector<8x16xbf16>
    %cst_117 = arith.constant dense<0.000000e+00> : vector<8x16xf32>
    %173 = tpu.matmul %171, %172, %cst_117 {dimension_numbers = #tpu.dot_dimension_numbers<[1], [0], [0], [1], [0, 0, 1, 1], [], []>} : vector<8x8xbf16>, vector<8x16xbf16>, vector<8x16xf32> -> vector<8x16xf32>
    %c0_118 = arith.constant 0 : index
    %c2_119 = arith.constant 2 : index
    %c0_120 = arith.constant 0 : index
    %c0_121 = arith.constant 0 : index
    %174 = vector.load %arg14[%c0_118, %c2_119, %c0_120, %c0_121] : memref<1x4x16x64xbf16, #tpu.memory_space<vmem>>, vector<1x1x16x64xbf16>
    %175 = vector.shape_cast %174 : vector<1x1x16x64xbf16> to vector<16x64xbf16>
    %176 = arith.truncf %173 : vector<8x16xf32> to vector<8x16xbf16>
    %cst_122 = arith.constant dense<0.000000e+00> : vector<8x64xf32>
    %177 = tpu.matmul %176, %175, %cst_122 {dimension_numbers = #tpu.dot_dimension_numbers<[1], [0], [0], [1], [0, 0, 1, 1], [], []>} : vector<8x16xbf16>, vector<16x64xbf16>, vector<8x64xf32> -> vector<8x64xf32>
    %178 = arith.addf %130, %177 : vector<8x64xf32>
    %c0_123 = arith.constant 0 : index
    %c3 = arith.constant 3 : index
    %c0_124 = arith.constant 0 : index
    %c0_125 = arith.constant 0 : index
    %179 = vector.load %arg8[%c0_123, %c3, %c0_124, %c0_125] : memref<1x4x64x16xbf16, #tpu.memory_space<vmem>>, vector<1x1x64x16xbf16>
    %180 = vector.shape_cast %179 : vector<1x1x64x16xbf16> to vector<64x16xbf16>
    %181 = arith.truncf %35 : vector<8x64xf32> to vector<8x64xbf16>
    %cst_126 = arith.constant dense<0.000000e+00> : vector<8x16xf32>
    %182 = tpu.matmul %181, %180, %cst_126 {dimension_numbers = #tpu.dot_dimension_numbers<[1], [0], [0], [1], [0, 0, 1, 1], [], []>} : vector<8x64xbf16>, vector<64x16xbf16>, vector<8x16xf32> -> vector<8x16xf32>
    %c0_127 = arith.constant 0 : index
    %c3_128 = arith.constant 3 : index
    %c0_129 = arith.constant 0 : index
    %c0_130 = arith.constant 0 : index
    %183 = vector.load %arg11[%c0_127, %c3_128, %c0_129, %c0_130] : memref<1x4x1x16xf32, #tpu.memory_space<vmem>>, vector<1x1x1x16xf32>
    %184 = vector.shape_cast %183 : vector<1x1x1x16xf32> to vector<1x16xf32>
    %185 = vector.broadcast %184 : vector<1x16xf32> to vector<8x16xf32>
    %186 = arith.addf %182, %185 : vector<8x16xf32>
    %c0_131 = arith.constant 0 : index
    %c3_132 = arith.constant 3 : index
    %c0_133 = arith.constant 0 : index
    %c0_134 = arith.constant 0 : index
    %187 = vector.load %arg9[%c0_131, %c3_132, %c0_133, %c0_134] : memref<1x4x64x16xbf16, #tpu.memory_space<vmem>>, vector<1x1x64x16xbf16>
    %188 = vector.shape_cast %187 : vector<1x1x64x16xbf16> to vector<64x16xbf16>
    %189 = arith.truncf %35 : vector<8x64xf32> to vector<8x64xbf16>
    %cst_135 = arith.constant dense<0.000000e+00> : vector<8x16xf32>
    %190 = tpu.matmul %189, %188, %cst_135 {dimension_numbers = #tpu.dot_dimension_numbers<[1], [0], [0], [1], [0, 0, 1, 1], [], []>} : vector<8x64xbf16>, vector<64x16xbf16>, vector<8x16xf32> -> vector<8x16xf32>
    %c0_136 = arith.constant 0 : index
    %c3_137 = arith.constant 3 : index
    %c0_138 = arith.constant 0 : index
    %c0_139 = arith.constant 0 : index
    %191 = vector.load %arg12[%c0_136, %c3_137, %c0_138, %c0_139] : memref<1x4x1x16xf32, #tpu.memory_space<vmem>>, vector<1x1x1x16xf32>
    %192 = vector.shape_cast %191 : vector<1x1x1x16xf32> to vector<1x16xf32>
    %193 = vector.broadcast %192 : vector<1x16xf32> to vector<8x16xf32>
    %194 = arith.addf %190, %193 : vector<8x16xf32>
    %c0_140 = arith.constant 0 : index
    %c3_141 = arith.constant 3 : index
    %c0_142 = arith.constant 0 : index
    %c0_143 = arith.constant 0 : index
    %195 = vector.load %arg10[%c0_140, %c3_141, %c0_142, %c0_143] : memref<1x4x64x16xbf16, #tpu.memory_space<vmem>>, vector<1x1x64x16xbf16>
    %196 = vector.shape_cast %195 : vector<1x1x64x16xbf16> to vector<64x16xbf16>
    %197 = arith.truncf %35 : vector<8x64xf32> to vector<8x64xbf16>
    %cst_144 = arith.constant dense<0.000000e+00> : vector<8x16xf32>
    %198 = tpu.matmul %197, %196, %cst_144 {dimension_numbers = #tpu.dot_dimension_numbers<[1], [0], [0], [1], [0, 0, 1, 1], [], []>} : vector<8x64xbf16>, vector<64x16xbf16>, vector<8x16xf32> -> vector<8x16xf32>
    %c0_145 = arith.constant 0 : index
    %c3_146 = arith.constant 3 : index
    %c0_147 = arith.constant 0 : index
    %c0_148 = arith.constant 0 : index
    %199 = vector.load %arg13[%c0_145, %c3_146, %c0_147, %c0_148] : memref<1x4x1x16xf32, #tpu.memory_space<vmem>>, vector<1x1x1x16xf32>
    %200 = vector.shape_cast %199 : vector<1x1x1x16xf32> to vector<1x16xf32>
    %201 = vector.broadcast %200 : vector<1x16xf32> to vector<8x16xf32>
    %202 = arith.addf %198, %201 : vector<8x16xf32>
    %203 = arith.truncf %186 : vector<8x16xf32> to vector<8x16xbf16>
    %204 = arith.truncf %194 : vector<8x16xf32> to vector<8x16xbf16>
    %cst_149 = arith.constant dense<0.000000e+00> : vector<8x8xf32>
    %205 = tpu.matmul %203, %204, %cst_149 {dimension_numbers = #tpu.dot_dimension_numbers<[1], [1], [0], [0], [0, 0, 1, 0], [], []>} : vector<8x16xbf16>, vector<8x16xbf16>, vector<8x8xf32> -> vector<8x8xf32>
    %cst_150 = arith.constant 2.500000e-01 : f32
    %206 = vector.broadcast %cst_150 : f32 to vector<8x8xf32>
    %207 = arith.mulf %205, %206 : vector<8x8xf32>
    %208 = arith.addf %207, %9 : vector<8x8xf32>
    %cst_151 = arith.constant dense<0xFF800000> : vector<8xf32>
    %209 = vector.multi_reduction <maximumf>, %208, %cst_151 [1] : vector<8x8xf32> to vector<8xf32>
    %210 = vector.shape_cast %209 : vector<8xf32> to vector<8x1xf32>
    %211 = vector.broadcast %210 : vector<8x1xf32> to vector<8x8xf32>
    %212 = arith.subf %208, %211 : vector<8x8xf32>
    %213 = math.exp %212 : vector<8x8xf32>
    %cst_152 = arith.constant dense<0.000000e+00> : vector<8xf32>
    %214 = vector.multi_reduction <add>, %213, %cst_152 [1] : vector<8x8xf32> to vector<8xf32>
    %215 = vector.shape_cast %214 : vector<8xf32> to vector<8x1xf32>
    %216 = tpu.reciprocal %215 {approx = true} : vector<8x1xf32> -> vector<8x1xf32>
    %217 = vector.broadcast %216 : vector<8x1xf32> to vector<8x8xf32>
    %218 = arith.mulf %213, %217 : vector<8x8xf32>
    %219 = arith.truncf %218 : vector<8x8xf32> to vector<8x8xbf16>
    %220 = arith.truncf %202 : vector<8x16xf32> to vector<8x16xbf16>
    %cst_153 = arith.constant dense<0.000000e+00> : vector<8x16xf32>
    %221 = tpu.matmul %219, %220, %cst_153 {dimension_numbers = #tpu.dot_dimension_numbers<[1], [0], [0], [1], [0, 0, 1, 1], [], []>} : vector<8x8xbf16>, vector<8x16xbf16>, vector<8x16xf32> -> vector<8x16xf32>
    %c0_154 = arith.constant 0 : index
    %c3_155 = arith.constant 3 : index
    %c0_156 = arith.constant 0 : index
    %c0_157 = arith.constant 0 : index
    %222 = vector.load %arg14[%c0_154, %c3_155, %c0_156, %c0_157] : memref<1x4x16x64xbf16, #tpu.memory_space<vmem>>, vector<1x1x16x64xbf16>
    %223 = vector.shape_cast %222 : vector<1x1x16x64xbf16> to vector<16x64xbf16>
    %224 = arith.truncf %221 : vector<8x16xf32> to vector<8x16xbf16>
    %cst_158 = arith.constant dense<0.000000e+00> : vector<8x64xf32>
    %225 = tpu.matmul %224, %223, %cst_158 {dimension_numbers = #tpu.dot_dimension_numbers<[1], [0], [0], [1], [0, 0, 1, 1], [], []>} : vector<8x16xbf16>, vector<16x64xbf16>, vector<8x64xf32> -> vector<8x64xf32>
    %226 = arith.addf %178, %225 : vector<8x64xf32>
    %227 = arith.addf %3, %226 : vector<8x64xf32>
    %c0_159 = arith.constant 0 : index
    %c0_160 = arith.constant 0 : index
    %c0_161 = arith.constant 0 : index
    %228 = vector.load %arg15[%c0_159, %c0_160, %c0_161] : memref<1x1x64xf32, #tpu.memory_space<vmem>>, vector<1x1x64xf32>
    %229 = vector.shape_cast %228 : vector<1x1x64xf32> to vector<1x64xf32>
    %230 = vector.broadcast %229 : vector<1x64xf32> to vector<8x64xf32>
    %231 = arith.addf %227, %230 : vector<8x64xf32>
    %c0_162 = arith.constant 0 : index
    %c0_163 = arith.constant 0 : index
    %c0_164 = arith.constant 0 : index
    %232 = vector.load %arg16[%c0_162, %c0_163, %c0_164] : memref<1x1x64xf32, #tpu.memory_space<vmem>>, vector<1x1x64xf32>
    %233 = vector.shape_cast %232 : vector<1x1x64xf32> to vector<1x64xf32>
    %c0_165 = arith.constant 0 : index
    %c0_166 = arith.constant 0 : index
    %c0_167 = arith.constant 0 : index
    %234 = vector.load %arg17[%c0_165, %c0_166, %c0_167] : memref<1x1x64xf32, #tpu.memory_space<vmem>>, vector<1x1x64xf32>
    %235 = vector.shape_cast %234 : vector<1x1x64xf32> to vector<1x64xf32>
    %cst_168 = arith.constant dense<0.000000e+00> : vector<8xf32>
    %236 = vector.multi_reduction <add>, %231, %cst_168 [1] : vector<8x64xf32> to vector<8xf32>
    %237 = vector.shape_cast %236 : vector<8xf32> to vector<8x1xf32>
    %cst_169 = arith.constant 6.400000e+01 : f32
    %238 = vector.broadcast %cst_169 : f32 to vector<8x1xf32>
    %239 = arith.divf %237, %238 : vector<8x1xf32>
    %240 = arith.mulf %231, %231 : vector<8x64xf32>
    %cst_170 = arith.constant dense<0.000000e+00> : vector<8xf32>
    %241 = vector.multi_reduction <add>, %240, %cst_170 [1] : vector<8x64xf32> to vector<8xf32>
    %242 = vector.shape_cast %241 : vector<8xf32> to vector<8x1xf32>
    %cst_171 = arith.constant 6.400000e+01 : f32
    %243 = vector.broadcast %cst_171 : f32 to vector<8x1xf32>
    %244 = arith.divf %242, %243 : vector<8x1xf32>
    %245 = arith.mulf %239, %239 : vector<8x1xf32>
    %246 = arith.subf %244, %245 : vector<8x1xf32>
    %247 = vector.broadcast %239 : vector<8x1xf32> to vector<8x64xf32>
    %248 = arith.subf %231, %247 : vector<8x64xf32>
    %cst_172 = arith.constant 9.99999974E-6 : f32
    %249 = vector.broadcast %cst_172 : f32 to vector<8x1xf32>
    %250 = arith.addf %246, %249 : vector<8x1xf32>
    %251 = math.rsqrt %250 : vector<8x1xf32>
    %252 = vector.broadcast %251 : vector<8x1xf32> to vector<8x64xf32>
    %253 = arith.mulf %248, %252 : vector<8x64xf32>
    %254 = vector.broadcast %233 : vector<1x64xf32> to vector<8x64xf32>
    %255 = arith.mulf %253, %254 : vector<8x64xf32>
    %256 = vector.broadcast %235 : vector<1x64xf32> to vector<8x64xf32>
    %257 = arith.addf %255, %256 : vector<8x64xf32>
    %c0_173 = arith.constant 0 : index
    %c0_174 = arith.constant 0 : index
    %c0_175 = arith.constant 0 : index
    %258 = vector.load %arg18[%c0_173, %c0_174, %c0_175] : memref<1x64x256xbf16, #tpu.memory_space<vmem>>, vector<1x64x256xbf16>
    %259 = vector.shape_cast %258 : vector<1x64x256xbf16> to vector<64x256xbf16>
    %260 = arith.truncf %257 : vector<8x64xf32> to vector<8x64xbf16>
    %cst_176 = arith.constant dense<0.000000e+00> : vector<8x256xf32>
    %261 = tpu.matmul %260, %259, %cst_176 {dimension_numbers = #tpu.dot_dimension_numbers<[1], [0], [0], [1], [0, 0, 1, 1], [], []>} : vector<8x64xbf16>, vector<64x256xbf16>, vector<8x256xf32> -> vector<8x256xf32>
    %c0_177 = arith.constant 0 : index
    %c0_178 = arith.constant 0 : index
    %c0_179 = arith.constant 0 : index
    %262 = vector.load %arg19[%c0_177, %c0_178, %c0_179] : memref<1x1x256xf32, #tpu.memory_space<vmem>>, vector<1x1x256xf32>
    %263 = vector.shape_cast %262 : vector<1x1x256xf32> to vector<1x256xf32>
    %264 = vector.broadcast %263 : vector<1x256xf32> to vector<8x256xf32>
    %265 = arith.addf %261, %264 : vector<8x256xf32>
    %cst_180 = arith.constant 5.000000e-01 : f32
    %266 = vector.broadcast %cst_180 : f32 to vector<8x256xf32>
    %267 = arith.mulf %266, %265 : vector<8x256xf32>
    %cst_181 = arith.constant 4.471500e-02 : f32
    %268 = vector.broadcast %cst_181 : f32 to vector<8x256xf32>
    %269 = arith.mulf %268, %265 : vector<8x256xf32>
    %270 = arith.mulf %269, %265 : vector<8x256xf32>
    %271 = arith.mulf %270, %265 : vector<8x256xf32>
    %272 = arith.addf %265, %271 : vector<8x256xf32>
    %cst_182 = arith.constant 0.797884583 : f32
    %273 = vector.broadcast %cst_182 : f32 to vector<8x256xf32>
    %274 = arith.mulf %273, %272 : vector<8x256xf32>
    %275 = math.tanh %274 : vector<8x256xf32>
    %cst_183 = arith.constant 1.000000e+00 : f32
    %276 = vector.broadcast %cst_183 : f32 to vector<8x256xf32>
    %277 = arith.addf %276, %275 : vector<8x256xf32>
    %278 = arith.mulf %267, %277 : vector<8x256xf32>
    %c0_184 = arith.constant 0 : index
    %c0_185 = arith.constant 0 : index
    %c0_186 = arith.constant 0 : index
    %279 = vector.load %arg20[%c0_184, %c0_185, %c0_186] : memref<1x256x64xbf16, #tpu.memory_space<vmem>>, vector<1x256x64xbf16>
    %280 = vector.shape_cast %279 : vector<1x256x64xbf16> to vector<256x64xbf16>
    %281 = arith.truncf %278 : vector<8x256xf32> to vector<8x256xbf16>
    %cst_187 = arith.constant dense<0.000000e+00> : vector<8x64xf32>
    %282 = tpu.matmul %281, %280, %cst_187 {dimension_numbers = #tpu.dot_dimension_numbers<[1], [0], [0], [1], [0, 0, 1, 1], [], []>} : vector<8x256xbf16>, vector<256x64xbf16>, vector<8x64xf32> -> vector<8x64xf32>
    %283 = arith.addf %231, %282 : vector<8x64xf32>
    %c0_188 = arith.constant 0 : index
    %c0_189 = arith.constant 0 : index
    %c0_190 = arith.constant 0 : index
    %284 = vector.load %arg21[%c0_188, %c0_189, %c0_190] : memref<1x1x64xf32, #tpu.memory_space<vmem>>, vector<1x1x64xf32>
    %285 = vector.shape_cast %284 : vector<1x1x64xf32> to vector<1x64xf32>
    %286 = vector.broadcast %285 : vector<1x64xf32> to vector<8x64xf32>
    %287 = arith.addf %283, %286 : vector<8x64xf32>
    %c0_191 = arith.constant 0 : index
    %c0_192 = arith.constant 0 : index
    %288 = vector.load %arg29[%c0_191, %c0_192] : memref<8x64xf32, #tpu.memory_space<vmem>>, vector<8x64xf32>
    tpu.vector_store %arg29[%c0_191, %c0_192], %287 {strides = array<i32>} : memref<8x64xf32, #tpu.memory_space<vmem>>, vector<8x64xf32>,
    %c1_i32 = arith.constant 1 : i32
    %289 = arith.cmpi eq, %arg1, %c1_i32 : i32
    %290 = arith.extui %289 : i1 to i32
    %c0_i32_193 = arith.constant 0 : i32
    %291 = arith.cmpi ne, %290, %c0_i32_193 : i32
    scf.if %291 {
      %c0_194 = arith.constant 0 : index
      %c0_195 = arith.constant 0 : index
      %292 = vector.load %arg22[%c0_194, %c0_195] : memref<1x64xf32, #tpu.memory_space<vmem>>, vector<1x64xf32>
      %c0_196 = arith.constant 0 : index
      %c0_197 = arith.constant 0 : index
      %293 = vector.load %arg23[%c0_196, %c0_197] : memref<1x64xf32, #tpu.memory_space<vmem>>, vector<1x64xf32>
      %cst_198 = arith.constant dense<0.000000e+00> : vector<8xf32>
      %294 = vector.multi_reduction <add>, %287, %cst_198 [1] : vector<8x64xf32> to vector<8xf32>
      %295 = vector.shape_cast %294 : vector<8xf32> to vector<8x1xf32>
      %cst_199 = arith.constant 6.400000e+01 : f32
      %296 = vector.broadcast %cst_199 : f32 to vector<8x1xf32>
      %297 = arith.divf %295, %296 : vector<8x1xf32>
      %298 = arith.mulf %287, %287 : vector<8x64xf32>
      %cst_200 = arith.constant dense<0.000000e+00> : vector<8xf32>
      %299 = vector.multi_reduction <add>, %298, %cst_200 [1] : vector<8x64xf32> to vector<8xf32>
      %300 = vector.shape_cast %299 : vector<8xf32> to vector<8x1xf32>
      %cst_201 = arith.constant 6.400000e+01 : f32
      %301 = vector.broadcast %cst_201 : f32 to vector<8x1xf32>
      %302 = arith.divf %300, %301 : vector<8x1xf32>
      %303 = arith.mulf %297, %297 : vector<8x1xf32>
      %304 = arith.subf %302, %303 : vector<8x1xf32>
      %305 = vector.broadcast %297 : vector<8x1xf32> to vector<8x64xf32>
      %306 = arith.subf %287, %305 : vector<8x64xf32>
      %cst_202 = arith.constant 9.99999974E-6 : f32
      %307 = vector.broadcast %cst_202 : f32 to vector<8x1xf32>
      %308 = arith.addf %304, %307 : vector<8x1xf32>
      %309 = math.rsqrt %308 : vector<8x1xf32>
      %310 = vector.broadcast %309 : vector<8x1xf32> to vector<8x64xf32>
      %311 = arith.mulf %306, %310 : vector<8x64xf32>
      %312 = vector.broadcast %292 : vector<1x64xf32> to vector<8x64xf32>
      %313 = arith.mulf %311, %312 : vector<8x64xf32>
      %314 = vector.broadcast %293 : vector<1x64xf32> to vector<8x64xf32>
      %315 = arith.addf %313, %314 : vector<8x64xf32>
      %c0_203 = arith.constant 0 : index
      %c0_204 = arith.constant 0 : index
      %316 = vector.load %arg24[%c0_203, %c0_204] : memref<64x32xbf16, #tpu.memory_space<vmem>>, vector<64x32xbf16>
      %317 = arith.truncf %315 : vector<8x64xf32> to vector<8x64xbf16>
      %cst_205 = arith.constant dense<0.000000e+00> : vector<8x32xf32>
      %318 = tpu.matmul %317, %316, %cst_205 {dimension_numbers = #tpu.dot_dimension_numbers<[1], [0], [0], [1], [0, 0, 1, 1], [], []>} : vector<8x64xbf16>, vector<64x32xbf16>, vector<8x32xf32> -> vector<8x32xf32>
      %c0_206 = arith.constant 0 : index
      %c0_207 = arith.constant 0 : index
      %319 = vector.load %arg25[%c0_206, %c0_207] : memref<1x32xf32, #tpu.memory_space<vmem>>, vector<1x32xf32>
      %320 = vector.broadcast %319 : vector<1x32xf32> to vector<8x32xf32>
      %321 = arith.addf %318, %320 : vector<8x32xf32>
      %cst_208 = arith.constant 0.000000e+00 : f32
      %322 = vector.broadcast %cst_208 : f32 to vector<8x32xf32>
      %323 = arith.maximumf %321, %322 : vector<8x32xf32>
      %c0_209 = arith.constant 0 : index
      %c0_210 = arith.constant 0 : index
      %324 = vector.load %arg26[%c0_209, %c0_210] : memref<32x128xbf16, #tpu.memory_space<vmem>>, vector<32x128xbf16>
      %325 = arith.truncf %323 : vector<8x32xf32> to vector<8x32xbf16>
      %cst_211 = arith.constant dense<0.000000e+00> : vector<8x128xf32>
      %326 = tpu.matmul %325, %324, %cst_211 {dimension_numbers = #tpu.dot_dimension_numbers<[1], [0], [0], [1], [0, 0, 1, 1], [], []>} : vector<8x32xbf16>, vector<32x128xbf16>, vector<8x128xf32> -> vector<8x128xf32>
      %c0_212 = arith.constant 0 : index
      %c0_213 = arith.constant 0 : index
      %327 = vector.load %arg27[%c0_212, %c0_213] : memref<1x128xf32, #tpu.memory_space<vmem>>, vector<1x128xf32>
      %328 = vector.broadcast %327 : vector<1x128xf32> to vector<8x128xf32>
      %329 = arith.addf %326, %328 : vector<8x128xf32>
      %c0_214 = arith.constant 0 : index
      %c0_215 = arith.constant 0 : index
      %330 = vector.load %arg28[%c0_214, %c0_215] : memref<8x128xf32, #tpu.memory_space<vmem>>, vector<8x128xf32>
      tpu.vector_store %arg28[%c0_214, %c0_215], %329 {strides = array<i32>} : memref<8x128xf32, #tpu.memory_space<vmem>>, vector<8x128xf32>,
    } else {
    }
    return
  }
  func.func @transform_0(%arg0: i32, %arg1: i32) -> (i32, i32) {
    %c0_i32 = arith.constant 0 : i32
    %c0_i32_0 = arith.constant 0 : i32
    return %arg0, %c0_i32 : i32, i32
  }
  func.func @transform_1(%arg0: i32, %arg1: i32) -> (i32, i32) {
    %c0_i32 = arith.constant 0 : i32
    %c0_i32_0 = arith.constant 0 : i32
    %c0_i32_1 = arith.constant 0 : i32
    return %c0_i32, %c0_i32_0 : i32, i32
  }
  func.func @transform_2(%arg0: i32, %arg1: i32) -> (i32, i32) {
    %c0_i32 = arith.constant 0 : i32
    %c0_i32_0 = arith.constant 0 : i32
    %c0_i32_1 = arith.constant 0 : i32
    return %c0_i32, %c0_i32_0 : i32, i32
  }
  func.func @transform_3(%arg0: i32, %arg1: i32) -> (i32, i32) {
    %c0_i32 = arith.constant 0 : i32
    %c0_i32_0 = arith.constant 0 : i32
    %c0_i32_1 = arith.constant 0 : i32
    return %c0_i32, %c0_i32_0 : i32, i32
  }
  func.func @transform_4(%arg0: i32, %arg1: i32) -> (i32, i32, i32) {
    %c0_i32 = arith.constant 0 : i32
    %c0_i32_0 = arith.constant 0 : i32
    %c0_i32_1 = arith.constant 0 : i32
    return %arg1, %c0_i32, %c0_i32_0 : i32, i32, i32
  }
  func.func @transform_5(%arg0: i32, %arg1: i32) -> (i32, i32, i32) {
    %c0_i32 = arith.constant 0 : i32
    %c0_i32_0 = arith.constant 0 : i32
    %c0_i32_1 = arith.constant 0 : i32
    return %arg1, %c0_i32, %c0_i32_0 : i32, i32, i32
  }
  func.func @transform_6(%arg0: i32, %arg1: i32) -> (i32, i32, i32, i32) {
    %c0_i32 = arith.constant 0 : i32
    %c0_i32_0 = arith.constant 0 : i32
    %c0_i32_1 = arith.constant 0 : i32
    %c0_i32_2 = arith.constant 0 : i32
    return %arg1, %c0_i32, %c0_i32_0, %c0_i32_1 : i32, i32, i32, i32
  }
  func.func @transform_7(%arg0: i32, %arg1: i32) -> (i32, i32, i32, i32) {
    %c0_i32 = arith.constant 0 : i32
    %c0_i32_0 = arith.constant 0 : i32
    %c0_i32_1 = arith.constant 0 : i32
    %c0_i32_2 = arith.constant 0 : i32
    return %arg1, %c0_i32, %c0_i32_0, %c0_i32_1 : i32, i32, i32, i32
  }
  func.func @transform_8(%arg0: i32, %arg1: i32) -> (i32, i32, i32, i32) {
    %c0_i32 = arith.constant 0 : i32
    %c0_i32_0 = arith.constant 0 : i32
    %c0_i32_1 = arith.constant 0 : i32
    %c0_i32_2 = arith.constant 0 : i32
    return %arg1, %c0_i32, %c0_i32_0, %c0_i32_1 : i32, i32, i32, i32
  }
  func.func @transform_9(%arg0: i32, %arg1: i32) -> (i32, i32, i32, i32) {
    %c0_i32 = arith.constant 0 : i32
    %c0_i32_0 = arith.constant 0 : i32
    %c0_i32_1 = arith.constant 0 : i32
    %c0_i32_2 = arith.constant 0 : i32
    return %arg1, %c0_i32, %c0_i32_0, %c0_i32_1 : i32, i32, i32, i32
  }
  func.func @transform_10(%arg0: i32, %arg1: i32) -> (i32, i32, i32, i32) {
    %c0_i32 = arith.constant 0 : i32
    %c0_i32_0 = arith.constant 0 : i32
    %c0_i32_1 = arith.constant 0 : i32
    %c0_i32_2 = arith.constant 0 : i32
    return %arg1, %c0_i32, %c0_i32_0, %c0_i32_1 : i32, i32, i32, i32
  }
  func.func @transform_11(%arg0: i32, %arg1: i32) -> (i32, i32, i32, i32) {
    %c0_i32 = arith.constant 0 : i32
    %c0_i32_0 = arith.constant 0 : i32
    %c0_i32_1 = arith.constant 0 : i32
    %c0_i32_2 = arith.constant 0 : i32
    return %arg1, %c0_i32, %c0_i32_0, %c0_i32_1 : i32, i32, i32, i32
  }
  func.func @transform_12(%arg0: i32, %arg1: i32) -> (i32, i32, i32, i32) {
    %c0_i32 = arith.constant 0 : i32
    %c0_i32_0 = arith.constant 0 : i32
    %c0_i32_1 = arith.constant 0 : i32
    %c0_i32_2 = arith.constant 0 : i32
    return %arg1, %c0_i32, %c0_i32_0, %c0_i32_1 : i32, i32, i32, i32
  }
  func.func @transform_13(%arg0: i32, %arg1: i32) -> (i32, i32, i32) {
    %c0_i32 = arith.constant 0 : i32
    %c0_i32_0 = arith.constant 0 : i32
    %c0_i32_1 = arith.constant 0 : i32
    return %arg1, %c0_i32, %c0_i32_0 : i32, i32, i32
  }
  func.func @transform_14(%arg0: i32, %arg1: i32) -> (i32, i32, i32) {
    %c0_i32 = arith.constant 0 : i32
    %c0_i32_0 = arith.constant 0 : i32
    %c0_i32_1 = arith.constant 0 : i32
    return %arg1, %c0_i32, %c0_i32_0 : i32, i32, i32
  }
  func.func @transform_15(%arg0: i32, %arg1: i32) -> (i32, i32, i32) {
    %c0_i32 = arith.constant 0 : i32
    %c0_i32_0 = arith.constant 0 : i32
    %c0_i32_1 = arith.constant 0 : i32
    return %arg1, %c0_i32, %c0_i32_0 : i32, i32, i32
  }
  func.func @transform_16(%arg0: i32, %arg1: i32) -> (i32, i32, i32) {
    %c0_i32 = arith.constant 0 : i32
    %c0_i32_0 = arith.constant 0 : i32
    %c0_i32_1 = arith.constant 0 : i32
    return %arg1, %c0_i32, %c0_i32_0 : i32, i32, i32
  }
  func.func @transform_17(%arg0: i32, %arg1: i32) -> (i32, i32, i32) {
    %c0_i32 = arith.constant 0 : i32
    %c0_i32_0 = arith.constant 0 : i32
    %c0_i32_1 = arith.constant 0 : i32
    return %arg1, %c0_i32, %c0_i32_0 : i32, i32, i32
  }
  func.func @transform_18(%arg0: i32, %arg1: i32) -> (i32, i32, i32) {
    %c0_i32 = arith.constant 0 : i32
    %c0_i32_0 = arith.constant 0 : i32
    %c0_i32_1 = arith.constant 0 : i32
    return %arg1, %c0_i32, %c0_i32_0 : i32, i32, i32
  }
  func.func @transform_19(%arg0: i32, %arg1: i32) -> (i32, i32, i32) {
    %c0_i32 = arith.constant 0 : i32
    %c0_i32_0 = arith.constant 0 : i32
    %c0_i32_1 = arith.constant 0 : i32
    return %arg1, %c0_i32, %c0_i32_0 : i32, i32, i32
  }
  func.func @transform_20(%arg0: i32, %arg1: i32) -> (i32, i32) {
    %c0_i32 = arith.constant 0 : i32
    %c0_i32_0 = arith.constant 0 : i32
    %c0_i32_1 = arith.constant 0 : i32
    return %c0_i32, %c0_i32_0 : i32, i32
  }
  func.func @transform_21(%arg0: i32, %arg1: i32) -> (i32, i32) {
    %c0_i32 = arith.constant 0 : i32
    %c0_i32_0 = arith.constant 0 : i32
    %c0_i32_1 = arith.constant 0 : i32
    return %c0_i32, %c0_i32_0 : i32, i32
  }
  func.func @transform_22(%arg0: i32, %arg1: i32) -> (i32, i32) {
    %c0_i32 = arith.constant 0 : i32
    %c0_i32_0 = arith.constant 0 : i32
    %c0_i32_1 = arith.constant 0 : i32
    return %c0_i32, %c0_i32_0 : i32, i32
  }
  func.func @transform_23(%arg0: i32, %arg1: i32) -> (i32, i32) {
    %c0_i32 = arith.constant 0 : i32
    %c0_i32_0 = arith.constant 0 : i32
    %c0_i32_1 = arith.constant 0 : i32
    return %c0_i32, %c0_i32_0 : i32, i32
  }
  func.func @transform_24(%arg0: i32, %arg1: i32) -> (i32, i32) {
    %c0_i32 = arith.constant 0 : i32
    %c0_i32_0 = arith.constant 0 : i32
    %c0_i32_1 = arith.constant 0 : i32
    return %c0_i32, %c0_i32_0 : i32, i32
  }
  func.func @transform_25(%arg0: i32, %arg1: i32) -> (i32, i32) {
    %c0_i32 = arith.constant 0 : i32
    %c0_i32_0 = arith.constant 0 : i32
    %c0_i32_1 = arith.constant 0 : i32
    return %c0_i32, %c0_i32_0 : i32, i32
  }
  func.func @transform_26(%arg0: i32, %arg1: i32) -> (i32, i32) {
    %c0_i32 = arith.constant 0 : i32
    %c0_i32_0 = arith.constant 0 : i32
    return %arg0, %c0_i32 : i32, i32
  }
}

</mosaic_0001>

<llo_original>
// kernel: pretrained_gpt2_forward.1
$region0: #{pretrained_gpt2_forward.1}
  #allocation0 [shape = 'u32[]', space=smem, size = 0x4, offset = 0x4, fixed_abs, tag = 'smem constant byte address 0x4 - core index']
  #allocation1 [shape = 'u32[144,128]{1,0:T(1,128)}', space=vmem, size = 0x12000, scoped, tag = 'internal scratch']
  #allocation2 [shape = 'f32[8,64]{1,0:T(8,128)}', space=vmem, size = 0x1000, scoped, tag = 'scratch operand']
  %s0 = inlined_call_operand.vmem [shape: f32[16,16], index: 0, kind: input, shape index: {}]
  %s1 = inlined_call_operand.vmem [shape: bf16[16,64], index: 1, kind: input, shape index: {}]
  %s2 = inlined_call_operand.vmem [shape: f32[1,64], index: 2, kind: input, shape index: {}]
  %s3 = inlined_call_operand.vmem [shape: f32[32,64], index: 3, kind: input, shape index: {}]
  %s4 = inlined_call_operand.vmem [shape: f32[2,1,64], index: 4, kind: input, shape index: {}]
  %s5 = inlined_call_operand.vmem [shape: f32[2,1,64], index: 5, kind: input, shape index: {}]
  %s6 = inlined_call_operand.vmem [shape: bf16[2,4,64,16], index: 6, kind: input, shape index: {}]
  %s7 = inlined_call_operand.vmem [shape: bf16[2,4,64,16], index: 7, kind: input, shape index: {}]
  %s8 = inlined_call_operand.vmem [shape: bf16[2,4,64,16], index: 8, kind: input, shape index: {}]
  %s9 = inlined_call_operand.vmem [shape: f32[2,4,1,16], index: 9, kind: input, shape index: {}]
  %s10 = inlined_call_operand.vmem [shape: f32[2,4,1,16], index: 10, kind: input, shape index: {}]
  %s11 = inlined_call_operand.vmem [shape: f32[2,4,1,16], index: 11, kind: input, shape index: {}]
  %s12 = inlined_call_operand.vmem [shape: bf16[2,4,16,64], index: 12, kind: input, shape index: {}]
  %s13 = inlined_call_operand.vmem [shape: f32[2,1,64], index: 13, kind: input, shape index: {}]
  %s14 = inlined_call_operand.vmem [shape: f32[2,1,64], index: 14, kind: input, shape index: {}]
  %s15 = inlined_call_operand.vmem [shape: f32[2,1,64], index: 15, kind: input, shape index: {}]
  %s16 = inlined_call_operand.vmem [shape: bf16[2,64,256], index: 16, kind: input, shape index: {}]
  %s17 = inlined_call_operand.vmem [shape: f32[2,1,256], index: 17, kind: input, shape index: {}]
  %s18 = inlined_call_operand.vmem [shape: bf16[2,256,64], index: 18, kind: input, shape index: {}]
  %s19 = inlined_call_operand.vmem [shape: f32[2,1,64], index: 19, kind: input, shape index: {}]
  %s20 = inlined_call_operand.vmem [shape: f32[1,64], index: 20, kind: input, shape index: {}]
  %s21 = inlined_call_operand.vmem [shape: f32[1,64], index: 21, kind: input, shape index: {}]
  %s22 = inlined_call_operand.vmem [shape: bf16[64,32], index: 22, kind: input, shape index: {}]
  %s23 = inlined_call_operand.vmem [shape: f32[1,32], index: 23, kind: input, shape index: {}]
  %s24 = inlined_call_operand.vmem [shape: bf16[32,128], index: 24, kind: input, shape index: {}]
  %s25 = inlined_call_operand.vmem [shape: f32[1,128], index: 25, kind: input, shape index: {}]
  %s26 = inlined_call_operand.vmem [shape: f32[16,128], index: 26, kind: output, shape index: {}]
  %s27 = sld [smem:[#allocation0]]
  $region145: #{pretrained_gpt2_forward.1} parent=0
    _
  %s29 = ssub.s32 1, %s27
  %s30 = scalar_select 0, %s29, %s27
  loop: start=0, step=1, limit=6
  $region2: #{pretrained_gpt2_forward.1} parent=0 // loop_pre_header
    _
  $region3: #{pretrained_gpt2_forward.1} parent=0 // loop_header
    %s32 = sphi 0, %s36
    %p33 = scmp.ge.s32.totalorder %s32, 6
    %s39 = sphi 0, %s51
    %s40 = sphi 0, %s47
    %s41 = sphi 0, %s39
    %s42 = sphi 0, %s40
    %s43 = sphi 0, %s41
    %s44 = sphi 0, %s42
    %s54 = sphi 0, %s56
    %s57 = sphi 0, %s54
    %s58 = sphi 0, %s57
    %s74 = sphi 0, %s58
    %s78 = sphi 0, %s78
    %s80 = sphi 0, %s78
    %s81 = sphi 0, %s80
    %s95 = sphi 0, %s81
    %s99 = sphi 0, %s99
    %s101 = sphi 0, %s99
    %s102 = sphi 0, %s101
    %s116 = sphi 0, %s102
    %s120 = sphi 0, %s120
    %s122 = sphi 0, %s120
    %s123 = sphi 0, %s122
    %s137 = sphi 0, %s123
    %s143 = sphi 0, %s145
    %s146 = sphi 0, %s143
    %s147 = sphi 0, %s146
    %s163 = sphi 0, %s147
    %s169 = sphi 0, %s171
    %s172 = sphi 0, %s169
    %s173 = sphi 0, %s172
    %s189 = sphi 0, %s173
    %s195 = sphi 0, %s197
    %s198 = sphi 0, %s195
    %s199 = sphi 0, %s198
    %s215 = sphi 0, %s199
    %s221 = sphi 0, %s223
    %s224 = sphi 0, %s221
    %s225 = sphi 0, %s224
    %s241 = sphi 0, %s225
    %s247 = sphi 0, %s249
    %s250 = sphi 0, %s247
    %s251 = sphi 0, %s250
    %s267 = sphi 0, %s251
    %s273 = sphi 0, %s275
    %s276 = sphi 0, %s273
    %s277 = sphi 0, %s276
    %s293 = sphi 0, %s277
    %s299 = sphi 0, %s301
    %s302 = sphi 0, %s299
    %s303 = sphi 0, %s302
    %s319 = sphi 0, %s303
    %s325 = sphi 0, %s327
    %s328 = sphi 0, %s325
    %s329 = sphi 0, %s328
    %s345 = sphi 0, %s329
    %s351 = sphi 0, %s353
    %s354 = sphi 0, %s351
    %s355 = sphi 0, %s354
    %s371 = sphi 0, %s355
    %s377 = sphi 0, %s379
    %s380 = sphi 0, %s377
    %s381 = sphi 0, %s380
    %s397 = sphi 0, %s381
    %s403 = sphi 0, %s405
    %s406 = sphi 0, %s403
    %s407 = sphi 0, %s406
    %s423 = sphi 0, %s407
    %s429 = sphi 0, %s431
    %s432 = sphi 0, %s429
    %s433 = sphi 0, %s432
    %s449 = sphi 0, %s433
    %s455 = sphi 0, %s457
    %s458 = sphi 0, %s455
    %s459 = sphi 0, %s458
    %s475 = sphi 0, %s459
    %s481 = sphi 0, %s483
    %s484 = sphi 0, %s481
    %s485 = sphi 0, %s484
    %s501 = sphi 0, %s485
    %s507 = sphi 0, %s509
    %s510 = sphi 0, %s507
    %s511 = sphi 0, %s510
    %s527 = sphi 0, %s511
    %s533 = sphi 0, %s535
    %s536 = sphi 0, %s533
    %s537 = sphi 0, %s536
    %s553 = sphi 0, %s537
    %s557 = sphi 0, %s557
    %s559 = sphi 0, %s557
    %s560 = sphi 0, %s559
    %s574 = sphi 0, %s560
    %s578 = sphi 0, %s578
    %s580 = sphi 0, %s578
    %s581 = sphi 0, %s580
    %s595 = sphi 0, %s581
    %s599 = sphi 0, %s599
    %s601 = sphi 0, %s599
    %s602 = sphi 0, %s601
    %s616 = sphi 0, %s602
    %s620 = sphi 0, %s620
    %s622 = sphi 0, %s620
    %s623 = sphi 0, %s622
    %s637 = sphi 0, %s623
    %s641 = sphi 0, %s641
    %s643 = sphi 0, %s641
    %s644 = sphi 0, %s643
    %s658 = sphi 0, %s644
    %s662 = sphi 0, %s662
    %s664 = sphi 0, %s662
    %s665 = sphi 0, %s664
    %s679 = sphi 0, %s665
    %s685 = sphi 0, %s687
    %s688 = sphi 0, %s685
    %s689 = sphi 0, %s688
    %s705 = sphi 0, %s689
  $region4: #{pretrained_gpt2_forward.1} parent=0 // loop_header_branch
    %35 = sbr.rel (%p33) target = $region8
  $region5: #{pretrained_gpt2_forward.1} parent=0 // loop_body
    %s37 = ssub.s32 %s32, 1
    %s38 = ssub.s32 %s32, 2
    %s45 = sadd.s32 1, %s40
    %p46 = scmp.ge.s32.totalorder %s45, 2
    %s47 = scalar_select %p46, 0, %s45
    %s48 = sadd.s32 1, %s39
    %s49 = scalar_select %p46, %s48, %s39
    %p50 = scmp.ge.s32.totalorder %s49, 2
    %s51 = scalar_select %p50, 0, %s49
    %s52 = ssub.s32 %s39, %s51
    %p53 = scmp.eq.s32.totalorder %s52, 0
    %s55 = sadd.s32 %s54, 1
    %s56 = scalar_select %p53, %s54, %s55
    %p59 = pneg %p53
    %p60 = scmp.eq.s32.totalorder %s32, 3
    %p61 = por %p59, %p60
    %p62 = scmp.ne.s32.totalorder %s54, %s57
    %p63 = scmp.eq.s32.totalorder %s32, 0
    %p64 = por %p62, %p63
    %p65 = scmp.ne.s32.totalorder %s54, %s57
    %p66 = scmp.eq.s32.totalorder %s37, 3
    %p67 = por %p65, %p66
    %p68 = scmp.ne.s32.totalorder %s57, %s58
    %p69 = scmp.eq.s32.totalorder %s37, 0
    %p70 = por %p68, %p69
    %p71 = scmp.ne.s32.totalorder %s57, %s58
    %p72 = scmp.eq.s32.totalorder %s38, 3
    %p73 = por %p71, %p72
    %p75 = scmp.ne.s32.totalorder %s58, %s74
    %p76 = scmp.eq.s32.totalorder %s38, 0
    %p77 = por %p75, %p76
    %s79 = sadd.s32 %s78, 1
    %p82 = scmp.eq.s32.totalorder %s32, 3
    %p83 = scmp.ne.s32.totalorder %s78, %s80
    %p84 = scmp.eq.s32.totalorder %s32, 0
    %p85 = por %p83, %p84
    %p86 = scmp.ne.s32.totalorder %s78, %s80
    %p87 = scmp.eq.s32.totalorder %s37, 3
    %p88 = por %p86, %p87
    %p89 = scmp.ne.s32.totalorder %s80, %s81
    %p90 = scmp.eq.s32.totalorder %s37, 0
    %p91 = por %p89, %p90
    %p92 = scmp.ne.s32.totalorder %s80, %s81
    %p93 = scmp.eq.s32.totalorder %s38, 3
    %p94 = por %p92, %p93
    %p96 = scmp.ne.s32.totalorder %s81, %s95
    %p97 = scmp.eq.s32.totalorder %s38, 0
    %p98 = por %p96, %p97
    %s100 = sadd.s32 %s99, 1
    %p103 = scmp.eq.s32.totalorder %s32, 3
    %p104 = scmp.ne.s32.totalorder %s99, %s101
    %p105 = scmp.eq.s32.totalorder %s32, 0
    %p106 = por %p104, %p105
    %p107 = scmp.ne.s32.totalorder %s99, %s101
    %p108 = scmp.eq.s32.totalorder %s37, 3
    %p109 = por %p107, %p108
    %p110 = scmp.ne.s32.totalorder %s101, %s102
    %p111 = scmp.eq.s32.totalorder %s37, 0
    %p112 = por %p110, %p111
    %p113 = scmp.ne.s32.totalorder %s101, %s102
    %p114 = scmp.eq.s32.totalorder %s38, 3
    %p115 = por %p113, %p114
    %p117 = scmp.ne.s32.totalorder %s102, %s116
    %p118 = scmp.eq.s32.totalorder %s38, 0
    %p119 = por %p117, %p118
    %s121 = sadd.s32 %s120, 1
    %p124 = scmp.eq.s32.totalorder %s32, 3
    %p125 = scmp.ne.s32.totalorder %s120, %s122
    %p126 = scmp.eq.s32.totalorder %s32, 0
    %p127 = por %p125, %p126
    %p128 = scmp.ne.s32.totalorder %s120, %s122
    %p129 = scmp.eq.s32.totalorder %s37, 3
    %p130 = por %p128, %p129
    %p131 = scmp.ne.s32.totalorder %s122, %s123
    %p132 = scmp.eq.s32.totalorder %s37, 0
    %p133 = por %p131, %p132
    %p134 = scmp.ne.s32.totalorder %s122, %s123
    %p135 = scmp.eq.s32.totalorder %s38, 3
    %p136 = por %p134, %p135
    %p138 = scmp.ne.s32.totalorder %s123, %s137
    %p139 = scmp.eq.s32.totalorder %s38, 0
    %p140 = por %p138, %p139
    %s141 = ssub.s32 %s40, %s47
    %p142 = scmp.eq.s32.totalorder %s141, 0
    %s144 = sadd.s32 %s143, 1
    %s145 = scalar_select %p142, %s143, %s144
    %p148 = pneg %p142
    %p149 = scmp.eq.s32.totalorder %s32, 3
    %p150 = por %p148, %p149
    %p151 = scmp.ne.s32.totalorder %s143, %s146
    %p152 = scmp.eq.s32.totalorder %s32, 0
    %p153 = por %p151, %p152
    %p154 = scmp.ne.s32.totalorder %s143, %s146
    %p155 = scmp.eq.s32.totalorder %s37, 3
    %p156 = por %p154, %p155
    %p157 = scmp.ne.s32.totalorder %s146, %s147
    %p158 = scmp.eq.s32.totalorder %s37, 0
    %p159 = por %p157, %p158
    %p160 = scmp.ne.s32.totalorder %s146, %s147
    %p161 = scmp.eq.s32.totalorder %s38, 3
    %p162 = por %p160, %p161
    %p164 = scmp.ne.s32.totalorder %s147, %s163
    %p165 = scmp.eq.s32.totalorder %s38, 0
    %p166 = por %p164, %p165
    %s167 = ssub.s32 %s40, %s47
    %p168 = scmp.eq.s32.totalorder %s167, 0
    %s170 = sadd.s32 %s169, 1
    %s171 = scalar_select %p168, %s169, %s170
    %p174 = pneg %p168
    %p175 = scmp.eq.s32.totalorder %s32, 3
    %p176 = por %p174, %p175
    %p177 = scmp.ne.s32.totalorder %s169, %s172
    %p178 = scmp.eq.s32.totalorder %s32, 0
    %p179 = por %p177, %p178
    %p180 = scmp.ne.s32.totalorder %s169, %s172
    %p181 = scmp.eq.s32.totalorder %s37, 3
    %p182 = por %p180, %p181
    %p183 = scmp.ne.s32.totalorder %s172, %s173
    %p184 = scmp.eq.s32.totalorder %s37, 0
    %p185 = por %p183, %p184
    %p186 = scmp.ne.s32.totalorder %s172, %s173
    %p187 = scmp.eq.s32.totalorder %s38, 3
    %p188 = por %p186, %p187
    %p190 = scmp.ne.s32.totalorder %s173, %s189
    %p191 = scmp.eq.s32.totalorder %s38, 0
    %p192 = por %p190, %p191
    %s193 = ssub.s32 %s40, %s47
    %p194 = scmp.eq.s32.totalorder %s193, 0
    %s196 = sadd.s32 %s195, 1
    %s197 = scalar_select %p194, %s195, %s196
    %p200 = pneg %p194
    %p201 = scmp.eq.s32.totalorder %s32, 3
    %p202 = por %p200, %p201
    %p203 = scmp.ne.s32.totalorder %s195, %s198
    %p204 = scmp.eq.s32.totalorder %s32, 0
    %p205 = por %p203, %p204
    %p206 = scmp.ne.s32.totalorder %s195, %s198
    %p207 = scmp.eq.s32.totalorder %s37, 3
    %p208 = por %p206, %p207
    %p209 = scmp.ne.s32.totalorder %s198, %s199
    %p210 = scmp.eq.s32.totalorder %s37, 0
    %p211 = por %p209, %p210
    %p212 = scmp.ne.s32.totalorder %s198, %s199
    %p213 = scmp.eq.s32.totalorder %s38, 3
    %p214 = por %p212, %p213
    %p216 = scmp.ne.s32.totalorder %s199, %s215
    %p217 = scmp.eq.s32.totalorder %s38, 0
    %p218 = por %p216, %p217
    %s219 = ssub.s32 %s40, %s47
    %p220 = scmp.eq.s32.totalorder %s219, 0
    %s222 = sadd.s32 %s221, 1
    %s223 = scalar_select %p220, %s221, %s222
    %p226 = pneg %p220
    %p227 = scmp.eq.s32.totalorder %s32, 3
    %p228 = por %p226, %p227
    %p229 = scmp.ne.s32.totalorder %s221, %s224
    %p230 = scmp.eq.s32.totalorder %s32, 0
    %p231 = por %p229, %p230
    %p232 = scmp.ne.s32.totalorder %s221, %s224
    %p233 = scmp.eq.s32.totalorder %s37, 3
    %p234 = por %p232, %p233
    %p235 = scmp.ne.s32.totalorder %s224, %s225
    %p236 = scmp.eq.s32.totalorder %s37, 0
    %p237 = por %p235, %p236
    %p238 = scmp.ne.s32.totalorder %s224, %s225
    %p239 = scmp.eq.s32.totalorder %s38, 3
    %p240 = por %p238, %p239
    %p242 = scmp.ne.s32.totalorder %s225, %s241
    %p243 = scmp.eq.s32.totalorder %s38, 0
    %p244 = por %p242, %p243
    %s245 = ssub.s32 %s40, %s47
    %p246 = scmp.eq.s32.totalorder %s245, 0
    %s248 = sadd.s32 %s247, 1
    %s249 = scalar_select %p246, %s247, %s248
    %p252 = pneg %p246
    %p253 = scmp.eq.s32.totalorder %s32, 3
    %p254 = por %p252, %p253
    %p255 = scmp.ne.s32.totalorder %s247, %s250
    %p256 = scmp.eq.s32.totalorder %s32, 0
    %p257 = por %p255, %p256
    %p258 = scmp.ne.s32.totalorder %s247, %s250
    %p259 = scmp.eq.s32.totalorder %s37, 3
    %p260 = por %p258, %p259
    %p261 = scmp.ne.s32.totalorder %s250, %s251
    %p262 = scmp.eq.s32.totalorder %s37, 0
    %p263 = por %p261, %p262
    %p264 = scmp.ne.s32.totalorder %s250, %s251
    %p265 = scmp.eq.s32.totalorder %s38, 3
    %p266 = por %p264, %p265
    %p268 = scmp.ne.s32.totalorder %s251, %s267
    %p269 = scmp.eq.s32.totalorder %s38, 0
    %p270 = por %p268, %p269
    %s271 = ssub.s32 %s40, %s47
    %p272 = scmp.eq.s32.totalorder %s271, 0
    %s274 = sadd.s32 %s273, 1
    %s275 = scalar_select %p272, %s273, %s274
    %p278 = pneg %p272
    %p279 = scmp.eq.s32.totalorder %s32, 3
    %p280 = por %p278, %p279
    %p281 = scmp.ne.s32.totalorder %s273, %s276
    %p282 = scmp.eq.s32.totalorder %s32, 0
    %p283 = por %p281, %p282
    %p284 = scmp.ne.s32.totalorder %s273, %s276
    %p285 = scmp.eq.s32.totalorder %s37, 3
    %p286 = por %p284, %p285
    %p287 = scmp.ne.s32.totalorder %s276, %s277
    %p288 = scmp.eq.s32.totalorder %s37, 0
    %p289 = por %p287, %p288
    %p290 = scmp.ne.s32.totalorder %s276, %s277
    %p291 = scmp.eq.s32.totalorder %s38, 3
    %p292 = por %p290, %p291
    %p294 = scmp.ne.s32.totalorder %s277, %s293
    %p295 = scmp.eq.s32.totalorder %s38, 0
    %p296 = por %p294, %p295
    %s297 = ssub.s32 %s40, %s47
    %p298 = scmp.eq.s32.totalorder %s297, 0
    %s300 = sadd.s32 %s299, 1
    %s301 = scalar_select %p298, %s299, %s300
    %p304 = pneg %p298
    %p305 = scmp.eq.s32.totalorder %s32, 3
    %p306 = por %p304, %p305
    %p307 = scmp.ne.s32.totalorder %s299, %s302
    %p308 = scmp.eq.s32.totalorder %s32, 0
    %p309 = por %p307, %p308
    %p310 = scmp.ne.s32.totalorder %s299, %s302
    %p311 = scmp.eq.s32.totalorder %s37, 3
    %p312 = por %p310, %p311
    %p313 = scmp.ne.s32.totalorder %s302, %s303
    %p314 = scmp.eq.s32.totalorder %s37, 0
    %p315 = por %p313, %p314
    %p316 = scmp.ne.s32.totalorder %s302, %s303
    %p317 = scmp.eq.s32.totalorder %s38, 3
    %p318 = por %p316, %p317
    %p320 = scmp.ne.s32.totalorder %s303, %s319
    %p321 = scmp.eq.s32.totalorder %s38, 0
    %p322 = por %p320, %p321
    %s323 = ssub.s32 %s40, %s47
    %p324 = scmp.eq.s32.totalorder %s323, 0
    %s326 = sadd.s32 %s325, 1
    %s327 = scalar_select %p324, %s325, %s326
    %p330 = pneg %p324
    %p331 = scmp.eq.s32.totalorder %s32, 3
    %p332 = por %p330, %p331
    %p333 = scmp.ne.s32.totalorder %s325, %s328
    %p334 = scmp.eq.s32.totalorder %s32, 0
    %p335 = por %p333, %p334
    %p336 = scmp.ne.s32.totalorder %s325, %s328
    %p337 = scmp.eq.s32.totalorder %s37, 3
    %p338 = por %p336, %p337
    %p339 = scmp.ne.s32.totalorder %s328, %s329
    %p340 = scmp.eq.s32.totalorder %s37, 0
    %p341 = por %p339, %p340
    %p342 = scmp.ne.s32.totalorder %s328, %s329
    %p343 = scmp.eq.s32.totalorder %s38, 3
    %p344 = por %p342, %p343
    %p346 = scmp.ne.s32.totalorder %s329, %s345
    %p347 = scmp.eq.s32.totalorder %s38, 0
    %p348 = por %p346, %p347
    %s349 = ssub.s32 %s40, %s47
    %p350 = scmp.eq.s32.totalorder %s349, 0
    %s352 = sadd.s32 %s351, 1
    %s353 = scalar_select %p350, %s351, %s352
    %p356 = pneg %p350
    %p357 = scmp.eq.s32.totalorder %s32, 3
    %p358 = por %p356, %p357
    %p359 = scmp.ne.s32.totalorder %s351, %s354
    %p360 = scmp.eq.s32.totalorder %s32, 0
    %p361 = por %p359, %p360
    %p362 = scmp.ne.s32.totalorder %s351, %s354
    %p363 = scmp.eq.s32.totalorder %s37, 3
    %p364 = por %p362, %p363
    %p365 = scmp.ne.s32.totalorder %s354, %s355
    %p366 = scmp.eq.s32.totalorder %s37, 0
    %p367 = por %p365, %p366
    %p368 = scmp.ne.s32.totalorder %s354, %s355
    %p369 = scmp.eq.s32.totalorder %s38, 3
    %p370 = por %p368, %p369
    %p372 = scmp.ne.s32.totalorder %s355, %s371
    %p373 = scmp.eq.s32.totalorder %s38, 0
    %p374 = por %p372, %p373
    %s375 = ssub.s32 %s40, %s47
    %p376 = scmp.eq.s32.totalorder %s375, 0
    %s378 = sadd.s32 %s377, 1
    %s379 = scalar_select %p376, %s377, %s378
    %p382 = pneg %p376
    %p383 = scmp.eq.s32.totalorder %s32, 3
    %p384 = por %p382, %p383
    %p385 = scmp.ne.s32.totalorder %s377, %s380
    %p386 = scmp.eq.s32.totalorder %s32, 0
    %p387 = por %p385, %p386
    %p388 = scmp.ne.s32.totalorder %s377, %s380
    %p389 = scmp.eq.s32.totalorder %s37, 3
    %p390 = por %p388, %p389
    %p391 = scmp.ne.s32.totalorder %s380, %s381
    %p392 = scmp.eq.s32.totalorder %s37, 0
    %p393 = por %p391, %p392
    %p394 = scmp.ne.s32.totalorder %s380, %s381
    %p395 = scmp.eq.s32.totalorder %s38, 3
    %p396 = por %p394, %p395
    %p398 = scmp.ne.s32.totalorder %s381, %s397
    %p399 = scmp.eq.s32.totalorder %s38, 0
    %p400 = por %p398, %p399
    %s401 = ssub.s32 %s40, %s47
    %p402 = scmp.eq.s32.totalorder %s401, 0
    %s404 = sadd.s32 %s403, 1
    %s405 = scalar_select %p402, %s403, %s404
    %p408 = pneg %p402
    %p409 = scmp.eq.s32.totalorder %s32, 3
    %p410 = por %p408, %p409
    %p411 = scmp.ne.s32.totalorder %s403, %s406
    %p412 = scmp.eq.s32.totalorder %s32, 0
    %p413 = por %p411, %p412
    %p414 = scmp.ne.s32.totalorder %s403, %s406
    %p415 = scmp.eq.s32.totalorder %s37, 3
    %p416 = por %p414, %p415
    %p417 = scmp.ne.s32.totalorder %s406, %s407
    %p418 = scmp.eq.s32.totalorder %s37, 0
    %p419 = por %p417, %p418
    %p420 = scmp.ne.s32.totalorder %s406, %s407
    %p421 = scmp.eq.s32.totalorder %s38, 3
    %p422 = por %p420, %p421
    %p424 = scmp.ne.s32.totalorder %s407, %s423
    %p425 = scmp.eq.s32.totalorder %s38, 0
    %p426 = por %p424, %p425
    %s427 = ssub.s32 %s40, %s47
    %p428 = scmp.eq.s32.totalorder %s427, 0
    %s430 = sadd.s32 %s429, 1
    %s431 = scalar_select %p428, %s429, %s430
    %p434 = pneg %p428
    %p435 = scmp.eq.s32.totalorder %s32, 3
    %p436 = por %p434, %p435
    %p437 = scmp.ne.s32.totalorder %s429, %s432
    %p438 = scmp.eq.s32.totalorder %s32, 0
    %p439 = por %p437, %p438
    %p440 = scmp.ne.s32.totalorder %s429, %s432
    %p441 = scmp.eq.s32.totalorder %s37, 3
    %p442 = por %p440, %p441
    %p443 = scmp.ne.s32.totalorder %s432, %s433
    %p444 = scmp.eq.s32.totalorder %s37, 0
    %p445 = por %p443, %p444
    %p446 = scmp.ne.s32.totalorder %s432, %s433
    %p447 = scmp.eq.s32.totalorder %s38, 3
    %p448 = por %p446, %p447
    %p450 = scmp.ne.s32.totalorder %s433, %s449
    %p451 = scmp.eq.s32.totalorder %s38, 0
    %p452 = por %p450, %p451
    %s453 = ssub.s32 %s40, %s47
    %p454 = scmp.eq.s32.totalorder %s453, 0
    %s456 = sadd.s32 %s455, 1
    %s457 = scalar_select %p454, %s455, %s456
    %p460 = pneg %p454
    %p461 = scmp.eq.s32.totalorder %s32, 3
    %p462 = por %p460, %p461
    %p463 = scmp.ne.s32.totalorder %s455, %s458
    %p464 = scmp.eq.s32.totalorder %s32, 0
    %p465 = por %p463, %p464
    %p466 = scmp.ne.s32.totalorder %s455, %s458
    %p467 = scmp.eq.s32.totalorder %s37, 3
    %p468 = por %p466, %p467
    %p469 = scmp.ne.s32.totalorder %s458, %s459
    %p470 = scmp.eq.s32.totalorder %s37, 0
    %p471 = por %p469, %p470
    %p472 = scmp.ne.s32.totalorder %s458, %s459
    %p473 = scmp.eq.s32.totalorder %s38, 3
    %p474 = por %p472, %p473
    %p476 = scmp.ne.s32.totalorder %s459, %s475
    %p477 = scmp.eq.s32.totalorder %s38, 0
    %p478 = por %p476, %p477
    %s479 = ssub.s32 %s40, %s47
    %p480 = scmp.eq.s32.totalorder %s479, 0
    %s482 = sadd.s32 %s481, 1
    %s483 = scalar_select %p480, %s481, %s482
    %p486 = pneg %p480
    %p487 = scmp.eq.s32.totalorder %s32, 3
    %p488 = por %p486, %p487
    %p489 = scmp.ne.s32.totalorder %s481, %s484
    %p490 = scmp.eq.s32.totalorder %s32, 0
    %p491 = por %p489, %p490
    %p492 = scmp.ne.s32.totalorder %s481, %s484
    %p493 = scmp.eq.s32.totalorder %s37, 3
    %p494 = por %p492, %p493
    %p495 = scmp.ne.s32.totalorder %s484, %s485
    %p496 = scmp.eq.s32.totalorder %s37, 0
    %p497 = por %p495, %p496
    %p498 = scmp.ne.s32.totalorder %s484, %s485
    %p499 = scmp.eq.s32.totalorder %s38, 3
    %p500 = por %p498, %p499
    %p502 = scmp.ne.s32.totalorder %s485, %s501
    %p503 = scmp.eq.s32.totalorder %s38, 0
    %p504 = por %p502, %p503
    %s505 = ssub.s32 %s40, %s47
    %p506 = scmp.eq.s32.totalorder %s505, 0
    %s508 = sadd.s32 %s507, 1
    %s509 = scalar_select %p506, %s507, %s508
    %p512 = pneg %p506
    %p513 = scmp.eq.s32.totalorder %s32, 3
    %p514 = por %p512, %p513
    %p515 = scmp.ne.s32.totalorder %s507, %s510
    %p516 = scmp.eq.s32.totalorder %s32, 0
    %p517 = por %p515, %p516
    %p518 = scmp.ne.s32.totalorder %s507, %s510
    %p519 = scmp.eq.s32.totalorder %s37, 3
    %p520 = por %p518, %p519
    %p521 = scmp.ne.s32.totalorder %s510, %s511
    %p522 = scmp.eq.s32.totalorder %s37, 0
    %p523 = por %p521, %p522
    %p524 = scmp.ne.s32.totalorder %s510, %s511
    %p525 = scmp.eq.s32.totalorder %s38, 3
    %p526 = por %p524, %p525
    %p528 = scmp.ne.s32.totalorder %s511, %s527
    %p529 = scmp.eq.s32.totalorder %s38, 0
    %p530 = por %p528, %p529
    %s531 = ssub.s32 %s40, %s47
    %p532 = scmp.eq.s32.totalorder %s531, 0
    %s534 = sadd.s32 %s533, 1
    %s535 = scalar_select %p532, %s533, %s534
    %p538 = pneg %p532
    %p539 = scmp.eq.s32.totalorder %s32, 3
    %p540 = por %p538, %p539
    %p541 = scmp.ne.s32.totalorder %s533, %s536
    %p542 = scmp.eq.s32.totalorder %s32, 0
    %p543 = por %p541, %p542
    %p544 = scmp.ne.s32.totalorder %s533, %s536
    %p545 = scmp.eq.s32.totalorder %s37, 3
    %p546 = por %p544, %p545
    %p547 = scmp.ne.s32.totalorder %s536, %s537
    %p548 = scmp.eq.s32.totalorder %s37, 0
    %p549 = por %p547, %p548
    %p550 = scmp.ne.s32.totalorder %s536, %s537
    %p551 = scmp.eq.s32.totalorder %s38, 3
    %p552 = por %p550, %p551
    %p554 = scmp.ne.s32.totalorder %s537, %s553
    %p555 = scmp.eq.s32.totalorder %s38, 0
    %p556 = por %p554, %p555
    %s558 = sadd.s32 %s557, 1
    %p561 = scmp.eq.s32.totalorder %s32, 3
    %p562 = scmp.ne.s32.totalorder %s557, %s559
    %p563 = scmp.eq.s32.totalorder %s32, 0
    %p564 = por %p562, %p563
    %p565 = scmp.ne.s32.totalorder %s557, %s559
    %p566 = scmp.eq.s32.totalorder %s37, 3
    %p567 = por %p565, %p566
    %p568 = scmp.ne.s32.totalorder %s559, %s560
    %p569 = scmp.eq.s32.totalorder %s37, 0
    %p570 = por %p568, %p569
    %p571 = scmp.ne.s32.totalorder %s559, %s560
    %p572 = scmp.eq.s32.totalorder %s38, 3
    %p573 = por %p571, %p572
    %p575 = scmp.ne.s32.totalorder %s560, %s574
    %p576 = scmp.eq.s32.totalorder %s38, 0
    %p577 = por %p575, %p576
    %s579 = sadd.s32 %s578, 1
    %p582 = scmp.eq.s32.totalorder %s32, 3
    %p583 = scmp.ne.s32.totalorder %s578, %s580
    %p584 = scmp.eq.s32.totalorder %s32, 0
    %p585 = por %p583, %p584
    %p586 = scmp.ne.s32.totalorder %s578, %s580
    %p587 = scmp.eq.s32.totalorder %s37, 3
    %p588 = por %p586, %p587
    %p589 = scmp.ne.s32.totalorder %s580, %s581
    %p590 = scmp.eq.s32.totalorder %s37, 0
    %p591 = por %p589, %p590
    %p592 = scmp.ne.s32.totalorder %s580, %s581
    %p593 = scmp.eq.s32.totalorder %s38, 3
    %p594 = por %p592, %p593
    %p596 = scmp.ne.s32.totalorder %s581, %s595
    %p597 = scmp.eq.s32.totalorder %s38, 0
    %p598 = por %p596, %p597
    %s600 = sadd.s32 %s599, 1
    %p603 = scmp.eq.s32.totalorder %s32, 3
    %p604 = scmp.ne.s32.totalorder %s599, %s601
    %p605 = scmp.eq.s32.totalorder %s32, 0
    %p606 = por %p604, %p605
    %p607 = scmp.ne.s32.totalorder %s599, %s601
    %p608 = scmp.eq.s32.totalorder %s37, 3
    %p609 = por %p607, %p608
    %p610 = scmp.ne.s32.totalorder %s601, %s602
    %p611 = scmp.eq.s32.totalorder %s37, 0
    %p612 = por %p610, %p611
    %p613 = scmp.ne.s32.totalorder %s601, %s602
    %p614 = scmp.eq.s32.totalorder %s38, 3
    %p615 = por %p613, %p614
    %p617 = scmp.ne.s32.totalorder %s602, %s616
    %p618 = scmp.eq.s32.totalorder %s38, 0
    %p619 = por %p617, %p618
    %s621 = sadd.s32 %s620, 1
    %p624 = scmp.eq.s32.totalorder %s32, 3
    %p625 = scmp.ne.s32.totalorder %s620, %s622
    %p626 = scmp.eq.s32.totalorder %s32, 0
    %p627 = por %p625, %p626
    %p628 = scmp.ne.s32.totalorder %s620, %s622
    %p629 = scmp.eq.s32.totalorder %s37, 3
    %p630 = por %p628, %p629
    %p631 = scmp.ne.s32.totalorder %s622, %s623
    %p632 = scmp.eq.s32.totalorder %s37, 0
    %p633 = por %p631, %p632
    %p634 = scmp.ne.s32.totalorder %s622, %s623
    %p635 = scmp.eq.s32.totalorder %s38, 3
    %p636 = por %p634, %p635
    %p638 = scmp.ne.s32.totalorder %s623, %s637
    %p639 = scmp.eq.s32.totalorder %s38, 0
    %p640 = por %p638, %p639
    %s642 = sadd.s32 %s641, 1
    %p645 = scmp.eq.s32.totalorder %s32, 3
    %p646 = scmp.ne.s32.totalorder %s641, %s643
    %p647 = scmp.eq.s32.totalorder %s32, 0
    %p648 = por %p646, %p647
    %p649 = scmp.ne.s32.totalorder %s641, %s643
    %p650 = scmp.eq.s32.totalorder %s37, 3
    %p651 = por %p649, %p650
    %p652 = scmp.ne.s32.totalorder %s643, %s644
    %p653 = scmp.eq.s32.totalorder %s37, 0
    %p654 = por %p652, %p653
    %p655 = scmp.ne.s32.totalorder %s643, %s644
    %p656 = scmp.eq.s32.totalorder %s38, 3
    %p657 = por %p655, %p656
    %p659 = scmp.ne.s32.totalorder %s644, %s658
    %p660 = scmp.eq.s32.totalorder %s38, 0
    %p661 = por %p659, %p660
    %s663 = sadd.s32 %s662, 1
    %p666 = scmp.eq.s32.totalorder %s32, 3
    %p667 = scmp.ne.s32.totalorder %s662, %s664
    %p668 = scmp.eq.s32.totalorder %s32, 0
    %p669 = por %p667, %p668
    %p670 = scmp.ne.s32.totalorder %s662, %s664
    %p671 = scmp.eq.s32.totalorder %s37, 3
    %p672 = por %p670, %p671
    %p673 = scmp.ne.s32.totalorder %s664, %s665
    %p674 = scmp.eq.s32.totalorder %s37, 0
    %p675 = por %p673, %p674
    %p676 = scmp.ne.s32.totalorder %s664, %s665
    %p677 = scmp.eq.s32.totalorder %s38, 3
    %p678 = por %p676, %p677
    %p680 = scmp.ne.s32.totalorder %s665, %s679
    %p681 = scmp.eq.s32.totalorder %s38, 0
    %p682 = por %p680, %p681
    %s683 = ssub.s32 %s39, %s51
    %p684 = scmp.eq.s32.totalorder %s683, 0
    %s686 = sadd.s32 %s685, 1
    %s687 = scalar_select %p684, %s685, %s686
    %p690 = pneg %p684
    %p691 = scmp.eq.s32.totalorder %s32, 3
    %p692 = por %p690, %p691
    %p693 = scmp.ne.s32.totalorder %s685, %s688
    %p694 = scmp.eq.s32.totalorder %s32, 0
    %p695 = por %p693, %p694
    %p696 = scmp.ne.s32.totalorder %s685, %s688
    %p697 = scmp.eq.s32.totalorder %s37, 3
    %p698 = por %p696, %p697
    %p699 = scmp.ne.s32.totalorder %s688, %s689
    %p700 = scmp.eq.s32.totalorder %s37, 0
    %p701 = por %p699, %p700
    %p702 = scmp.ne.s32.totalorder %s688, %s689
    %p703 = scmp.eq.s32.totalorder %s38, 3
    %p704 = por %p702, %p703
    %p706 = scmp.ne.s32.totalorder %s689, %s705
    %p707 = scmp.eq.s32.totalorder %s38, 0
    %p708 = por %p706, %p707
    %p709 = scmp.le.s32.totalorder 1, %s32
    %p710 = scmp.lt.s32.totalorder %s32, 5
    %p711 = pnand %p709, %p710
    %p712 = pneg %p711
    // Predicated region
    $region9: #{pretrained_gpt2_forward.1} parent=5 // pred_check
      _
    $region10: #{pretrained_gpt2_forward.1} parent=5 // pred_check_branch
      %714 = sbr.rel (%p711) target = $region12
    $region11: #{pretrained_gpt2_forward.1} parent=5 // pred_region
      %s715 = ssub.s32 %s32, 1
      // Predicated region
      $region13: #{pretrained_gpt2_forward.1} parent=11 // pred_check
        %p716 = pneg %p91
      $region14: #{pretrained_gpt2_forward.1} parent=11 // pred_check_branch
        %718 = sbr.rel (%p716) target = $region16
      $region15: #{pretrained_gpt2_forward.1} parent=11 // pred_region
        _
      $region16: #{pretrained_gpt2_forward.1} parent=11 // pred_fallthru
        _
      // Predicated region
      $region17: #{pretrained_gpt2_forward.1} parent=11 // pred_check
        %p719 = pneg %p112
      $region18: #{pretrained_gpt2_forward.1} parent=11 // pred_check_branch
        %721 = sbr.rel (%p719) target = $region20
      $region19: #{pretrained_gpt2_forward.1} parent=11 // pred_region
        _
      $region20: #{pretrained_gpt2_forward.1} parent=11 // pred_fallthru
        _
      // Predicated region
      $region21: #{pretrained_gpt2_forward.1} parent=11 // pred_check
        %p722 = pneg %p133
      $region22: #{pretrained_gpt2_forward.1} parent=11 // pred_check_branch
        %724 = sbr.rel (%p722) target = $region24
      $region23: #{pretrained_gpt2_forward.1} parent=11 // pred_region
        _
      $region24: #{pretrained_gpt2_forward.1} parent=11 // pred_fallthru
        _
      // Predicated region
      $region25: #{pretrained_gpt2_forward.1} parent=11 // pred_check
        %p725 = pneg %p570
      $region26: #{pretrained_gpt2_forward.1} parent=11 // pred_check_branch
        %727 = sbr.rel (%p725) target = $region28
      $region27: #{pretrained_gpt2_forward.1} parent=11 // pred_region
        _
      $region28: #{pretrained_gpt2_forward.1} parent=11 // pred_fallthru
        _
      // Predicated region
      $region29: #{pretrained_gpt2_forward.1} parent=11 // pred_check
        %p728 = pneg %p591
      $region30: #{pretrained_gpt2_forward.1} parent=11 // pred_check_branch
        %730 = sbr.rel (%p728) target = $region32
      $region31: #{pretrained_gpt2_forward.1} parent=11 // pred_region
        _
      $region32: #{pretrained_gpt2_forward.1} parent=11 // pred_fallthru
        _
      // Predicated region
      $region33: #{pretrained_gpt2_forward.1} parent=11 // pred_check
        %p731 = pneg %p612
      $region34: #{pretrained_gpt2_forward.1} parent=11 // pred_check_branch
        %733 = sbr.rel (%p731) target = $region36
      $region35: #{pretrained_gpt2_forward.1} parent=11 // pred_region
        _
      $region36: #{pretrained_gpt2_forward.1} parent=11 // pred_fallthru
        _
      // Predicated region
      $region37: #{pretrained_gpt2_forward.1} parent=11 // pred_check
        %p734 = pneg %p633
      $region38: #{pretrained_gpt2_forward.1} parent=11 // pred_check_branch
        %736 = sbr.rel (%p734) target = $region40
      $region39: #{pretrained_gpt2_forward.1} parent=11 // pred_region
        _
      $region40: #{pretrained_gpt2_forward.1} parent=11 // pred_fallthru
        _
      // Predicated region
      $region41: #{pretrained_gpt2_forward.1} parent=11 // pred_check
        %p737 = pneg %p654
      $region42: #{pretrained_gpt2_forward.1} parent=11 // pred_check_branch
        %739 = sbr.rel (%p737) target = $region44
      $region43: #{pretrained_gpt2_forward.1} parent=11 // pred_region
        _
      $region44: #{pretrained_gpt2_forward.1} parent=11 // pred_fallthru
        _
      // Predicated region
      $region45: #{pretrained_gpt2_forward.1} parent=11 // pred_check
        %p740 = pneg %p675
      $region46: #{pretrained_gpt2_forward.1} parent=11 // pred_check_branch
        %742 = sbr.rel (%p740) target = $region48
      $region47: #{pretrained_gpt2_forward.1} parent=11 // pred_region
        _
      $region48: #{pretrained_gpt2_forward.1} parent=11 // pred_fallthru
        _
    $region12: #{pretrained_gpt2_forward.1} parent=5 // pred_fallthru
      _
    %p743 = scmp.lt.s32.totalorder %s32, 4
    // Predicated region
    $region49: #{pretrained_gpt2_forward.1} parent=5 // pred_check
      %p744 = pneg %p743
    $region50: #{pretrained_gpt2_forward.1} parent=5 // pred_check_branch
      %746 = sbr.rel (%p744) target = $region52
    $region51: #{pretrained_gpt2_forward.1} parent=5 // pred_region
      // Predicated region
      $region53: #{pretrained_gpt2_forward.1} parent=51 // pred_check
        %p747 = pneg %p64
      $region54: #{pretrained_gpt2_forward.1} parent=51 // pred_check_branch
        %749 = sbr.rel (%p747) target = $region56
      $region55: #{pretrained_gpt2_forward.1} parent=51 // pred_region
        %p750 = scmp.lt.s32.totalorder %s39, 1
        %s751 = scalar_select %p750, %s39, 1
        %s752 = smul.addr %s751, 8
        %s753 = scalar_lea.vmem %s0, %s752
      $region56: #{pretrained_gpt2_forward.1} parent=51 // pred_fallthru
        _
      // Predicated region
      $region57: #{pretrained_gpt2_forward.1} parent=51 // pred_check
        %p754 = pneg %p153
      $region58: #{pretrained_gpt2_forward.1} parent=51 // pred_check_branch
        %756 = sbr.rel (%p754) target = $region60
      $region59: #{pretrained_gpt2_forward.1} parent=51 // pred_region
        %p757 = scmp.lt.s32.totalorder %s40, 1
        %s758 = scalar_select %p757, %s40, 1
        %s759 = scalar_lea.vmem %s4, %s758
      $region60: #{pretrained_gpt2_forward.1} parent=51 // pred_fallthru
        _
      // Predicated region
      $region61: #{pretrained_gpt2_forward.1} parent=51 // pred_check
        %p760 = pneg %p179
      $region62: #{pretrained_gpt2_forward.1} parent=51 // pred_check_branch
        %762 = sbr.rel (%p760) target = $region64
      $region63: #{pretrained_gpt2_forward.1} parent=51 // pred_region
        %p763 = scmp.lt.s32.totalorder %s40, 1
        %s764 = scalar_select %p763, %s40, 1
        %s765 = scalar_lea.vmem %s5, %s764
      $region64: #{pretrained_gpt2_forward.1} parent=51 // pred_fallthru
        _
      // Predicated region
      $region65: #{pretrained_gpt2_forward.1} parent=51 // pred_check
        %p766 = pneg %p205
      $region66: #{pretrained_gpt2_forward.1} parent=51 // pred_check_branch
        %768 = sbr.rel (%p766) target = $region68
      $region67: #{pretrained_gpt2_forward.1} parent=51 // pred_region
        %p769 = scmp.lt.s32.totalorder %s40, 1
        %s770 = scalar_select %p769, %s40, 1
        %s771 = smul.addr %s770, 32
        %s772 = smul.addr %s771, 4
        %s773 = scalar_lea.vmem %s6, %s772
      $region68: #{pretrained_gpt2_forward.1} parent=51 // pred_fallthru
        _
      // Predicated region
      $region69: #{pretrained_gpt2_forward.1} parent=51 // pred_check
        %p774 = pneg %p231
      $region70: #{pretrained_gpt2_forward.1} parent=51 // pred_check_branch
        %776 = sbr.rel (%p774) target = $region72
      $region71: #{pretrained_gpt2_forward.1} parent=51 // pred_region
        %p777 = scmp.lt.s32.totalorder %s40, 1
        %s778 = scalar_select %p777, %s40, 1
        %s779 = smul.addr %s778, 32
        %s780 = smul.addr %s779, 4
        %s781 = scalar_lea.vmem %s7, %s780
      $region72: #{pretrained_gpt2_forward.1} parent=51 // pred_fallthru
        _
      // Predicated region
      $region73: #{pretrained_gpt2_forward.1} parent=51 // pred_check
        %p782 = pneg %p257
      $region74: #{pretrained_gpt2_forward.1} parent=51 // pred_check_branch
        %784 = sbr.rel (%p782) target = $region76
      $region75: #{pretrained_gpt2_forward.1} parent=51 // pred_region
        %p785 = scmp.lt.s32.totalorder %s40, 1
        %s786 = scalar_select %p785, %s40, 1
        %s787 = smul.addr %s786, 32
        %s788 = smul.addr %s787, 4
        %s789 = scalar_lea.vmem %s8, %s788
      $region76: #{pretrained_gpt2_forward.1} parent=51 // pred_fallthru
        _
      // Predicated region
      $region77: #{pretrained_gpt2_forward.1} parent=51 // pred_check
        %p790 = pneg %p283
      $region78: #{pretrained_gpt2_forward.1} parent=51 // pred_check_branch
        %792 = sbr.rel (%p790) target = $region80
      $region79: #{pretrained_gpt2_forward.1} parent=51 // pred_region
        %p793 = scmp.lt.s32.totalorder %s40, 1
        %s794 = scalar_select %p793, %s40, 1
        %s795 = smul.addr %s794, 4
        %s796 = scalar_lea.vmem %s9, %s795
      $region80: #{pretrained_gpt2_forward.1} parent=51 // pred_fallthru
        _
      // Predicated region
      $region81: #{pretrained_gpt2_forward.1} parent=51 // pred_check
        %p797 = pneg %p309
      $region82: #{pretrained_gpt2_forward.1} parent=51 // pred_check_branch
        %799 = sbr.rel (%p797) target = $region84
      $region83: #{pretrained_gpt2_forward.1} parent=51 // pred_region
        %p800 = scmp.lt.s32.totalorder %s40, 1
        %s801 = scalar_select %p800, %s40, 1
        %s802 = smul.addr %s801, 4
        %s803 = scalar_lea.vmem %s10, %s802
      $region84: #{pretrained_gpt2_forward.1} parent=51 // pred_fallthru
        _
      // Predicated region
      $region85: #{pretrained_gpt2_forward.1} parent=51 // pred_check
        %p804 = pneg %p335
      $region86: #{pretrained_gpt2_forward.1} parent=51 // pred_check_branch
        %806 = sbr.rel (%p804) target = $region88
      $region87: #{pretrained_gpt2_forward.1} parent=51 // pred_region
        %p807 = scmp.lt.s32.totalorder %s40, 1
        %s808 = scalar_select %p807, %s40, 1
        %s809 = smul.addr %s808, 4
        %s810 = scalar_lea.vmem %s11, %s809
      $region88: #{pretrained_gpt2_forward.1} parent=51 // pred_fallthru
        _
      // Predicated region
      $region89: #{pretrained_gpt2_forward.1} parent=51 // pred_check
        %p811 = pneg %p361
      $region90: #{pretrained_gpt2_forward.1} parent=51 // pred_check_branch
        %813 = sbr.rel (%p811) target = $region92
      $region91: #{pretrained_gpt2_forward.1} parent=51 // pred_region
        %p814 = scmp.lt.s32.totalorder %s40, 1
        %s815 = scalar_select %p814, %s40, 1
        %s816 = smul.addr %s815, 8
        %s817 = smul.addr %s816, 4
        %s818 = scalar_lea.vmem %s12, %s817
      $region92: #{pretrained_gpt2_forward.1} parent=51 // pred_fallthru
        _
      // Predicated region
      $region93: #{pretrained_gpt2_forward.1} parent=51 // pred_check
        %p819 = pneg %p387
      $region94: #{pretrained_gpt2_forward.1} parent=51 // pred_check_branch
        %821 = sbr.rel (%p819) target = $region96
      $region95: #{pretrained_gpt2_forward.1} parent=51 // pred_region
        %p822 = scmp.lt.s32.totalorder %s40, 1
        %s823 = scalar_select %p822, %s40, 1
        %s824 = scalar_lea.vmem %s13, %s823
      $region96: #{pretrained_gpt2_forward.1} parent=51 // pred_fallthru
        _
      // Predicated region
      $region97: #{pretrained_gpt2_forward.1} parent=51 // pred_check
        %p825 = pneg %p413
      $region98: #{pretrained_gpt2_forward.1} parent=51 // pred_check_branch
        %827 = sbr.rel (%p825) target = $region100
      $region99: #{pretrained_gpt2_forward.1} parent=51 // pred_region
        %p828 = scmp.lt.s32.totalorder %s40, 1
        %s829 = scalar_select %p828, %s40, 1
        %s830 = scalar_lea.vmem %s14, %s829
      $region100: #{pretrained_gpt2_forward.1} parent=51 // pred_fallthru
        _
      // Predicated region
      $region101: #{pretrained_gpt2_forward.1} parent=51 // pred_check
        %p831 = pneg %p439
      $region102: #{pretrained_gpt2_forward.1} parent=51 // pred_check_branch
        %833 = sbr.rel (%p831) target = $region104
      $region103: #{pretrained_gpt2_forward.1} parent=51 // pred_region
        %p834 = scmp.lt.s32.totalorder %s40, 1
        %s835 = scalar_select %p834, %s40, 1
        %s836 = scalar_lea.vmem %s15, %s835
      $region104: #{pretrained_gpt2_forward.1} parent=51 // pred_fallthru
        _
      // Predicated region
      $region105: #{pretrained_gpt2_forward.1} parent=51 // pred_check
        %p837 = pneg %p465
      $region106: #{pretrained_gpt2_forward.1} parent=51 // pred_check_branch
        %839 = sbr.rel (%p837) target = $region108
      $region107: #{pretrained_gpt2_forward.1} parent=51 // pred_region
        %p840 = scmp.lt.s32.totalorder %s40, 1
        %s841 = scalar_select %p840, %s40, 1
        %s842 = smul.addr %s841, 16
        %s843 = smul.addr %s842, 4
        %s844 = scalar_lea.vmem %s16, %s843
      $region108: #{pretrained_gpt2_forward.1} parent=51 // pred_fallthru
        _
      // Predicated region
      $region109: #{pretrained_gpt2_forward.1} parent=51 // pred_check
        %p845 = pneg %p491
      $region110: #{pretrained_gpt2_forward.1} parent=51 // pred_check_branch
        %847 = sbr.rel (%p845) target = $region112
      $region111: #{pretrained_gpt2_forward.1} parent=51 // pred_region
        %p848 = scmp.lt.s32.totalorder %s40, 1
        %s849 = scalar_select %p848, %s40, 1
        %s850 = smul.addr %s849, 2
        %s851 = scalar_lea.vmem %s17, %s850
      $region112: #{pretrained_gpt2_forward.1} parent=51 // pred_fallthru
        _
      // Predicated region
      $region113: #{pretrained_gpt2_forward.1} parent=51 // pred_check
        %p852 = pneg %p517
      $region114: #{pretrained_gpt2_forward.1} parent=51 // pred_check_branch
        %854 = sbr.rel (%p852) target = $region116
      $region115: #{pretrained_gpt2_forward.1} parent=51 // pred_region
        %p855 = scmp.lt.s32.totalorder %s40, 1
        %s856 = scalar_select %p855, %s40, 1
        %s857 = smul.addr %s856, 32
        %s858 = smul.addr %s857, 4
        %s859 = scalar_lea.vmem %s18, %s858
      $region116: #{pretrained_gpt2_forward.1} parent=51 // pred_fallthru
        _
      // Predicated region
      $region117: #{pretrained_gpt2_forward.1} parent=51 // pred_check
        %p860 = pneg %p543
      $region118: #{pretrained_gpt2_forward.1} parent=51 // pred_check_branch
        %862 = sbr.rel (%p860) target = $region120
      $region119: #{pretrained_gpt2_forward.1} parent=51 // pred_region
        %p863 = scmp.lt.s32.totalorder %s40, 1
        %s864 = scalar_select %p863, %s40, 1
        %s865 = scalar_lea.vmem %s19, %s864
      $region120: #{pretrained_gpt2_forward.1} parent=51 // pred_fallthru
        _
    $region52: #{pretrained_gpt2_forward.1} parent=5 // pred_fallthru
      _
    %p866 = scmp.le.s32.totalorder 1, %s32
    %p867 = scmp.lt.s32.totalorder %s32, 5
    %p868 = pnand %p866, %p867
    %p869 = pneg %p868
    // Predicated region
    $region121: #{pretrained_gpt2_forward.1} parent=5 // pred_check
      _
    $region122: #{pretrained_gpt2_forward.1} parent=5 // pred_check_branch
      %871 = sbr.rel (%p868) target = $region124
    $region123: #{pretrained_gpt2_forward.1} parent=5 // pred_region
      %s872 = ssub.s32 %s32, 1
      %p873 = scmp.lt.s32.totalorder %s41, 1
      %s874 = scalar_select %p873, %s41, 1
      %s875 = smul.addr %s874, 8
      %s876 = scalar_lea.vmem %s0, %s875
      %p877 = pneg %p70
      %p878 = pneg %p67
      %p879 = pneg %p91
      %p880 = pneg %p88
      %p881 = pneg %p112
      %p882 = pneg %p109
      %p883 = pneg %p133
      %p884 = pneg %p130
      %p885 = scmp.lt.s32.totalorder %s42, 1
      %s886 = scalar_select %p885, %s42, 1
      %s887 = scalar_lea.vmem %s4, %s886
      %p888 = pneg %p159
      %p889 = pneg %p156
      %p890 = scmp.lt.s32.totalorder %s42, 1
      %s891 = scalar_select %p890, %s42, 1
      %s892 = scalar_lea.vmem %s5, %s891
      %p893 = pneg %p185
      %p894 = pneg %p182
      %p895 = scmp.lt.s32.totalorder %s42, 1
      %s896 = scalar_select %p895, %s42, 1
      %s897 = smul.addr %s896, 32
      %s898 = smul.addr %s897, 4
      %s899 = scalar_lea.vmem %s6, %s898
      %p900 = pneg %p211
      %p901 = pneg %p208
      %p902 = scmp.lt.s32.totalorder %s42, 1
      %s903 = scalar_select %p902, %s42, 1
      %s904 = smul.addr %s903, 32
      %s905 = smul.addr %s904, 4
      %s906 = scalar_lea.vmem %s7, %s905
      %p907 = pneg %p237
      %p908 = pneg %p234
      %p909 = scmp.lt.s32.totalorder %s42, 1
      %s910 = scalar_select %p909, %s42, 1
      %s911 = smul.addr %s910, 32
      %s912 = smul.addr %s911, 4
      %s913 = scalar_lea.vmem %s8, %s912
      %p914 = pneg %p263
      %p915 = pneg %p260
      %p916 = scmp.lt.s32.totalorder %s42, 1
      %s917 = scalar_select %p916, %s42, 1
      %s918 = smul.addr %s917, 4
      %s919 = scalar_lea.vmem %s9, %s918
      %p920 = pneg %p289
      %p921 = pneg %p286
      %p922 = scmp.lt.s32.totalorder %s42, 1
      %s923 = scalar_select %p922, %s42, 1
      %s924 = smul.addr %s923, 4
      %s925 = scalar_lea.vmem %s10, %s924
      %p926 = pneg %p315
      %p927 = pneg %p312
      %p928 = scmp.lt.s32.totalorder %s42, 1
      %s929 = scalar_select %p928, %s42, 1
      %s930 = smul.addr %s929, 4
      %s931 = scalar_lea.vmem %s11, %s930
      %p932 = pneg %p341
      %p933 = pneg %p338
      %p934 = scmp.lt.s32.totalorder %s42, 1
      %s935 = scalar_select %p934, %s42, 1
      %s936 = smul.addr %s935, 8
      %s937 = smul.addr %s936, 4
      %s938 = scalar_lea.vmem %s12, %s937
      %p939 = pneg %p367
      %p940 = pneg %p364
      %p941 = scmp.lt.s32.totalorder %s42, 1
      %s942 = scalar_select %p941, %s42, 1
      %s943 = scalar_lea.vmem %s13, %s942
      %p944 = pneg %p393
      %p945 = pneg %p390
      %p946 = scmp.lt.s32.totalorder %s42, 1
      %s947 = scalar_select %p946, %s42, 1
      %s948 = scalar_lea.vmem %s14, %s947
      %p949 = pneg %p419
      %p950 = pneg %p416
      %p951 = scmp.lt.s32.totalorder %s42, 1
      %s952 = scalar_select %p951, %s42, 1
      %s953 = scalar_lea.vmem %s15, %s952
      %p954 = pneg %p445
      %p955 = pneg %p442
      %p956 = scmp.lt.s32.totalorder %s42, 1
      %s957 = scalar_select %p956, %s42, 1
      %s958 = smul.addr %s957, 16
      %s959 = smul.addr %s958, 4
      %s960 = scalar_lea.vmem %s16, %s959
      %p961 = pneg %p471
      %p962 = pneg %p468
      %p963 = scmp.lt.s32.totalorder %s42, 1
      %s964 = scalar_select %p963, %s42, 1
      %s965 = smul.addr %s964, 2
      %s966 = scalar_lea.vmem %s17, %s965
      %p967 = pneg %p497
      %p968 = pneg %p494
      %p969 = scmp.lt.s32.totalorder %s42, 1
      %s970 = scalar_select %p969, %s42, 1
      %s971 = smul.addr %s970, 32
      %s972 = smul.addr %s971, 4
      %s973 = scalar_lea.vmem %s18, %s972
      %p974 = pneg %p523
      %p975 = pneg %p520
      %p976 = scmp.lt.s32.totalorder %s42, 1
      %s977 = scalar_select %p976, %s42, 1
      %s978 = scalar_lea.vmem %s19, %s977
      %p979 = pneg %p549
      %p980 = pneg %p546
      %p981 = pneg %p570
      %p982 = pneg %p567
      %p983 = pneg %p591
      %p984 = pneg %p588
      %p985 = pneg %p612
      %p986 = pneg %p609
      %p987 = pneg %p633
      %p988 = pneg %p630
      %p989 = pneg %p654
      %p990 = pneg %p651
      %p991 = pneg %p675
      %p992 = pneg %p672
      %p993 = pneg %p701
      %p994 = pneg %p698
      %p995 = scmp.lt.s32.totalorder %s41, 1
      %s996 = scalar_select %p995, %s41, 1
      %s997 = smul.addr %s996, 8
      %s998 = scalar_lea.vmem %s26, %s997
      %p999 = scmp.lt.s32.totalorder %s41, 1
      %s1000 = scalar_select %p999, %s41, 1
      %s1001 = smul.addr %s1000, 8
      %s1002 = scalar_lea.vmem %s0, %s1001
      %p1003 = scmp.lt.s32.totalorder %s42, 1
      %s1004 = scalar_select %p1003, %s42, 1
      %s1005 = scalar_lea.vmem %s4, %s1004
      %p1006 = scmp.lt.s32.totalorder %s42, 1
      %s1007 = scalar_select %p1006, %s42, 1
      %s1008 = scalar_lea.vmem %s5, %s1007
      %p1009 = scmp.lt.s32.totalorder %s42, 1
      %s1010 = scalar_select %p1009, %s42, 1
      %s1011 = smul.addr %s1010, 32
      %s1012 = smul.addr %s1011, 4
      %s1013 = scalar_lea.vmem %s6, %s1012
      %p1014 = scmp.lt.s32.totalorder %s42, 1
      %s1015 = scalar_select %p1014, %s42, 1
      %s1016 = smul.addr %s1015, 32
      %s1017 = smul.addr %s1016, 4
      %s1018 = scalar_lea.vmem %s7, %s1017
      %p1019 = scmp.lt.s32.totalorder %s42, 1
      %s1020 = scalar_select %p1019, %s42, 1
      %s1021 = smul.addr %s1020, 32
      %s1022 = smul.addr %s1021, 4
      %s1023 = scalar_lea.vmem %s8, %s1022
      %p1024 = scmp.lt.s32.totalorder %s42, 1
      %s1025 = scalar_select %p1024, %s42, 1
      %s1026 = smul.addr %s1025, 4
      %s1027 = scalar_lea.vmem %s9, %s1026
      %p1028 = scmp.lt.s32.totalorder %s42, 1
      %s1029 = scalar_select %p1028, %s42, 1
      %s1030 = smul.addr %s1029, 4
      %s1031 = scalar_lea.vmem %s10, %s1030
      %p1032 = scmp.lt.s32.totalorder %s42, 1
      %s1033 = scalar_select %p1032, %s42, 1
      %s1034 = smul.addr %s1033, 4
      %s1035 = scalar_lea.vmem %s11, %s1034
      %p1036 = scmp.lt.s32.totalorder %s42, 1
      %s1037 = scalar_select %p1036, %s42, 1
      %s1038 = smul.addr %s1037, 8
      %s1039 = smul.addr %s1038, 4
      %s1040 = scalar_lea.vmem %s12, %s1039
      %p1041 = scmp.lt.s32.totalorder %s42, 1
      %s1042 = scalar_select %p1041, %s42, 1
      %s1043 = scalar_lea.vmem %s13, %s1042
      %p1044 = scmp.lt.s32.totalorder %s42, 1
      %s1045 = scalar_select %p1044, %s42, 1
      %s1046 = scalar_lea.vmem %s14, %s1045
      %p1047 = scmp.lt.s32.totalorder %s42, 1
      %s1048 = scalar_select %p1047, %s42, 1
      %s1049 = scalar_lea.vmem %s15, %s1048
      %p1050 = scmp.lt.s32.totalorder %s42, 1
      %s1051 = scalar_select %p1050, %s42, 1
      %s1052 = smul.addr %s1051, 16
      %s1053 = smul.addr %s1052, 4
      %s1054 = scalar_lea.vmem %s16, %s1053
      %p1055 = scmp.lt.s32.totalorder %s42, 1
      %s1056 = scalar_select %p1055, %s42, 1
      %s1057 = smul.addr %s1056, 2
      %s1058 = scalar_lea.vmem %s17, %s1057
      %p1059 = scmp.lt.s32.totalorder %s42, 1
      %s1060 = scalar_select %p1059, %s42, 1
      %s1061 = smul.addr %s1060, 32
      %s1062 = smul.addr %s1061, 4
      %s1063 = scalar_lea.vmem %s18, %s1062
      %p1064 = scmp.lt.s32.totalorder %s42, 1
      %s1065 = scalar_select %p1064, %s42, 1
      %s1066 = scalar_lea.vmem %s19, %s1065
      %p1067 = scmp.lt.s32.totalorder %s41, 1
      %s1068 = scalar_select %p1067, %s41, 1
      %s1069 = smul.addr %s1068, 8
      %s1070 = scalar_lea.vmem %s26, %s1069
      %p1072 = scmp.eq.s32.totalorder %s42, 0
      // Predicated region
      $region125: #{pretrained_gpt2_forward.1} parent=123 // pred_check
        %p1073 = pneg %p1072
      $region126: #{pretrained_gpt2_forward.1} parent=123 // pred_check_branch
        %1075 = sbr.rel (%p1073) target = $region128
      $region127: #{pretrained_gpt2_forward.1} parent=123 // pred_region
        %v1076 = vld [vmem:[%s1002] sm:$0xff]
        %v1077 = vld [vmem:[%s1] sm:$0xf]
        %v1078 = vld [vmem:[%s1 + $0x4] sm:$0xf]
        %v1079 = vpack.c.bf16 %v1076, %v1076
        %v1080 = vld [vmem:[%s2] sm:$0x1]
        %v1082 = vlaneseq
        %v1083 = vshrl.u32 %v1082, 7
        %v1084 = vsub.s32 0, %v1083
        %v1085 = vrot.slane %v1080, %v1084
        %v1089 = vunpack.c.l.b16 %v1077
        %v1090 = vunpack.c.l.b16 %v1078
        %v1091 = vpack.c.b16 %v1090, %v1089
        %vm1093 = vcmask 130048
        %v1095 = vsel %vm1093, %v1079, 0
        %1097 = vmatprep.subr.bf16.mxu0 0
        %1098 = vmatpush1.bf16.msra.mxu0 %v1091
        %1099 = vmatprep.subr.bf16.mxu0 0
        %1100 = vmatpush1.bf16.msra.mxu0 0
        %1101 = vmatprep.subr.bf16.mxu0 0
        %1102 = vmatpush1.bf16.msra.mxu0 0
        %1103 = vmatprep.subr.bf16.mxu0 0
        %1104 = vmatpush1.bf16.msra.mxu0 0
        %1105 = vmatprep.subr.bf16.mxu0 0
        %1106 = vmatpush1.bf16.msra.mxu0 0
        %1107 = vmatprep.subr.bf16.mxu0 0
        %1108 = vmatpush1.bf16.msra.mxu0 0
        %1109 = vmatprep.subr.bf16.mxu0 0
        %1110 = vmatpush1.bf16.msra.mxu0 0
        %1111 = vmatprep.subr.bf16.mxu0 0
        %1112 = vmatpush1.bf16.msra.mxu0 0
        %1113 = vmatprep.subr.bf16.mxu0 0
        %1114 = vmatpush1.bf16.msra.mxu0 0
        %1115 = vmatprep.subr.bf16.mxu0 0
        %1116 = vmatpush1.bf16.msra.mxu0 0
        %1117 = vmatprep.subr.bf16.mxu0 0
        %1118 = vmatpush1.bf16.msra.mxu0 0
        %1119 = vmatprep.subr.bf16.mxu0 0
        %1120 = vmatpush1.bf16.msra.mxu0 0
        %1121 = vmatprep.subr.bf16.mxu0 0
        %1122 = vmatpush1.bf16.msra.mxu0 0
        %1123 = vmatprep.subr.bf16.mxu0 0
        %1124 = vmatpush1.bf16.msra.mxu0 0
        %1125 = vmatprep.subr.bf16.mxu0 0
        %1126 = vmatpush1.bf16.msra.mxu0 0
        %1127 = vmatprep.subr.bf16.mxu0 0
        %1128 = vmatpush1.bf16.msra.mxu0 0
        %1129 = vmatprep.mubr.bf16.mxu0 0
        %1130 = vmatmul.mubr.bf16.gmra.mrb[0].mxu0 %v1095
        %v1131 = vpop.f32.mrb[0].mxu0
        %v1132 = vadd.f32 %v1085, %v1131
        %v1133 = vpop.f32.mrb[0].mxu0
        %v1134 = vpop.f32.mrb[0].mxu0
        %v1135 = vpop.f32.mrb[0].mxu0
        %1136 = vdwg.mxu0
        %v1137 = vld [vmem:[%s3] sm:$0xff]
        %v1138 = vadd.f32 %v1132, %v1137
        %vm1139 = vcmask 523264
        %1140 = vst.msk [vmem:[#allocation2] sm:$0xff] %vm1139, %v1138
      $region128: #{pretrained_gpt2_forward.1} parent=123 // pred_fallthru
        _
      %v1141 = vld [vmem:[#allocation2] sm:$0xff]
      %v1142 = vlaneseq
      %v1143 = vshrl.u32 %v1142, 7
      %v1144 = vlaneseq
      %v1145 = vand.u32 %v1144, 127
      %vm1146 = vcmp.ge.s32.totalorder %v1143, %v1145
      %v1147 = vsel %vm1146, 0.0, -1e+30
      %v1148 = vld [vmem:[%s1005] sm:$0x1]
      %v1149 = vld [vmem:[%s1008] sm:$0x1]
      %vm1150 = vcmask 523264
      %v1151 = vsel %vm1150, %v1141, 0.0
      %1152 = vadd.xlane.f32.xlu0 %v1151
      %v1153 = vpop.xlane.xlu0 %1152
      %v1154 = vrcp.pop 64.0
      %v1155 = vmul.f32 %v1153, %v1154
      %v1156 = vmul.f32 %v1141, %v1141
      %v1157 = vsel %vm1150, %v1156, 0.0
      %1158 = vadd.xlane.f32.xlu0 %v1157
      %v1159 = vpop.xlane.xlu0 %1158
      %v1160 = vmul.f32 %v1159, %v1154
      %v1161 = vmul.f32 %v1155, %v1155
      %v1162 = vsub.f32 %v1160, %v1161
      %v1163 = vsub.f32 %v1141, %v1155
      %v1164 = vadd.f32 %v1162, 1e-05
      %v1165 = vrsqrt.pop %v1164
      %v1166 = vmul.f32 %v1163, %v1165
      %v1168 = vlaneseq
      %v1169 = vshrl.u32 %v1168, 7
      %v1170 = vsub.s32 0, %v1169
      %v1171 = vrot.slane %v1148, %v1170
      %v1173 = vmul.f32 %v1166, %v1171
      %v1175 = vlaneseq
      %v1176 = vshrl.u32 %v1175, 7
      %v1177 = vsub.s32 0, %v1176
      %v1178 = vrot.slane %v1149, %v1177
      %v1180 = vadd.f32 %v1173, %v1178
      %v1181 = vld [vmem:[%s1013] sm:$0xf]
      %v1182 = vld [vmem:[%s1013 + $0x4] sm:$0xf]
      %v1183 = vld [vmem:[%s1013 + $0x8] sm:$0xf]
      %v1184 = vld [vmem:[%s1013 + $0xc] sm:$0xf]
      %v1185 = vld [vmem:[%s1013 + $0x10] sm:$0xf]
      %v1186 = vld [vmem:[%s1013 + $0x14] sm:$0xf]
      %v1187 = vld [vmem:[%s1013 + $0x18] sm:$0xf]
      %v1188 = vld [vmem:[%s1013 + $0x1c] sm:$0xf]
      %v1189 = vpack.c.bf16 %v1180, %v1180
      %v1190 = vld [vmem:[%s1027] sm:$0x1]
      %v1192 = vlaneseq
      %v1193 = vshrl.u32 %v1192, 7
      %v1194 = vsub.s32 0, %v1193
      %v1195 = vrot.slane %v1190, %v1194
      %v1205 = vunpack.c.l.b16 %v1181
      %v1206 = vunpack.c.l.b16 %v1182
      %v1207 = vunpack.c.l.b16 %v1183
      %v1208 = vunpack.c.l.b16 %v1184
      %v1209 = vunpack.c.l.b16 %v1185
      %v1210 = vunpack.c.l.b16 %v1186
      %v1211 = vunpack.c.l.b16 %v1187
      %v1212 = vunpack.c.l.b16 %v1188
      %v1213 = vpack.c.b16 %v1206, %v1205
      %v1214 = vpack.c.b16 %v1208, %v1207
      %v1215 = vpack.c.b16 %v1210, %v1209
      %v1216 = vpack.c.b16 %v1212, %v1211
      %v1222 = vsel %vm1150, %v1189, 0
      %1224 = vmatprep.subr.bf16.mxu0 0
      %1225 = vmatpush1.bf16.msra.mxu0 %v1213
      %1226 = vmatprep.subr.bf16.mxu0 0
      %1227 = vmatpush1.bf16.msra.mxu0 %v1214
      %1228 = vmatprep.subr.bf16.mxu0 0
      %1229 = vmatpush1.bf16.msra.mxu0 %v1215
      %1230 = vmatprep.subr.bf16.mxu0 0
      %1231 = vmatpush1.bf16.msra.mxu0 %v1216
      %1232 = vmatprep.subr.bf16.mxu0 0
      %1233 = vmatpush1.bf16.msra.mxu0 0
      %1234 = vmatprep.subr.bf16.mxu0 0
      %1235 = vmatpush1.bf16.msra.mxu0 0
      %1236 = vmatprep.subr.bf16.mxu0 0
      %1237 = vmatpush1.bf16.msra.mxu0 0
      %1238 = vmatprep.subr.bf16.mxu0 0
      %1239 = vmatpush1.bf16.msra.mxu0 0
      %1240 = vmatprep.subr.bf16.mxu0 0
      %1241 = vmatpush1.bf16.msra.mxu0 0
      %1242 = vmatprep.subr.bf16.mxu0 0
      %1243 = vmatpush1.bf16.msra.mxu0 0
      %1244 = vmatprep.subr.bf16.mxu0 0
      %1245 = vmatpush1.bf16.msra.mxu0 0
      %1246 = vmatprep.subr.bf16.mxu0 0
      %1247 = vmatpush1.bf16.msra.mxu0 0
      %1248 = vmatprep.subr.bf16.mxu0 0
      %1249 = vmatpush1.bf16.msra.mxu0 0
      %1250 = vmatprep.subr.bf16.mxu0 0
      %1251 = vmatpush1.bf16.msra.mxu0 0
      %1252 = vmatprep.subr.bf16.mxu0 0
      %1253 = vmatpush1.bf16.msra.mxu0 0
      %1254 = vmatprep.subr.bf16.mxu0 0
      %1255 = vmatpush1.bf16.msra.mxu0 0
      %1256 = vmatprep.mubr.bf16.mxu0 0
      %1257 = vmatmul.mubr.bf16.gmra.mrb[0].mxu0 %v1222
      %v1258 = vpop.f32.mrb[0].mxu0
      %v1259 = vadd.f32 %v1195, %v1258
      %v1260 = vpop.f32.mrb[0].mxu0
      %v1261 = vpop.f32.mrb[0].mxu0
      %v1262 = vpop.f32.mrb[0].mxu0
      %1263 = vdwg.mxu0
      %v1264 = vld [vmem:[%s1018] sm:$0xf]
      %v1265 = vld [vmem:[%s1018 + $0x4] sm:$0xf]
      %v1266 = vld [vmem:[%s1018 + $0x8] sm:$0xf]
      %v1267 = vld [vmem:[%s1018 + $0xc] sm:$0xf]
      %v1268 = vld [vmem:[%s1018 + $0x10] sm:$0xf]
      %v1269 = vld [vmem:[%s1018 + $0x14] sm:$0xf]
      %v1270 = vld [vmem:[%s1018 + $0x18] sm:$0xf]
      %v1271 = vld [vmem:[%s1018 + $0x1c] sm:$0xf]
      %v1272 = vld [vmem:[%s1031] sm:$0x1]
      %v1274 = vlaneseq
      %v1275 = vshrl.u32 %v1274, 7
      %v1276 = vsub.s32 0, %v1275
      %v1277 = vrot.slane %v1272, %v1276
      %v1287 = vunpack.c.l.b16 %v1264
      %v1288 = vunpack.c.l.b16 %v1265
      %v1289 = vunpack.c.l.b16 %v1266
      %v1290 = vunpack.c.l.b16 %v1267
      %v1291 = vunpack.c.l.b16 %v1268
      %v1292 = vunpack.c.l.b16 %v1269
      %v1293 = vunpack.c.l.b16 %v1270
      %v1294 = vunpack.c.l.b16 %v1271
      %v1295 = vpack.c.b16 %v1288, %v1287
      %v1296 = vpack.c.b16 %v1290, %v1289
      %v1297 = vpack.c.b16 %v1292, %v1291
      %v1298 = vpack.c.b16 %v1294, %v1293
      %1303 = vmatprep.subr.bf16.mxu0 0
      %1304 = vmatpush1.bf16.msra.mxu0 %v1295
      %1305 = vmatprep.subr.bf16.mxu0 0
      %1306 = vmatpush1.bf16.msra.mxu0 %v1296
      %1307 = vmatprep.subr.bf16.mxu0 0
      %1308 = vmatpush1.bf16.msra.mxu0 %v1297
      %1309 = vmatprep.subr.bf16.mxu0 0
      %1310 = vmatpush1.bf16.msra.mxu0 %v1298
      %1311 = vmatprep.subr.bf16.mxu0 0
      %1312 = vmatpush1.bf16.msra.mxu0 0
      %1313 = vmatprep.subr.bf16.mxu0 0
      %1314 = vmatpush1.bf16.msra.mxu0 0
      %1315 = vmatprep.subr.bf16.mxu0 0
      %1316 = vmatpush1.bf16.msra.mxu0 0
      %1317 = vmatprep.subr.bf16.mxu0 0
      %1318 = vmatpush1.bf16.msra.mxu0 0
      %1319 = vmatprep.subr.bf16.mxu0 0
      %1320 = vmatpush1.bf16.msra.mxu0 0
      %1321 = vmatprep.subr.bf16.mxu0 0
      %1322 = vmatpush1.bf16.msra.mxu0 0
      %1323 = vmatprep.subr.bf16.mxu0 0
      %1324 = vmatpush1.bf16.msra.mxu0 0
      %1325 = vmatprep.subr.bf16.mxu0 0
      %1326 = vmatpush1.bf16.msra.mxu0 0
      %1327 = vmatprep.subr.bf16.mxu0 0
      %1328 = vmatpush1.bf16.msra.mxu0 0
      %1329 = vmatprep.subr.bf16.mxu0 0
      %1330 = vmatpush1.bf16.msra.mxu0 0
      %1331 = vmatprep.subr.bf16.mxu0 0
      %1332 = vmatpush1.bf16.msra.mxu0 0
      %1333 = vmatprep.subr.bf16.mxu0 0
      %1334 = vmatpush1.bf16.msra.mxu0 0
      %1335 = vmatprep.mubr.bf16.mxu0 0
      %1336 = vmatmul.mubr.bf16.gmra.mrb[0].mxu0 %v1222
      %v1337 = vpop.f32.mrb[0].mxu0
      %v1338 = vadd.f32 %v1277, %v1337
      %v1339 = vpop.f32.mrb[0].mxu0
      %v1340 = vpop.f32.mrb[0].mxu0
      %v1341 = vpop.f32.mrb[0].mxu0
      %1342 = vdwg.mxu0
      %v1343 = vld [vmem:[%s1023] sm:$0xf]
      %v1344 = vld [vmem:[%s1023 + $0x4] sm:$0xf]
      %v1345 = vld [vmem:[%s1023 + $0x8] sm:$0xf]
      %v1346 = vld [vmem:[%s1023 + $0xc] sm:$0xf]
      %v1347 = vld [vmem:[%s1023 + $0x10] sm:$0xf]
      %v1348 = vld [vmem:[%s1023 + $0x14] sm:$0xf]
      %v1349 = vld [vmem:[%s1023 + $0x18] sm:$0xf]
      %v1350 = vld [vmem:[%s1023 + $0x1c] sm:$0xf]
      %v1351 = vld [vmem:[%s1035] sm:$0x1]
      %v1353 = vlaneseq
      %v1354 = vshrl.u32 %v1353, 7
      %v1355 = vsub.s32 0, %v1354
      %v1356 = vrot.slane %v1351, %v1355
      %v1366 = vunpack.c.l.b16 %v1343
      %v1367 = vunpack.c.l.b16 %v1344
      %v1368 = vunpack.c.l.b16 %v1345
      %v1369 = vunpack.c.l.b16 %v1346
      %v1370 = vunpack.c.l.b16 %v1347
      %v1371 = vunpack.c.l.b16 %v1348
      %v1372 = vunpack.c.l.b16 %v1349
      %v1373 = vunpack.c.l.b16 %v1350
      %v1374 = vpack.c.b16 %v1367, %v1366
      %v1375 = vpack.c.b16 %v1369, %v1368
      %v1376 = vpack.c.b16 %v1371, %v1370
      %v1377 = vpack.c.b16 %v1373, %v1372
      %1382 = vmatprep.subr.bf16.mxu0 0
      %1383 = vmatpush1.bf16.msra.mxu0 %v1374
      %1384 = vmatprep.subr.bf16.mxu0 0
      %1385 = vmatpush1.bf16.msra.mxu0 %v1375
      %1386 = vmatprep.subr.bf16.mxu0 0
      %1387 = vmatpush1.bf16.msra.mxu0 %v1376
      %1388 = vmatprep.subr.bf16.mxu0 0
      %1389 = vmatpush1.bf16.msra.mxu0 %v1377
      %1390 = vmatprep.subr.bf16.mxu0 0
      %1391 = vmatpush1.bf16.msra.mxu0 0
      %1392 = vmatprep.subr.bf16.mxu0 0
      %1393 = vmatpush1.bf16.msra.mxu0 0
      %1394 = vmatprep.subr.bf16.mxu0 0
      %1395 = vmatpush1.bf16.msra.mxu0 0
      %1396 = vmatprep.subr.bf16.mxu0 0
      %1397 = vmatpush1.bf16.msra.mxu0 0
      %1398 = vmatprep.subr.bf16.mxu0 0
      %1399 = vmatpush1.bf16.msra.mxu0 0
      %1400 = vmatprep.subr.bf16.mxu0 0
      %1401 = vmatpush1.bf16.msra.mxu0 0
      %1402 = vmatprep.subr.bf16.mxu0 0
      %1403 = vmatpush1.bf16.msra.mxu0 0
      %1404 = vmatprep.subr.bf16.mxu0 0
      %1405 = vmatpush1.bf16.msra.mxu0 0
      %1406 = vmatprep.subr.bf16.mxu0 0
      %1407 = vmatpush1.bf16.msra.mxu0 0
      %1408 = vmatprep.subr.bf16.mxu0 0
      %1409 = vmatpush1.bf16.msra.mxu0 0
      %1410 = vmatprep.subr.bf16.mxu0 0
      %1411 = vmatpush1.bf16.msra.mxu0 0
      %1412 = vmatprep.subr.bf16.mxu0 0
      %1413 = vmatpush1.bf16.msra.mxu0 0
      %1414 = vmatprep.mubr.bf16.mxu0 0
      %1415 = vmatmul.mubr.bf16.gmra.mrb[0].mxu0 %v1222
      %v1416 = vpop.f32.mrb[0].mxu0
      %v1417 = vadd.f32 %v1356, %v1416
      %v1418 = vpop.f32.mrb[0].mxu0
      %v1419 = vpop.f32.mrb[0].mxu0
      %v1420 = vpop.f32.mrb[0].mxu0
      %1421 = vdwg.mxu0
      %v1422 = vpack.c.bf16 %v1259, %v1259
      %v1423 = vpack.c.bf16 %v1338, %v1338
      %vm1424 = vcmask 130048
      %v1426 = vsel %vm1424, %v1422, 0
      %v1429 = vsel %vm1424, %v1423, 0
      %1431 = vmatprep.subr.bf16.mxu0 0
      %1432 = vmatpush1.bf16.xpose.msra.mxu0 %v1429
      %1433 = vmatprep.subr.bf16.mxu0 0
      %1434 = vmatpush1.bf16.xpose.msra.mxu0 0
      %1435 = vmatprep.subr.bf16.mxu0 0
      %1436 = vmatpush1.bf16.xpose.msra.mxu0 0
      %1437 = vmatprep.subr.bf16.mxu0 0
      %1438 = vmatpush1.bf16.xpose.msra.mxu0 0
      %1439 = vmatprep.subr.bf16.mxu0 0
      %1440 = vmatpush1.bf16.xpose.msra.mxu0 0
      %1441 = vmatprep.subr.bf16.mxu0 0
      %1442 = vmatpush1.bf16.xpose.msra.mxu0 0
      %1443 = vmatprep.subr.bf16.mxu0 0
      %1444 = vmatpush1.bf16.xpose.msra.mxu0 0
      %1445 = vmatprep.subr.bf16.mxu0 0
      %1446 = vmatpush1.bf16.xpose.msra.mxu0 0
      %1447 = vmatprep.subr.bf16.mxu0 0
      %1448 = vmatpush1.bf16.xpose.msra.mxu0 0
      %1449 = vmatprep.subr.bf16.mxu0 0
      %1450 = vmatpush1.bf16.xpose.msra.mxu0 0
      %1451 = vmatprep.subr.bf16.mxu0 0
      %1452 = vmatpush1.bf16.xpose.msra.mxu0 0
      %1453 = vmatprep.subr.bf16.mxu0 0
      %1454 = vmatpush1.bf16.xpose.msra.mxu0 0
      %1455 = vmatprep.subr.bf16.mxu0 0
      %1456 = vmatpush1.bf16.xpose.msra.mxu0 0
      %1457 = vmatprep.subr.bf16.mxu0 0
      %1458 = vmatpush1.bf16.xpose.msra.mxu0 0
      %1459 = vmatprep.subr.bf16.mxu0 0
      %1460 = vmatpush1.bf16.xpose.msra.mxu0 0
      %1461 = vmatprep.subr.bf16.mxu0 0
      %1462 = vmatpush1.bf16.xpose.msra.mxu0 0
      %1463 = vmatprep.mubr.bf16.mxu0 0
      %1464 = vmatmul.mubr.bf16.gmra.mrb[0].mxu0 %v1426
      %v1465 = vpop.f32.mrb[0].mxu0
      %v1466 = vadd.f32 0.0, %v1465
      %v1467 = vpop.f32.mrb[0].mxu0
      %v1468 = vpop.f32.mrb[0].mxu0
      %v1469 = vpop.f32.mrb[0].mxu0
      %1470 = vdwg.mxu0
      %v1471 = vmul.f32 %v1466, 0.25
      %v1472 = vadd.f32 %v1471, %v1147
      %vm1473 = vcmask 64512
      %v1474 = vsel %vm1473, %v1472, -inf
      %1475 = vmax.xlane.f32.xlu0 %v1474
      %v1476 = vpop.xlane.xlu0 %1475
      %v1477 = vsub.f32 %v1472, %v1476
      %v1478 = vmul.f32 %v1477, 1.442695
      %v1479 = vpow.pop %v1478
      %v1480 = vsel %vm1473, %v1479, 0.0
      %1481 = vadd.xlane.f32.xlu0 %v1480
      %v1482 = vpop.xlane.xlu0 %1481
      %v1483 = vrcp.pop %v1482
      %v1484 = vmul.f32 %v1479, %v1483
      %v1485 = vpack.c.bf16 %v1484, %v1484
      %v1486 = vpack.c.bf16 %v1417, %v1417
      %v1488 = vsel %vm1473, %v1485, 0
      %vm1490 = vcmask 1043456
      %v1492 = vsel %vm1490, %v1486, 0
      %1494 = vmatprep.subr.bf16.mxu0 0
      %1495 = vmatpush1.bf16.msra.mxu0 %v1492
      %1496 = vmatprep.subr.bf16.mxu0 0
      %1497 = vmatpush1.bf16.msra.mxu0 0
      %1498 = vmatprep.subr.bf16.mxu0 0
      %1499 = vmatpush1.bf16.msra.mxu0 0
      %1500 = vmatprep.subr.bf16.mxu0 0
      %1501 = vmatpush1.bf16.msra.mxu0 0
      %1502 = vmatprep.subr.bf16.mxu0 0
      %1503 = vmatpush1.bf16.msra.mxu0 0
      %1504 = vmatprep.subr.bf16.mxu0 0
      %1505 = vmatpush1.bf16.msra.mxu0 0
      %1506 = vmatprep.subr.bf16.mxu0 0
      %1507 = vmatpush1.bf16.msra.mxu0 0
      %1508 = vmatprep.subr.bf16.mxu0 0
      %1509 = vmatpush1.bf16.msra.mxu0 0
      %1510 = vmatprep.subr.bf16.mxu0 0
      %1511 = vmatpush1.bf16.msra.mxu0 0
      %1512 = vmatprep.subr.bf16.mxu0 0
      %1513 = vmatpush1.bf16.msra.mxu0 0
      %1514 = vmatprep.subr.bf16.mxu0 0
      %1515 = vmatpush1.bf16.msra.mxu0 0
      %1516 = vmatprep.subr.bf16.mxu0 0
      %1517 = vmatpush1.bf16.msra.mxu0 0
      %1518 = vmatprep.subr.bf16.mxu0 0
      %1519 = vmatpush1.bf16.msra.mxu0 0
      %1520 = vmatprep.subr.bf16.mxu0 0
      %1521 = vmatpush1.bf16.msra.mxu0 0
      %1522 = vmatprep.subr.bf16.mxu0 0
      %1523 = vmatpush1.bf16.msra.mxu0 0
      %1524 = vmatprep.subr.bf16.mxu0 0
      %1525 = vmatpush1.bf16.msra.mxu0 0
      %1526 = vmatprep.mubr.bf16.mxu0 0
      %1527 = vmatmul.mubr.bf16.gmra.mrb[0].mxu0 %v1488
      %v1528 = vpop.f32.mrb[0].mxu0
      %v1529 = vadd.f32 0.0, %v1528
      %v1530 = vpop.f32.mrb[0].mxu0
      %v1531 = vpop.f32.mrb[0].mxu0
      %v1532 = vpop.f32.mrb[0].mxu0
      %1533 = vdwg.mxu0
      %v1534 = vld [vmem:[%s1040] sm:$0xf]
      %v1535 = vld [vmem:[%s1040 + $0x4] sm:$0xf]
      %v1536 = vpack.c.bf16 %v1529, %v1529
      %s1537 = scalar_lea.vmem %s1013, 32
      %v1538 = vld [vmem:[%s1537] sm:$0xf]
      %v1539 = vld [vmem:[%s1537 + $0x4] sm:$0xf]
      %v1540 = vld [vmem:[%s1537 + $0x8] sm:$0xf]
      %v1541 = vld [vmem:[%s1537 + $0xc] sm:$0xf]
      %v1542 = vld [vmem:[%s1537 + $0x10] sm:$0xf]
      %v1543 = vld [vmem:[%s1537 + $0x14] sm:$0xf]
      %v1544 = vld [vmem:[%s1537 + $0x18] sm:$0xf]
      %v1545 = vld [vmem:[%s1537 + $0x1c] sm:$0xf]
      %s1546 = scalar_lea.vmem %s1027, 1
      %v1547 = vld [vmem:[%s1546] sm:$0x1]
      %v1549 = vlaneseq
      %v1550 = vshrl.u32 %v1549, 7
      %v1551 = vsub.s32 0, %v1550
      %v1552 = vrot.slane %v1547, %v1551
      %v1562 = vunpack.c.l.b16 %v1538
      %v1563 = vunpack.c.l.b16 %v1539
      %v1564 = vunpack.c.l.b16 %v1540
      %v1565 = vunpack.c.l.b16 %v1541
      %v1566 = vunpack.c.l.b16 %v1542
      %v1567 = vunpack.c.l.b16 %v1543
      %v1568 = vunpack.c.l.b16 %v1544
      %v1569 = vunpack.c.l.b16 %v1545
      %v1570 = vpack.c.b16 %v1563, %v1562
      %v1571 = vpack.c.b16 %v1565, %v1564
      %v1572 = vpack.c.b16 %v1567, %v1566
      %v1573 = vpack.c.b16 %v1569, %v1568
      %1578 = vmatprep.subr.bf16.mxu0 0
      %1579 = vmatpush1.bf16.msra.mxu0 %v1570
      %1580 = vmatprep.subr.bf16.mxu0 0
      %1581 = vmatpush1.bf16.msra.mxu0 %v1571
      %1582 = vmatprep.subr.bf16.mxu0 0
      %1583 = vmatpush1.bf16.msra.mxu0 %v1572
      %1584 = vmatprep.subr.bf16.mxu0 0
      %1585 = vmatpush1.bf16.msra.mxu0 %v1573
      %1586 = vmatprep.subr.bf16.mxu0 0
      %1587 = vmatpush1.bf16.msra.mxu0 0
      %1588 = vmatprep.subr.bf16.mxu0 0
      %1589 = vmatpush1.bf16.msra.mxu0 0
      %1590 = vmatprep.subr.bf16.mxu0 0
      %1591 = vmatpush1.bf16.msra.mxu0 0
      %1592 = vmatprep.subr.bf16.mxu0 0
      %1593 = vmatpush1.bf16.msra.mxu0 0
      %1594 = vmatprep.subr.bf16.mxu0 0
      %1595 = vmatpush1.bf16.msra.mxu0 0
      %1596 = vmatprep.subr.bf16.mxu0 0
      %1597 = vmatpush1.bf16.msra.mxu0 0
      %1598 = vmatprep.subr.bf16.mxu0 0
      %1599 = vmatpush1.bf16.msra.mxu0 0
      %1600 = vmatprep.subr.bf16.mxu0 0
      %1601 = vmatpush1.bf16.msra.mxu0 0
      %1602 = vmatprep.subr.bf16.mxu0 0
      %1603 = vmatpush1.bf16.msra.mxu0 0
      %1604 = vmatprep.subr.bf16.mxu0 0
      %1605 = vmatpush1.bf16.msra.mxu0 0
      %1606 = vmatprep.subr.bf16.mxu0 0
      %1607 = vmatpush1.bf16.msra.mxu0 0
      %1608 = vmatprep.subr.bf16.mxu0 0
      %1609 = vmatpush1.bf16.msra.mxu0 0
      %1610 = vmatprep.mubr.bf16.mxu0 0
      %1611 = vmatmul.mubr.bf16.gmra.mrb[0].mxu0 %v1222
      %v1612 = vpop.f32.mrb[0].mxu0
      %v1613 = vadd.f32 %v1552, %v1612
      %v1614 = vpop.f32.mrb[0].mxu0
      %v1615 = vpop.f32.mrb[0].mxu0
      %v1616 = vpop.f32.mrb[0].mxu0
      %1617 = vdwg.mxu0
      %s1618 = scalar_lea.vmem %s1018, 32
      %v1619 = vld [vmem:[%s1618] sm:$0xf]
      %v1620 = vld [vmem:[%s1618 + $0x4] sm:$0xf]
      %v1621 = vld [vmem:[%s1618 + $0x8] sm:$0xf]
      %v1622 = vld [vmem:[%s1618 + $0xc] sm:$0xf]
      %v1623 = vld [vmem:[%s1618 + $0x10] sm:$0xf]
      %v1624 = vld [vmem:[%s1618 + $0x14] sm:$0xf]
      %v1625 = vld [vmem:[%s1618 + $0x18] sm:$0xf]
      %v1626 = vld [vmem:[%s1618 + $0x1c] sm:$0xf]
      %s1627 = scalar_lea.vmem %s1031, 1
      %v1628 = vld [vmem:[%s1627] sm:$0x1]
      %v1630 = vlaneseq
      %v1631 = vshrl.u32 %v1630, 7
      %v1632 = vsub.s32 0, %v1631
      %v1633 = vrot.slane %v1628, %v1632
      %v1643 = vunpack.c.l.b16 %v1619
      %v1644 = vunpack.c.l.b16 %v1620
      %v1645 = vunpack.c.l.b16 %v1621
      %v1646 = vunpack.c.l.b16 %v1622
      %v1647 = vunpack.c.l.b16 %v1623
      %v1648 = vunpack.c.l.b16 %v1624
      %v1649 = vunpack.c.l.b16 %v1625
      %v1650 = vunpack.c.l.b16 %v1626
      %v1651 = vpack.c.b16 %v1644, %v1643
      %v1652 = vpack.c.b16 %v1646, %v1645
      %v1653 = vpack.c.b16 %v1648, %v1647
      %v1654 = vpack.c.b16 %v1650, %v1649
      %1659 = vmatprep.subr.bf16.mxu0 0
      %1660 = vmatpush1.bf16.msra.mxu0 %v1651
      %1661 = vmatprep.subr.bf16.mxu0 0
      %1662 = vmatpush1.bf16.msra.mxu0 %v1652
      %1663 = vmatprep.subr.bf16.mxu0 0
      %1664 = vmatpush1.bf16.msra.mxu0 %v1653
      %1665 = vmatprep.subr.bf16.mxu0 0
      %1666 = vmatpush1.bf16.msra.mxu0 %v1654
      %1667 = vmatprep.subr.bf16.mxu0 0
      %1668 = vmatpush1.bf16.msra.mxu0 0
      %1669 = vmatprep.subr.bf16.mxu0 0
      %1670 = vmatpush1.bf16.msra.mxu0 0
      %1671 = vmatprep.subr.bf16.mxu0 0
      %1672 = vmatpush1.bf16.msra.mxu0 0
      %1673 = vmatprep.subr.bf16.mxu0 0
      %1674 = vmatpush1.bf16.msra.mxu0 0
      %1675 = vmatprep.subr.bf16.mxu0 0
      %1676 = vmatpush1.bf16.msra.mxu0 0
      %1677 = vmatprep.subr.bf16.mxu0 0
      %1678 = vmatpush1.bf16.msra.mxu0 0
      %1679 = vmatprep.subr.bf16.mxu0 0
      %1680 = vmatpush1.bf16.msra.mxu0 0
      %1681 = vmatprep.subr.bf16.mxu0 0
      %1682 = vmatpush1.bf16.msra.mxu0 0
      %1683 = vmatprep.subr.bf16.mxu0 0
      %1684 = vmatpush1.bf16.msra.mxu0 0
      %1685 = vmatprep.subr.bf16.mxu0 0
      %1686 = vmatpush1.bf16.msra.mxu0 0
      %1687 = vmatprep.subr.bf16.mxu0 0
      %1688 = vmatpush1.bf16.msra.mxu0 0
      %1689 = vmatprep.subr.bf16.mxu0 0
      %1690 = vmatpush1.bf16.msra.mxu0 0
      %1691 = vmatprep.mubr.bf16.mxu0 0
      %1692 = vmatmul.mubr.bf16.gmra.mrb[0].mxu0 %v1222
      %v1693 = vpop.f32.mrb[0].mxu0
      %v1694 = vadd.f32 %v1633, %v1693
      %v1695 = vpop.f32.mrb[0].mxu0
      %v1696 = vpop.f32.mrb[0].mxu0
      %v1697 = vpop.f32.mrb[0].mxu0
      %1698 = vdwg.mxu0
      %s1699 = scalar_lea.vmem %s1023, 32
      %v1700 = vld [vmem:[%s1699] sm:$0xf]
      %v1701 = vld [vmem:[%s1699 + $0x4] sm:$0xf]
      %v1702 = vld [vmem:[%s1699 + $0x8] sm:$0xf]
      %v1703 = vld [vmem:[%s1699 + $0xc] sm:$0xf]
      %v1704 = vld [vmem:[%s1699 + $0x10] sm:$0xf]
      %v1705 = vld [vmem:[%s1699 + $0x14] sm:$0xf]
      %v1706 = vld [vmem:[%s1699 + $0x18] sm:$0xf]
      %v1707 = vld [vmem:[%s1699 + $0x1c] sm:$0xf]
      %s1708 = scalar_lea.vmem %s1035, 1
      %v1709 = vld [vmem:[%s1708] sm:$0x1]
      %v1711 = vlaneseq
      %v1712 = vshrl.u32 %v1711, 7
      %v1713 = vsub.s32 0, %v1712
      %v1714 = vrot.slane %v1709, %v1713
      %v1724 = vunpack.c.l.b16 %v1700
      %v1725 = vunpack.c.l.b16 %v1701
      %v1726 = vunpack.c.l.b16 %v1702
      %v1727 = vunpack.c.l.b16 %v1703
      %v1728 = vunpack.c.l.b16 %v1704
      %v1729 = vunpack.c.l.b16 %v1705
      %v1730 = vunpack.c.l.b16 %v1706
      %v1731 = vunpack.c.l.b16 %v1707
      %v1732 = vpack.c.b16 %v1725, %v1724
      %v1733 = vpack.c.b16 %v1727, %v1726
      %v1734 = vpack.c.b16 %v1729, %v1728
      %v1735 = vpack.c.b16 %v1731, %v1730
      %1740 = vmatprep.subr.bf16.mxu0 0
      %1741 = vmatpush1.bf16.msra.mxu0 %v1732
      %1742 = vmatprep.subr.bf16.mxu0 0
      %1743 = vmatpush1.bf16.msra.mxu0 %v1733
      %1744 = vmatprep.subr.bf16.mxu0 0
      %1745 = vmatpush1.bf16.msra.mxu0 %v1734
      %1746 = vmatprep.subr.bf16.mxu0 0
      %1747 = vmatpush1.bf16.msra.mxu0 %v1735
      %1748 = vmatprep.subr.bf16.mxu0 0
      %1749 = vmatpush1.bf16.msra.mxu0 0
      %1750 = vmatprep.subr.bf16.mxu0 0
      %1751 = vmatpush1.bf16.msra.mxu0 0
      %1752 = vmatprep.subr.bf16.mxu0 0
      %1753 = vmatpush1.bf16.msra.mxu0 0
      %1754 = vmatprep.subr.bf16.mxu0 0
      %1755 = vmatpush1.bf16.msra.mxu0 0
      %1756 = vmatprep.subr.bf16.mxu0 0
      %1757 = vmatpush1.bf16.msra.mxu0 0
      %1758 = vmatprep.subr.bf16.mxu0 0
      %1759 = vmatpush1.bf16.msra.mxu0 0
      %1760 = vmatprep.subr.bf16.mxu0 0
      %1761 = vmatpush1.bf16.msra.mxu0 0
      %1762 = vmatprep.subr.bf16.mxu0 0
      %1763 = vmatpush1.bf16.msra.mxu0 0
      %1764 = vmatprep.subr.bf16.mxu0 0
      %1765 = vmatpush1.bf16.msra.mxu0 0
      %1766 = vmatprep.subr.bf16.mxu0 0
      %1767 = vmatpush1.bf16.msra.mxu0 0
      %1768 = vmatprep.subr.bf16.mxu0 0
      %1769 = vmatpush1.bf16.msra.mxu0 0
      %1770 = vmatprep.subr.bf16.mxu0 0
      %1771 = vmatpush1.bf16.msra.mxu0 0
      %1772 = vmatprep.mubr.bf16.mxu0 0
      %1773 = vmatmul.mubr.bf16.gmra.mrb[0].mxu0 %v1222
      %v1774 = vpop.f32.mrb[0].mxu0
      %v1775 = vadd.f32 %v1714, %v1774
      %v1776 = vpop.f32.mrb[0].mxu0
      %v1777 = vpop.f32.mrb[0].mxu0
      %v1778 = vpop.f32.mrb[0].mxu0
      %1779 = vdwg.mxu0
      %v1780 = vpack.c.bf16 %v1613, %v1613
      %v1781 = vpack.c.bf16 %v1694, %v1694
      %v1783 = vsel %vm1424, %v1780, 0
      %v1786 = vsel %vm1424, %v1781, 0
      %1788 = vmatprep.subr.bf16.mxu0 0
      %1789 = vmatpush1.bf16.xpose.msra.mxu0 %v1786
      %1790 = vmatprep.subr.bf16.mxu0 0
      %1791 = vmatpush1.bf16.xpose.msra.mxu0 0
      %1792 = vmatprep.subr.bf16.mxu0 0
      %1793 = vmatpush1.bf16.xpose.msra.mxu0 0
      %1794 = vmatprep.subr.bf16.mxu0 0
      %1795 = vmatpush1.bf16.xpose.msra.mxu0 0
      %1796 = vmatprep.subr.bf16.mxu0 0
      %1797 = vmatpush1.bf16.xpose.msra.mxu0 0
      %1798 = vmatprep.subr.bf16.mxu0 0
      %1799 = vmatpush1.bf16.xpose.msra.mxu0 0
      %1800 = vmatprep.subr.bf16.mxu0 0
      %1801 = vmatpush1.bf16.xpose.msra.mxu0 0
      %1802 = vmatprep.subr.bf16.mxu0 0
      %1803 = vmatpush1.bf16.xpose.msra.mxu0 0
      %1804 = vmatprep.subr.bf16.mxu0 0
      %1805 = vmatpush1.bf16.xpose.msra.mxu0 0
      %1806 = vmatprep.subr.bf16.mxu0 0
      %1807 = vmatpush1.bf16.xpose.msra.mxu0 0
      %1808 = vmatprep.subr.bf16.mxu0 0
      %1809 = vmatpush1.bf16.xpose.msra.mxu0 0
      %1810 = vmatprep.subr.bf16.mxu0 0
      %1811 = vmatpush1.bf16.xpose.msra.mxu0 0
      %1812 = vmatprep.subr.bf16.mxu0 0
      %1813 = vmatpush1.bf16.xpose.msra.mxu0 0
      %1814 = vmatprep.subr.bf16.mxu0 0
      %1815 = vmatpush1.bf16.xpose.msra.mxu0 0
      %1816 = vmatprep.subr.bf16.mxu0 0
      %1817 = vmatpush1.bf16.xpose.msra.mxu0 0
      %1818 = vmatprep.subr.bf16.mxu0 0
      %1819 = vmatpush1.bf16.xpose.msra.mxu0 0
      %1820 = vmatprep.mubr.bf16.mxu0 0
      %1821 = vmatmul.mubr.bf16.gmra.mrb[0].mxu0 %v1783
      %v1822 = vpop.f32.mrb[0].mxu0
      %v1823 = vadd.f32 0.0, %v1822
      %v1824 = vpop.f32.mrb[0].mxu0
      %v1825 = vpop.f32.mrb[0].mxu0
      %v1826 = vpop.f32.mrb[0].mxu0
      %1827 = vdwg.mxu0
      %v1828 = vmul.f32 %v1823, 0.25
      %v1829 = vadd.f32 %v1828, %v1147
      %v1830 = vsel %vm1473, %v1829, -inf
      %1831 = vmax.xlane.f32.xlu0 %v1830
      %v1832 = vpop.xlane.xlu0 %1831
      %v1833 = vsub.f32 %v1829, %v1832
      %v1834 = vmul.f32 %v1833, 1.442695
      %v1835 = vpow.pop %v1834
      %v1836 = vsel %vm1473, %v1835, 0.0
      %1837 = vadd.xlane.f32.xlu0 %v1836
      %v1838 = vpop.xlane.xlu0 %1837
      %v1839 = vrcp.pop %v1838
      %v1840 = vmul.f32 %v1835, %v1839
      %v1841 = vpack.c.bf16 %v1840, %v1840
      %v1842 = vpack.c.bf16 %v1775, %v1775
      %v1844 = vsel %vm1473, %v1841, 0
      %v1847 = vsel %vm1490, %v1842, 0
      %1849 = vmatprep.subr.bf16.mxu0 0
      %1850 = vmatpush1.bf16.msra.mxu0 %v1847
      %1851 = vmatprep.subr.bf16.mxu0 0
      %1852 = vmatpush1.bf16.msra.mxu0 0
      %1853 = vmatprep.subr.bf16.mxu0 0
      %1854 = vmatpush1.bf16.msra.mxu0 0
      %1855 = vmatprep.subr.bf16.mxu0 0
      %1856 = vmatpush1.bf16.msra.mxu0 0
      %1857 = vmatprep.subr.bf16.mxu0 0
      %1858 = vmatpush1.bf16.msra.mxu0 0
      %1859 = vmatprep.subr.bf16.mxu0 0
      %1860 = vmatpush1.bf16.msra.mxu0 0
      %1861 = vmatprep.subr.bf16.mxu0 0
      %1862 = vmatpush1.bf16.msra.mxu0 0
      %1863 = vmatprep.subr.bf16.mxu0 0
      %1864 = vmatpush1.bf16.msra.mxu0 0
      %1865 = vmatprep.subr.bf16.mxu0 0
      %1866 = vmatpush1.bf16.msra.mxu0 0
      %1867 = vmatprep.subr.bf16.mxu0 0
      %1868 = vmatpush1.bf16.msra.mxu0 0
      %1869 = vmatprep.subr.bf16.mxu0 0
      %1870 = vmatpush1.bf16.msra.mxu0 0
      %1871 = vmatprep.subr.bf16.mxu0 0
      %1872 = vmatpush1.bf16.msra.mxu0 0
      %1873 = vmatprep.subr.bf16.mxu0 0
      %1874 = vmatpush1.bf16.msra.mxu0 0
      %1875 = vmatprep.subr.bf16.mxu0 0
      %1876 = vmatpush1.bf16.msra.mxu0 0
      %1877 = vmatprep.subr.bf16.mxu0 0
      %1878 = vmatpush1.bf16.msra.mxu0 0
      %1879 = vmatprep.subr.bf16.mxu0 0
      %1880 = vmatpush1.bf16.msra.mxu0 0
      %1881 = vmatprep.mubr.bf16.mxu0 0
      %1882 = vmatmul.mubr.bf16.gmra.mrb[0].mxu0 %v1844
      %v1883 = vpop.f32.mrb[0].mxu0
      %v1884 = vadd.f32 0.0, %v1883
      %v1885 = vpop.f32.mrb[0].mxu0
      %v1886 = vpop.f32.mrb[0].mxu0
      %v1887 = vpop.f32.mrb[0].mxu0
      %1888 = vdwg.mxu0
      %s1889 = scalar_lea.vmem %s1040, 8
      %v1890 = vld [vmem:[%s1889] sm:$0xf]
      %v1891 = vld [vmem:[%s1889 + $0x4] sm:$0xf]
      %v1892 = vpack.c.bf16 %v1884, %v1884
      %v1895 = vunpack.c.l.b16 %v1890
      %v1896 = vunpack.c.l.b16 %v1891
      %v1897 = vpack.c.b16 %v1896, %v1895
      %v1900 = vsel %vm1424, %v1892, 0
      %1902 = vmatprep.subr.bf16.mxu0 0
      %1903 = vmatpush1.bf16.msra.mxu0 %v1897
      %1904 = vmatprep.subr.bf16.mxu0 0
      %1905 = vmatpush1.bf16.msra.mxu0 0
      %1906 = vmatprep.subr.bf16.mxu0 0
      %1907 = vmatpush1.bf16.msra.mxu0 0
      %1908 = vmatprep.subr.bf16.mxu0 0
      %1909 = vmatpush1.bf16.msra.mxu0 0
      %1910 = vmatprep.subr.bf16.mxu0 0
      %1911 = vmatpush1.bf16.msra.mxu0 0
      %1912 = vmatprep.subr.bf16.mxu0 0
      %1913 = vmatpush1.bf16.msra.mxu0 0
      %1914 = vmatprep.subr.bf16.mxu0 0
      %1915 = vmatpush1.bf16.msra.mxu0 0
      %1916 = vmatprep.subr.bf16.mxu0 0
      %1917 = vmatpush1.bf16.msra.mxu0 0
      %1918 = vmatprep.subr.bf16.mxu0 0
      %1919 = vmatpush1.bf16.msra.mxu0 0
      %1920 = vmatprep.subr.bf16.mxu0 0
      %1921 = vmatpush1.bf16.msra.mxu0 0
      %1922 = vmatprep.subr.bf16.mxu0 0
      %1923 = vmatpush1.bf16.msra.mxu0 0
      %1924 = vmatprep.subr.bf16.mxu0 0
      %1925 = vmatpush1.bf16.msra.mxu0 0
      %1926 = vmatprep.subr.bf16.mxu0 0
      %1927 = vmatpush1.bf16.msra.mxu0 0
      %1928 = vmatprep.subr.bf16.mxu0 0
      %1929 = vmatpush1.bf16.msra.mxu0 0
      %1930 = vmatprep.subr.bf16.mxu0 0
      %1931 = vmatpush1.bf16.msra.mxu0 0
      %1932 = vmatprep.subr.bf16.mxu0 0
      %1933 = vmatpush1.bf16.msra.mxu0 0
      %1934 = vmatprep.mubr.bf16.mxu0 0
      %1935 = vmatmul.mubr.bf16.gmra.mrb[0].mxu0 %v1900
      %v1936 = vpop.f32.mrb[0].mxu0
      %v1937 = vadd.f32 0.0, %v1936
      %v1938 = vpop.f32.mrb[0].mxu0
      %v1939 = vpop.f32.mrb[0].mxu0
      %v1940 = vpop.f32.mrb[0].mxu0
      %1941 = vdwg.mxu0
      %v1944 = vunpack.c.l.b16 %v1534
      %v1945 = vunpack.c.l.b16 %v1535
      %v1946 = vpack.c.b16 %v1945, %v1944
      %v1949 = vsel %vm1424, %v1536, 0
      %1951 = vmatprep.subr.bf16.mxu0 0
      %1952 = vmatpush1.bf16.msra.mxu0 %v1946
      %1953 = vmatprep.subr.bf16.mxu0 0
      %1954 = vmatpush1.bf16.msra.mxu0 0
      %1955 = vmatprep.subr.bf16.mxu0 0
      %1956 = vmatpush1.bf16.msra.mxu0 0
      %1957 = vmatprep.subr.bf16.mxu0 0
      %1958 = vmatpush1.bf16.msra.mxu0 0
      %1959 = vmatprep.subr.bf16.mxu0 0
      %1960 = vmatpush1.bf16.msra.mxu0 0
      %1961 = vmatprep.subr.bf16.mxu0 0
      %1962 = vmatpush1.bf16.msra.mxu0 0
      %1963 = vmatprep.subr.bf16.mxu0 0
      %1964 = vmatpush1.bf16.msra.mxu0 0
      %1965 = vmatprep.subr.bf16.mxu0 0
      %1966 = vmatpush1.bf16.msra.mxu0 0
      %1967 = vmatprep.subr.bf16.mxu0 0
      %1968 = vmatpush1.bf16.msra.mxu0 0
      %1969 = vmatprep.subr.bf16.mxu0 0
      %1970 = vmatpush1.bf16.msra.mxu0 0
      %1971 = vmatprep.subr.bf16.mxu0 0
      %1972 = vmatpush1.bf16.msra.mxu0 0
      %1973 = vmatprep.subr.bf16.mxu0 0
      %1974 = vmatpush1.bf16.msra.mxu0 0
      %1975 = vmatprep.subr.bf16.mxu0 0
      %1976 = vmatpush1.bf16.msra.mxu0 0
      %1977 = vmatprep.subr.bf16.mxu0 0
      %1978 = vmatpush1.bf16.msra.mxu0 0
      %1979 = vmatprep.subr.bf16.mxu0 0
      %1980 = vmatpush1.bf16.msra.mxu0 0
      %1981 = vmatprep.subr.bf16.mxu0 0
      %1982 = vmatpush1.bf16.msra.mxu0 0
      %1983 = vmatprep.mubr.bf16.mxu0 0
      %1984 = vmatmul.mubr.bf16.gmra.mrb[0].mxu0 %v1949
      %v1985 = vpop.f32.mrb[0].mxu0
      %v1986 = vadd.f32 %v1937, %v1985
      %v1987 = vpop.f32.mrb[0].mxu0
      %v1988 = vpop.f32.mrb[0].mxu0
      %v1989 = vpop.f32.mrb[0].mxu0
      %1990 = vdwg.mxu0
      %s1991 = scalar_lea.vmem %s1013, 64
      %v1992 = vld [vmem:[%s1991] sm:$0xf]
      %v1993 = vld [vmem:[%s1991 + $0x4] sm:$0xf]
      %v1994 = vld [vmem:[%s1991 + $0x8] sm:$0xf]
      %v1995 = vld [vmem:[%s1991 + $0xc] sm:$0xf]
      %v1996 = vld [vmem:[%s1991 + $0x10] sm:$0xf]
      %v1997 = vld [vmem:[%s1991 + $0x14] sm:$0xf]
      %v1998 = vld [vmem:[%s1991 + $0x18] sm:$0xf]
      %v1999 = vld [vmem:[%s1991 + $0x1c] sm:$0xf]
      %s2000 = scalar_lea.vmem %s1027, 2
      %v2001 = vld [vmem:[%s2000] sm:$0x1]
      %v2003 = vlaneseq
      %v2004 = vshrl.u32 %v2003, 7
      %v2005 = vsub.s32 0, %v2004
      %v2006 = vrot.slane %v2001, %v2005
      %v2016 = vunpack.c.l.b16 %v1992
      %v2017 = vunpack.c.l.b16 %v1993
      %v2018 = vunpack.c.l.b16 %v1994
      %v2019 = vunpack.c.l.b16 %v1995
      %v2020 = vunpack.c.l.b16 %v1996
      %v2021 = vunpack.c.l.b16 %v1997
      %v2022 = vunpack.c.l.b16 %v1998
      %v2023 = vunpack.c.l.b16 %v1999
      %v2024 = vpack.c.b16 %v2017, %v2016
      %v2025 = vpack.c.b16 %v2019, %v2018
      %v2026 = vpack.c.b16 %v2021, %v2020
      %v2027 = vpack.c.b16 %v2023, %v2022
      %2032 = vmatprep.subr.bf16.mxu0 0
      %2033 = vmatpush1.bf16.msra.mxu0 %v2024
      %2034 = vmatprep.subr.bf16.mxu0 0
      %2035 = vmatpush1.bf16.msra.mxu0 %v2025
      %2036 = vmatprep.subr.bf16.mxu0 0
      %2037 = vmatpush1.bf16.msra.mxu0 %v2026
      %2038 = vmatprep.subr.bf16.mxu0 0
      %2039 = vmatpush1.bf16.msra.mxu0 %v2027
      %2040 = vmatprep.subr.bf16.mxu0 0
      %2041 = vmatpush1.bf16.msra.mxu0 0
      %2042 = vmatprep.subr.bf16.mxu0 0
      %2043 = vmatpush1.bf16.msra.mxu0 0
      %2044 = vmatprep.subr.bf16.mxu0 0
      %2045 = vmatpush1.bf16.msra.mxu0 0
      %2046 = vmatprep.subr.bf16.mxu0 0
      %2047 = vmatpush1.bf16.msra.mxu0 0
      %2048 = vmatprep.subr.bf16.mxu0 0
      %2049 = vmatpush1.bf16.msra.mxu0 0
      %2050 = vmatprep.subr.bf16.mxu0 0
      %2051 = vmatpush1.bf16.msra.mxu0 0
      %2052 = vmatprep.subr.bf16.mxu0 0
      %2053 = vmatpush1.bf16.msra.mxu0 0
      %2054 = vmatprep.subr.bf16.mxu0 0
      %2055 = vmatpush1.bf16.msra.mxu0 0
      %2056 = vmatprep.subr.bf16.mxu0 0
      %2057 = vmatpush1.bf16.msra.mxu0 0
      %2058 = vmatprep.subr.bf16.mxu0 0
      %2059 = vmatpush1.bf16.msra.mxu0 0
      %2060 = vmatprep.subr.bf16.mxu0 0
      %2061 = vmatpush1.bf16.msra.mxu0 0
      %2062 = vmatprep.subr.bf16.mxu0 0
      %2063 = vmatpush1.bf16.msra.mxu0 0
      %2064 = vmatprep.mubr.bf16.mxu0 0
      %2065 = vmatmul.mubr.bf16.gmra.mrb[0].mxu0 %v1222
      %v2066 = vpop.f32.mrb[0].mxu0
      %v2067 = vadd.f32 %v2006, %v2066
      %v2068 = vpop.f32.mrb[0].mxu0
      %v2069 = vpop.f32.mrb[0].mxu0
      %v2070 = vpop.f32.mrb[0].mxu0
      %2071 = vdwg.mxu0
      %s2072 = scalar_lea.vmem %s1018, 64
      %v2073 = vld [vmem:[%s2072] sm:$0xf]
      %v2074 = vld [vmem:[%s2072 + $0x4] sm:$0xf]
      %v2075 = vld [vmem:[%s2072 + $0x8] sm:$0xf]
      %v2076 = vld [vmem:[%s2072 + $0xc] sm:$0xf]
      %v2077 = vld [vmem:[%s2072 + $0x10] sm:$0xf]
      %v2078 = vld [vmem:[%s2072 + $0x14] sm:$0xf]
      %v2079 = vld [vmem:[%s2072 + $0x18] sm:$0xf]
      %v2080 = vld [vmem:[%s2072 + $0x1c] sm:$0xf]
      %s2081 = scalar_lea.vmem %s1031, 2
      %v2082 = vld [vmem:[%s2081] sm:$0x1]
      %v2084 = vlaneseq
      %v2085 = vshrl.u32 %v2084, 7
      %v2086 = vsub.s32 0, %v2085
      %v2087 = vrot.slane %v2082, %v2086
      %v2097 = vunpack.c.l.b16 %v2073
      %v2098 = vunpack.c.l.b16 %v2074
      %v2099 = vunpack.c.l.b16 %v2075
      %v2100 = vunpack.c.l.b16 %v2076
      %v2101 = vunpack.c.l.b16 %v2077
      %v2102 = vunpack.c.l.b16 %v2078
      %v2103 = vunpack.c.l.b16 %v2079
      %v2104 = vunpack.c.l.b16 %v2080
      %v2105 = vpack.c.b16 %v2098, %v2097
      %v2106 = vpack.c.b16 %v2100, %v2099
      %v2107 = vpack.c.b16 %v2102, %v2101
      %v2108 = vpack.c.b16 %v2104, %v2103
      %2113 = vmatprep.subr.bf16.mxu0 0
      %2114 = vmatpush1.bf16.msra.mxu0 %v2105
      %2115 = vmatprep.subr.bf16.mxu0 0
      %2116 = vmatpush1.bf16.msra.mxu0 %v2106
      %2117 = vmatprep.subr.bf16.mxu0 0
      %2118 = vmatpush1.bf16.msra.mxu0 %v2107
      %2119 = vmatprep.subr.bf16.mxu0 0
      %2120 = vmatpush1.bf16.msra.mxu0 %v2108
      %2121 = vmatprep.subr.bf16.mxu0 0
      %2122 = vmatpush1.bf16.msra.mxu0 0
      %2123 = vmatprep.subr.bf16.mxu0 0
      %2124 = vmatpush1.bf16.msra.mxu0 0
      %2125 = vmatprep.subr.bf16.mxu0 0
      %2126 = vmatpush1.bf16.msra.mxu0 0
      %2127 = vmatprep.subr.bf16.mxu0 0
      %2128 = vmatpush1.bf16.msra.mxu0 0
      %2129 = vmatprep.subr.bf16.mxu0 0
      %2130 = vmatpush1.bf16.msra.mxu0 0
      %2131 = vmatprep.subr.bf16.mxu0 0
      %2132 = vmatpush1.bf16.msra.mxu0 0
      %2133 = vmatprep.subr.bf16.mxu0 0
      %2134 = vmatpush1.bf16.msra.mxu0 0
      %2135 = vmatprep.subr.bf16.mxu0 0
      %2136 = vmatpush1.bf16.msra.mxu0 0
      %2137 = vmatprep.subr.bf16.mxu0 0
      %2138 = vmatpush1.bf16.msra.mxu0 0
      %2139 = vmatprep.subr.bf16.mxu0 0
      %2140 = vmatpush1.bf16.msra.mxu0 0
      %2141 = vmatprep.subr.bf16.mxu0 0
      %2142 = vmatpush1.bf16.msra.mxu0 0
      %2143 = vmatprep.subr.bf16.mxu0 0
      %2144 = vmatpush1.bf16.msra.mxu0 0
      %2145 = vmatprep.mubr.bf16.mxu0 0
      %2146 = vmatmul.mubr.bf16.gmra.mrb[0].mxu0 %v1222
      %v2147 = vpop.f32.mrb[0].mxu0
      %v2148 = vadd.f32 %v2087, %v2147
      %v2149 = vpop.f32.mrb[0].mxu0
      %v2150 = vpop.f32.mrb[0].mxu0
      %v2151 = vpop.f32.mrb[0].mxu0
      %2152 = vdwg.mxu0
      %s2153 = scalar_lea.vmem %s1023, 64
      %v2154 = vld [vmem:[%s2153] sm:$0xf]
      %v2155 = vld [vmem:[%s2153 + $0x4] sm:$0xf]
      %v2156 = vld [vmem:[%s2153 + $0x8] sm:$0xf]
      %v2157 = vld [vmem:[%s2153 + $0xc] sm:$0xf]
      %v2158 = vld [vmem:[%s2153 + $0x10] sm:$0xf]
      %v2159 = vld [vmem:[%s2153 + $0x14] sm:$0xf]
      %v2160 = vld [vmem:[%s2153 + $0x18] sm:$0xf]
      %v2161 = vld [vmem:[%s2153 + $0x1c] sm:$0xf]
      %s2162 = scalar_lea.vmem %s1035, 2
      %v2163 = vld [vmem:[%s2162] sm:$0x1]
      %v2165 = vlaneseq
      %v2166 = vshrl.u32 %v2165, 7
      %v2167 = vsub.s32 0, %v2166
      %v2168 = vrot.slane %v2163, %v2167
      %v2178 = vunpack.c.l.b16 %v2154
      %v2179 = vunpack.c.l.b16 %v2155
      %v2180 = vunpack.c.l.b16 %v2156
      %v2181 = vunpack.c.l.b16 %v2157
      %v2182 = vunpack.c.l.b16 %v2158
      %v2183 = vunpack.c.l.b16 %v2159
      %v2184 = vunpack.c.l.b16 %v2160
      %v2185 = vunpack.c.l.b16 %v2161
      %v2186 = vpack.c.b16 %v2179, %v2178
      %v2187 = vpack.c.b16 %v2181, %v2180
      %v2188 = vpack.c.b16 %v2183, %v2182
      %v2189 = vpack.c.b16 %v2185, %v2184
      %2194 = vmatprep.subr.bf16.mxu0 0
      %2195 = vmatpush1.bf16.msra.mxu0 %v2186
      %2196 = vmatprep.subr.bf16.mxu0 0
      %2197 = vmatpush1.bf16.msra.mxu0 %v2187
      %2198 = vmatprep.subr.bf16.mxu0 0
      %2199 = vmatpush1.bf16.msra.mxu0 %v2188
      %2200 = vmatprep.subr.bf16.mxu0 0
      %2201 = vmatpush1.bf16.msra.mxu0 %v2189
      %2202 = vmatprep.subr.bf16.mxu0 0
      %2203 = vmatpush1.bf16.msra.mxu0 0
      %2204 = vmatprep.subr.bf16.mxu0 0
      %2205 = vmatpush1.bf16.msra.mxu0 0
      %2206 = vmatprep.subr.bf16.mxu0 0
      %2207 = vmatpush1.bf16.msra.mxu0 0
      %2208 = vmatprep.subr.bf16.mxu0 0
      %2209 = vmatpush1.bf16.msra.mxu0 0
      %2210 = vmatprep.subr.bf16.mxu0 0
      %2211 = vmatpush1.bf16.msra.mxu0 0
      %2212 = vmatprep.subr.bf16.mxu0 0
      %2213 = vmatpush1.bf16.msra.mxu0 0
      %2214 = vmatprep.subr.bf16.mxu0 0
      %2215 = vmatpush1.bf16.msra.mxu0 0
      %2216 = vmatprep.subr.bf16.mxu0 0
      %2217 = vmatpush1.bf16.msra.mxu0 0
      %2218 = vmatprep.subr.bf16.mxu0 0
      %2219 = vmatpush1.bf16.msra.mxu0 0
      %2220 = vmatprep.subr.bf16.mxu0 0
      %2221 = vmatpush1.bf16.msra.mxu0 0
      %2222 = vmatprep.subr.bf16.mxu0 0
      %2223 = vmatpush1.bf16.msra.mxu0 0
      %2224 = vmatprep.subr.bf16.mxu0 0
      %2225 = vmatpush1.bf16.msra.mxu0 0
      %2226 = vmatprep.mubr.bf16.mxu0 0
      %2227 = vmatmul.mubr.bf16.gmra.mrb[0].mxu0 %v1222
      %v2228 = vpop.f32.mrb[0].mxu0
      %v2229 = vadd.f32 %v2168, %v2228
      %v2230 = vpop.f32.mrb[0].mxu0
      %v2231 = vpop.f32.mrb[0].mxu0
      %v2232 = vpop.f32.mrb[0].mxu0
      %2233 = vdwg.mxu0
      %v2234 = vpack.c.bf16 %v2067, %v2067
      %v2235 = vpack.c.bf16 %v2148, %v2148
      %v2237 = vsel %vm1424, %v2234, 0
      %v2240 = vsel %vm1424, %v2235, 0
      %2242 = vmatprep.subr.bf16.mxu0 0
      %2243 = vmatpush1.bf16.xpose.msra.mxu0 %v2240
      %2244 = vmatprep.subr.bf16.mxu0 0
      %2245 = vmatpush1.bf16.xpose.msra.mxu0 0
      %2246 = vmatprep.subr.bf16.mxu0 0
      %2247 = vmatpush1.bf16.xpose.msra.mxu0 0
      %2248 = vmatprep.subr.bf16.mxu0 0
      %2249 = vmatpush1.bf16.xpose.msra.mxu0 0
      %2250 = vmatprep.subr.bf16.mxu0 0
      %2251 = vmatpush1.bf16.xpose.msra.mxu0 0
      %2252 = vmatprep.subr.bf16.mxu0 0
      %2253 = vmatpush1.bf16.xpose.msra.mxu0 0
      %2254 = vmatprep.subr.bf16.mxu0 0
      %2255 = vmatpush1.bf16.xpose.msra.mxu0 0
      %2256 = vmatprep.subr.bf16.mxu0 0
      %2257 = vmatpush1.bf16.xpose.msra.mxu0 0
      %2258 = vmatprep.subr.bf16.mxu0 0
      %2259 = vmatpush1.bf16.xpose.msra.mxu0 0
      %2260 = vmatprep.subr.bf16.mxu0 0
      %2261 = vmatpush1.bf16.xpose.msra.mxu0 0
      %2262 = vmatprep.subr.bf16.mxu0 0
      %2263 = vmatpush1.bf16.xpose.msra.mxu0 0
      %2264 = vmatprep.subr.bf16.mxu0 0
      %2265 = vmatpush1.bf16.xpose.msra.mxu0 0
      %2266 = vmatprep.subr.bf16.mxu0 0
      %2267 = vmatpush1.bf16.xpose.msra.mxu0 0
      %2268 = vmatprep.subr.bf16.mxu0 0
      %2269 = vmatpush1.bf16.xpose.msra.mxu0 0
      %2270 = vmatprep.subr.bf16.mxu0 0
      %2271 = vmatpush1.bf16.xpose.msra.mxu0 0
      %2272 = vmatprep.subr.bf16.mxu0 0
      %2273 = vmatpush1.bf16.xpose.msra.mxu0 0
      %2274 = vmatprep.mubr.bf16.mxu0 0
      %2275 = vmatmul.mubr.bf16.gmra.mrb[0].mxu0 %v2237
      %v2276 = vpop.f32.mrb[0].mxu0
      %v2277 = vadd.f32 0.0, %v2276
      %v2278 = vpop.f32.mrb[0].mxu0
      %v2279 = vpop.f32.mrb[0].mxu0
      %v2280 = vpop.f32.mrb[0].mxu0
      %2281 = vdwg.mxu0
      %v2282 = vmul.f32 %v2277, 0.25
      %v2283 = vadd.f32 %v2282, %v1147
      %v2284 = vsel %vm1473, %v2283, -inf
      %2285 = vmax.xlane.f32.xlu0 %v2284
      %v2286 = vpop.xlane.xlu0 %2285
      %v2287 = vsub.f32 %v2283, %v2286
      %v2288 = vmul.f32 %v2287, 1.442695
      %v2289 = vpow.pop %v2288
      %v2290 = vsel %vm1473, %v2289, 0.0
      %2291 = vadd.xlane.f32.xlu0 %v2290
      %v2292 = vpop.xlane.xlu0 %2291
      %v2293 = vrcp.pop %v2292
      %v2294 = vmul.f32 %v2289, %v2293
      %v2295 = vpack.c.bf16 %v2294, %v2294
      %v2296 = vpack.c.bf16 %v2229, %v2229
      %v2298 = vsel %vm1473, %v2295, 0
      %v2301 = vsel %vm1490, %v2296, 0
      %2303 = vmatprep.subr.bf16.mxu0 0
      %2304 = vmatpush1.bf16.msra.mxu0 %v2301
      %2305 = vmatprep.subr.bf16.mxu0 0
      %2306 = vmatpush1.bf16.msra.mxu0 0
      %2307 = vmatprep.subr.bf16.mxu0 0
      %2308 = vmatpush1.bf16.msra.mxu0 0
      %2309 = vmatprep.subr.bf16.mxu0 0
      %2310 = vmatpush1.bf16.msra.mxu0 0
      %2311 = vmatprep.subr.bf16.mxu0 0
      %2312 = vmatpush1.bf16.msra.mxu0 0
      %2313 = vmatprep.subr.bf16.mxu0 0
      %2314 = vmatpush1.bf16.msra.mxu0 0
      %2315 = vmatprep.subr.bf16.mxu0 0
      %2316 = vmatpush1.bf16.msra.mxu0 0
      %2317 = vmatprep.subr.bf16.mxu0 0
      %2318 = vmatpush1.bf16.msra.mxu0 0
      %2319 = vmatprep.subr.bf16.mxu0 0
      %2320 = vmatpush1.bf16.msra.mxu0 0
      %2321 = vmatprep.subr.bf16.mxu0 0
      %2322 = vmatpush1.bf16.msra.mxu0 0
      %2323 = vmatprep.subr.bf16.mxu0 0
      %2324 = vmatpush1.bf16.msra.mxu0 0
      %2325 = vmatprep.subr.bf16.mxu0 0
      %2326 = vmatpush1.bf16.msra.mxu0 0
      %2327 = vmatprep.subr.bf16.mxu0 0
      %2328 = vmatpush1.bf16.msra.mxu0 0
      %2329 = vmatprep.subr.bf16.mxu0 0
      %2330 = vmatpush1.bf16.msra.mxu0 0
      %2331 = vmatprep.subr.bf16.mxu0 0
      %2332 = vmatpush1.bf16.msra.mxu0 0
      %2333 = vmatprep.subr.bf16.mxu0 0
      %2334 = vmatpush1.bf16.msra.mxu0 0
      %2335 = vmatprep.mubr.bf16.mxu0 0
      %2336 = vmatmul.mubr.bf16.gmra.mrb[0].mxu0 %v2298
      %v2337 = vpop.f32.mrb[0].mxu0
      %v2338 = vadd.f32 0.0, %v2337
      %v2339 = vpop.f32.mrb[0].mxu0
      %v2340 = vpop.f32.mrb[0].mxu0
      %v2341 = vpop.f32.mrb[0].mxu0
      %2342 = vdwg.mxu0
      %s2343 = scalar_lea.vmem %s1040, 16
      %v2344 = vld [vmem:[%s2343] sm:$0xf]
      %v2345 = vld [vmem:[%s2343 + $0x4] sm:$0xf]
      %v2346 = vpack.c.bf16 %v2338, %v2338
      %v2349 = vunpack.c.l.b16 %v2344
      %v2350 = vunpack.c.l.b16 %v2345
      %v2351 = vpack.c.b16 %v2350, %v2349
      %v2354 = vsel %vm1424, %v2346, 0
      %2356 = vmatprep.subr.bf16.mxu0 0
      %2357 = vmatpush1.bf16.msra.mxu0 %v2351
      %2358 = vmatprep.subr.bf16.mxu0 0
      %2359 = vmatpush1.bf16.msra.mxu0 0
      %2360 = vmatprep.subr.bf16.mxu0 0
      %2361 = vmatpush1.bf16.msra.mxu0 0
      %2362 = vmatprep.subr.bf16.mxu0 0
      %2363 = vmatpush1.bf16.msra.mxu0 0
      %2364 = vmatprep.subr.bf16.mxu0 0
      %2365 = vmatpush1.bf16.msra.mxu0 0
      %2366 = vmatprep.subr.bf16.mxu0 0
      %2367 = vmatpush1.bf16.msra.mxu0 0
      %2368 = vmatprep.subr.bf16.mxu0 0
      %2369 = vmatpush1.bf16.msra.mxu0 0
      %2370 = vmatprep.subr.bf16.mxu0 0
      %2371 = vmatpush1.bf16.msra.mxu0 0
      %2372 = vmatprep.subr.bf16.mxu0 0
      %2373 = vmatpush1.bf16.msra.mxu0 0
      %2374 = vmatprep.subr.bf16.mxu0 0
      %2375 = vmatpush1.bf16.msra.mxu0 0
      %2376 = vmatprep.subr.bf16.mxu0 0
      %2377 = vmatpush1.bf16.msra.mxu0 0
      %2378 = vmatprep.subr.bf16.mxu0 0
      %2379 = vmatpush1.bf16.msra.mxu0 0
      %2380 = vmatprep.subr.bf16.mxu0 0
      %2381 = vmatpush1.bf16.msra.mxu0 0
      %2382 = vmatprep.subr.bf16.mxu0 0
      %2383 = vmatpush1.bf16.msra.mxu0 0
      %2384 = vmatprep.subr.bf16.mxu0 0
      %2385 = vmatpush1.bf16.msra.mxu0 0
      %2386 = vmatprep.subr.bf16.mxu0 0
      %2387 = vmatpush1.bf16.msra.mxu0 0
      %2388 = vmatprep.mubr.bf16.mxu0 0
      %2389 = vmatmul.mubr.bf16.gmra.mrb[0].mxu0 %v2354
      %v2390 = vpop.f32.mrb[0].mxu0
      %v2391 = vadd.f32 0.0, %v2390
      %v2392 = vpop.f32.mrb[0].mxu0
      %v2393 = vpop.f32.mrb[0].mxu0
      %v2394 = vpop.f32.mrb[0].mxu0
      %2395 = vdwg.mxu0
      %v2396 = vadd.f32 %v1986, %v2391
      %s2397 = scalar_lea.vmem %s1013, 96
      %v2398 = vld [vmem:[%s2397] sm:$0xf]
      %v2399 = vld [vmem:[%s2397 + $0x4] sm:$0xf]
      %v2400 = vld [vmem:[%s2397 + $0x8] sm:$0xf]
      %v2401 = vld [vmem:[%s2397 + $0xc] sm:$0xf]
      %v2402 = vld [vmem:[%s2397 + $0x10] sm:$0xf]
      %v2403 = vld [vmem:[%s2397 + $0x14] sm:$0xf]
      %v2404 = vld [vmem:[%s2397 + $0x18] sm:$0xf]
      %v2405 = vld [vmem:[%s2397 + $0x1c] sm:$0xf]
      %s2406 = scalar_lea.vmem %s1027, 3
      %v2407 = vld [vmem:[%s2406] sm:$0x1]
      %v2409 = vlaneseq
      %v2410 = vshrl.u32 %v2409, 7
      %v2411 = vsub.s32 0, %v2410
      %v2412 = vrot.slane %v2407, %v2411
      %v2422 = vunpack.c.l.b16 %v2398
      %v2423 = vunpack.c.l.b16 %v2399
      %v2424 = vunpack.c.l.b16 %v2400
      %v2425 = vunpack.c.l.b16 %v2401
      %v2426 = vunpack.c.l.b16 %v2402
      %v2427 = vunpack.c.l.b16 %v2403
      %v2428 = vunpack.c.l.b16 %v2404
      %v2429 = vunpack.c.l.b16 %v2405
      %v2430 = vpack.c.b16 %v2423, %v2422
      %v2431 = vpack.c.b16 %v2425, %v2424
      %v2432 = vpack.c.b16 %v2427, %v2426
      %v2433 = vpack.c.b16 %v2429, %v2428
      %2438 = vmatprep.subr.bf16.mxu0 0
      %2439 = vmatpush1.bf16.msra.mxu0 %v2430
      %2440 = vmatprep.subr.bf16.mxu0 0
      %2441 = vmatpush1.bf16.msra.mxu0 %v2431
      %2442 = vmatprep.subr.bf16.mxu0 0
      %2443 = vmatpush1.bf16.msra.mxu0 %v2432
      %2444 = vmatprep.subr.bf16.mxu0 0
      %2445 = vmatpush1.bf16.msra.mxu0 %v2433
      %2446 = vmatprep.subr.bf16.mxu0 0
      %2447 = vmatpush1.bf16.msra.mxu0 0
      %2448 = vmatprep.subr.bf16.mxu0 0
      %2449 = vmatpush1.bf16.msra.mxu0 0
      %2450 = vmatprep.subr.bf16.mxu0 0
      %2451 = vmatpush1.bf16.msra.mxu0 0
      %2452 = vmatprep.subr.bf16.mxu0 0
      %2453 = vmatpush1.bf16.msra.mxu0 0
      %2454 = vmatprep.subr.bf16.mxu0 0
      %2455 = vmatpush1.bf16.msra.mxu0 0
      %2456 = vmatprep.subr.bf16.mxu0 0
      %2457 = vmatpush1.bf16.msra.mxu0 0
      %2458 = vmatprep.subr.bf16.mxu0 0
      %2459 = vmatpush1.bf16.msra.mxu0 0
      %2460 = vmatprep.subr.bf16.mxu0 0
      %2461 = vmatpush1.bf16.msra.mxu0 0
      %2462 = vmatprep.subr.bf16.mxu0 0
      %2463 = vmatpush1.bf16.msra.mxu0 0
      %2464 = vmatprep.subr.bf16.mxu0 0
      %2465 = vmatpush1.bf16.msra.mxu0 0
      %2466 = vmatprep.subr.bf16.mxu0 0
      %2467 = vmatpush1.bf16.msra.mxu0 0
      %2468 = vmatprep.subr.bf16.mxu0 0
      %2469 = vmatpush1.bf16.msra.mxu0 0
      %2470 = vmatprep.mubr.bf16.mxu0 0
      %2471 = vmatmul.mubr.bf16.gmra.mrb[0].mxu0 %v1222
      %v2472 = vpop.f32.mrb[0].mxu0
      %v2473 = vadd.f32 %v2412, %v2472
      %v2474 = vpop.f32.mrb[0].mxu0
      %v2475 = vpop.f32.mrb[0].mxu0
      %v2476 = vpop.f32.mrb[0].mxu0
      %2477 = vdwg.mxu0
      %s2478 = scalar_lea.vmem %s1018, 96
      %v2479 = vld [vmem:[%s2478] sm:$0xf]
      %v2480 = vld [vmem:[%s2478 + $0x4] sm:$0xf]
      %v2481 = vld [vmem:[%s2478 + $0x8] sm:$0xf]
      %v2482 = vld [vmem:[%s2478 + $0xc] sm:$0xf]
      %v2483 = vld [vmem:[%s2478 + $0x10] sm:$0xf]
      %v2484 = vld [vmem:[%s2478 + $0x14] sm:$0xf]
      %v2485 = vld [vmem:[%s2478 + $0x18] sm:$0xf]
      %v2486 = vld [vmem:[%s2478 + $0x1c] sm:$0xf]
      %s2487 = scalar_lea.vmem %s1031, 3
      %v2488 = vld [vmem:[%s2487] sm:$0x1]
      %v2490 = vlaneseq
      %v2491 = vshrl.u32 %v2490, 7
      %v2492 = vsub.s32 0, %v2491
      %v2493 = vrot.slane %v2488, %v2492
      %v2503 = vunpack.c.l.b16 %v2479
      %v2504 = vunpack.c.l.b16 %v2480
      %v2505 = vunpack.c.l.b16 %v2481
      %v2506 = vunpack.c.l.b16 %v2482
      %v2507 = vunpack.c.l.b16 %v2483
      %v2508 = vunpack.c.l.b16 %v2484
      %v2509 = vunpack.c.l.b16 %v2485
      %v2510 = vunpack.c.l.b16 %v2486
      %v2511 = vpack.c.b16 %v2504, %v2503
      %v2512 = vpack.c.b16 %v2506, %v2505
      %v2513 = vpack.c.b16 %v2508, %v2507
      %v2514 = vpack.c.b16 %v2510, %v2509
      %2519 = vmatprep.subr.bf16.mxu0 0
      %2520 = vmatpush1.bf16.msra.mxu0 %v2511
      %2521 = vmatprep.subr.bf16.mxu0 0
      %2522 = vmatpush1.bf16.msra.mxu0 %v2512
      %2523 = vmatprep.subr.bf16.mxu0 0
      %2524 = vmatpush1.bf16.msra.mxu0 %v2513
      %2525 = vmatprep.subr.bf16.mxu0 0
      %2526 = vmatpush1.bf16.msra.mxu0 %v2514
      %2527 = vmatprep.subr.bf16.mxu0 0
      %2528 = vmatpush1.bf16.msra.mxu0 0
      %2529 = vmatprep.subr.bf16.mxu0 0
      %2530 = vmatpush1.bf16.msra.mxu0 0
      %2531 = vmatprep.subr.bf16.mxu0 0
      %2532 = vmatpush1.bf16.msra.mxu0 0
      %2533 = vmatprep.subr.bf16.mxu0 0
      %2534 = vmatpush1.bf16.msra.mxu0 0
      %2535 = vmatprep.subr.bf16.mxu0 0
      %2536 = vmatpush1.bf16.msra.mxu0 0
      %2537 = vmatprep.subr.bf16.mxu0 0
      %2538 = vmatpush1.bf16.msra.mxu0 0
      %2539 = vmatprep.subr.bf16.mxu0 0
      %2540 = vmatpush1.bf16.msra.mxu0 0
      %2541 = vmatprep.subr.bf16.mxu0 0
      %2542 = vmatpush1.bf16.msra.mxu0 0
      %2543 = vmatprep.subr.bf16.mxu0 0
      %2544 = vmatpush1.bf16.msra.mxu0 0
      %2545 = vmatprep.subr.bf16.mxu0 0
      %2546 = vmatpush1.bf16.msra.mxu0 0
      %2547 = vmatprep.subr.bf16.mxu0 0
      %2548 = vmatpush1.bf16.msra.mxu0 0
      %2549 = vmatprep.subr.bf16.mxu0 0
      %2550 = vmatpush1.bf16.msra.mxu0 0
      %2551 = vmatprep.mubr.bf16.mxu0 0
      %2552 = vmatmul.mubr.bf16.gmra.mrb[0].mxu0 %v1222
      %v2553 = vpop.f32.mrb[0].mxu0
      %v2554 = vadd.f32 %v2493, %v2553
      %v2555 = vpop.f32.mrb[0].mxu0
      %v2556 = vpop.f32.mrb[0].mxu0
      %v2557 = vpop.f32.mrb[0].mxu0
      %2558 = vdwg.mxu0
      %s2559 = scalar_lea.vmem %s1023, 96
      %v2560 = vld [vmem:[%s2559] sm:$0xf]
      %v2561 = vld [vmem:[%s2559 + $0x4] sm:$0xf]
      %v2562 = vld [vmem:[%s2559 + $0x8] sm:$0xf]
      %v2563 = vld [vmem:[%s2559 + $0xc] sm:$0xf]
      %v2564 = vld [vmem:[%s2559 + $0x10] sm:$0xf]
      %v2565 = vld [vmem:[%s2559 + $0x14] sm:$0xf]
      %v2566 = vld [vmem:[%s2559 + $0x18] sm:$0xf]
      %v2567 = vld [vmem:[%s2559 + $0x1c] sm:$0xf]
      %s2568 = scalar_lea.vmem %s1035, 3
      %v2569 = vld [vmem:[%s2568] sm:$0x1]
      %v2571 = vlaneseq
      %v2572 = vshrl.u32 %v2571, 7
      %v2573 = vsub.s32 0, %v2572
      %v2574 = vrot.slane %v2569, %v2573
      %v2584 = vunpack.c.l.b16 %v2560
      %v2585 = vunpack.c.l.b16 %v2561
      %v2586 = vunpack.c.l.b16 %v2562
      %v2587 = vunpack.c.l.b16 %v2563
      %v2588 = vunpack.c.l.b16 %v2564
      %v2589 = vunpack.c.l.b16 %v2565
      %v2590 = vunpack.c.l.b16 %v2566
      %v2591 = vunpack.c.l.b16 %v2567
      %v2592 = vpack.c.b16 %v2585, %v2584
      %v2593 = vpack.c.b16 %v2587, %v2586
      %v2594 = vpack.c.b16 %v2589, %v2588
      %v2595 = vpack.c.b16 %v2591, %v2590
      %2600 = vmatprep.subr.bf16.mxu0 0
      %2601 = vmatpush1.bf16.msra.mxu0 %v2592
      %2602 = vmatprep.subr.bf16.mxu0 0
      %2603 = vmatpush1.bf16.msra.mxu0 %v2593
      %2604 = vmatprep.subr.bf16.mxu0 0
      %2605 = vmatpush1.bf16.msra.mxu0 %v2594
      %2606 = vmatprep.subr.bf16.mxu0 0
      %2607 = vmatpush1.bf16.msra.mxu0 %v2595
      %2608 = vmatprep.subr.bf16.mxu0 0
      %2609 = vmatpush1.bf16.msra.mxu0 0
      %2610 = vmatprep.subr.bf16.mxu0 0
      %2611 = vmatpush1.bf16.msra.mxu0 0
      %2612 = vmatprep.subr.bf16.mxu0 0
      %2613 = vmatpush1.bf16.msra.mxu0 0
      %2614 = vmatprep.subr.bf16.mxu0 0
      %2615 = vmatpush1.bf16.msra.mxu0 0
      %2616 = vmatprep.subr.bf16.mxu0 0
      %2617 = vmatpush1.bf16.msra.mxu0 0
      %2618 = vmatprep.subr.bf16.mxu0 0
      %2619 = vmatpush1.bf16.msra.mxu0 0
      %2620 = vmatprep.subr.bf16.mxu0 0
      %2621 = vmatpush1.bf16.msra.mxu0 0
      %2622 = vmatprep.subr.bf16.mxu0 0
      %2623 = vmatpush1.bf16.msra.mxu0 0
      %2624 = vmatprep.subr.bf16.mxu0 0
      %2625 = vmatpush1.bf16.msra.mxu0 0
      %2626 = vmatprep.subr.bf16.mxu0 0
      %2627 = vmatpush1.bf16.msra.mxu0 0
      %2628 = vmatprep.subr.bf16.mxu0 0
      %2629 = vmatpush1.bf16.msra.mxu0 0
      %2630 = vmatprep.subr.bf16.mxu0 0
      %2631 = vmatpush1.bf16.msra.mxu0 0
      %2632 = vmatprep.mubr.bf16.mxu0 0
      %2633 = vmatmul.mubr.bf16.gmra.mrb[0].mxu0 %v1222
      %v2634 = vpop.f32.mrb[0].mxu0
      %v2635 = vadd.f32 %v2574, %v2634
      %v2636 = vpop.f32.mrb[0].mxu0
      %v2637 = vpop.f32.mrb[0].mxu0
      %v2638 = vpop.f32.mrb[0].mxu0
      %2639 = vdwg.mxu0
      %v2640 = vpack.c.bf16 %v2473, %v2473
      %v2641 = vpack.c.bf16 %v2554, %v2554
      %v2643 = vsel %vm1424, %v2640, 0
      %v2646 = vsel %vm1424, %v2641, 0
      %2648 = vmatprep.subr.bf16.mxu0 0
      %2649 = vmatpush1.bf16.xpose.msra.mxu0 %v2646
      %2650 = vmatprep.subr.bf16.mxu0 0
      %2651 = vmatpush1.bf16.xpose.msra.mxu0 0
      %2652 = vmatprep.subr.bf16.mxu0 0
      %2653 = vmatpush1.bf16.xpose.msra.mxu0 0
      %2654 = vmatprep.subr.bf16.mxu0 0
      %2655 = vmatpush1.bf16.xpose.msra.mxu0 0
      %2656 = vmatprep.subr.bf16.mxu0 0
      %2657 = vmatpush1.bf16.xpose.msra.mxu0 0
      %2658 = vmatprep.subr.bf16.mxu0 0
      %2659 = vmatpush1.bf16.xpose.msra.mxu0 0
      %2660 = vmatprep.subr.bf16.mxu0 0
      %2661 = vmatpush1.bf16.xpose.msra.mxu0 0
      %2662 = vmatprep.subr.bf16.mxu0 0
      %2663 = vmatpush1.bf16.xpose.msra.mxu0 0
      %2664 = vmatprep.subr.bf16.mxu0 0
      %2665 = vmatpush1.bf16.xpose.msra.mxu0 0
      %2666 = vmatprep.subr.bf16.mxu0 0
      %2667 = vmatpush1.bf16.xpose.msra.mxu0 0
      %2668 = vmatprep.subr.bf16.mxu0 0
      %2669 = vmatpush1.bf16.xpose.msra.mxu0 0
      %2670 = vmatprep.subr.bf16.mxu0 0
      %2671 = vmatpush1.bf16.xpose.msra.mxu0 0
      %2672 = vmatprep.subr.bf16.mxu0 0
      %2673 = vmatpush1.bf16.xpose.msra.mxu0 0
      %2674 = vmatprep.subr.bf16.mxu0 0
      %2675 = vmatpush1.bf16.xpose.msra.mxu0 0
      %2676 = vmatprep.subr.bf16.mxu0 0
      %2677 = vmatpush1.bf16.xpose.msra.mxu0 0
      %2678 = vmatprep.subr.bf16.mxu0 0
      %2679 = vmatpush1.bf16.xpose.msra.mxu0 0
      %2680 = vmatprep.mubr.bf16.mxu0 0
      %2681 = vmatmul.mubr.bf16.gmra.mrb[0].mxu0 %v2643
      %v2682 = vpop.f32.mrb[0].mxu0
      %v2683 = vadd.f32 0.0, %v2682
      %v2684 = vpop.f32.mrb[0].mxu0
      %v2685 = vpop.f32.mrb[0].mxu0
      %v2686 = vpop.f32.mrb[0].mxu0
      %2687 = vdwg.mxu0
      %v2688 = vmul.f32 %v2683, 0.25
      %v2689 = vadd.f32 %v2688, %v1147
      %v2690 = vsel %vm1473, %v2689, -inf
      %2691 = vmax.xlane.f32.xlu0 %v2690
      %v2692 = vpop.xlane.xlu0 %2691
      %v2693 = vsub.f32 %v2689, %v2692
      %v2694 = vmul.f32 %v2693, 1.442695
      %v2695 = vpow.pop %v2694
      %v2696 = vsel %vm1473, %v2695, 0.0
      %2697 = vadd.xlane.f32.xlu0 %v2696
      %v2698 = vpop.xlane.xlu0 %2697
      %v2699 = vrcp.pop %v2698
      %v2700 = vmul.f32 %v2695, %v2699
      %v2701 = vpack.c.bf16 %v2700, %v2700
      %v2702 = vpack.c.bf16 %v2635, %v2635
      %v2704 = vsel %vm1473, %v2701, 0
      %v2707 = vsel %vm1490, %v2702, 0
      %2709 = vmatprep.subr.bf16.mxu0 0
      %2710 = vmatpush1.bf16.msra.mxu0 %v2707
      %2711 = vmatprep.subr.bf16.mxu0 0
      %2712 = vmatpush1.bf16.msra.mxu0 0
      %2713 = vmatprep.subr.bf16.mxu0 0
      %2714 = vmatpush1.bf16.msra.mxu0 0
      %2715 = vmatprep.subr.bf16.mxu0 0
      %2716 = vmatpush1.bf16.msra.mxu0 0
      %2717 = vmatprep.subr.bf16.mxu0 0
      %2718 = vmatpush1.bf16.msra.mxu0 0
      %2719 = vmatprep.subr.bf16.mxu0 0
      %2720 = vmatpush1.bf16.msra.mxu0 0
      %2721 = vmatprep.subr.bf16.mxu0 0
      %2722 = vmatpush1.bf16.msra.mxu0 0
      %2723 = vmatprep.subr.bf16.mxu0 0
      %2724 = vmatpush1.bf16.msra.mxu0 0
      %2725 = vmatprep.subr.bf16.mxu0 0
      %2726 = vmatpush1.bf16.msra.mxu0 0
      %2727 = vmatprep.subr.bf16.mxu0 0
      %2728 = vmatpush1.bf16.msra.mxu0 0
      %2729 = vmatprep.subr.bf16.mxu0 0
      %2730 = vmatpush1.bf16.msra.mxu0 0
      %2731 = vmatprep.subr.bf16.mxu0 0
      %2732 = vmatpush1.bf16.msra.mxu0 0
      %2733 = vmatprep.subr.bf16.mxu0 0
      %2734 = vmatpush1.bf16.msra.mxu0 0
      %2735 = vmatprep.subr.bf16.mxu0 0
      %2736 = vmatpush1.bf16.msra.mxu0 0
      %2737 = vmatprep.subr.bf16.mxu0 0
      %2738 = vmatpush1.bf16.msra.mxu0 0
      %2739 = vmatprep.subr.bf16.mxu0 0
      %2740 = vmatpush1.bf16.msra.mxu0 0
      %2741 = vmatprep.mubr.bf16.mxu0 0
      %2742 = vmatmul.mubr.bf16.gmra.mrb[0].mxu0 %v2704
      %v2743 = vpop.f32.mrb[0].mxu0
      %v2744 = vadd.f32 0.0, %v2743
      %v2745 = vpop.f32.mrb[0].mxu0
      %v2746 = vpop.f32.mrb[0].mxu0
      %v2747 = vpop.f32.mrb[0].mxu0
      %2748 = vdwg.mxu0
      %s2749 = scalar_lea.vmem %s1040, 24
      %v2750 = vld [vmem:[%s2749] sm:$0xf]
      %v2751 = vld [vmem:[%s2749 + $0x4] sm:$0xf]
      %v2752 = vpack.c.bf16 %v2744, %v2744
      %v2755 = vunpack.c.l.b16 %v2750
      %v2756 = vunpack.c.l.b16 %v2751
      %v2757 = vpack.c.b16 %v2756, %v2755
      %v2760 = vsel %vm1424, %v2752, 0
      %2762 = vmatprep.subr.bf16.mxu0 0
      %2763 = vmatpush1.bf16.msra.mxu0 %v2757
      %2764 = vmatprep.subr.bf16.mxu0 0
      %2765 = vmatpush1.bf16.msra.mxu0 0
      %2766 = vmatprep.subr.bf16.mxu0 0
      %2767 = vmatpush1.bf16.msra.mxu0 0
      %2768 = vmatprep.subr.bf16.mxu0 0
      %2769 = vmatpush1.bf16.msra.mxu0 0
      %2770 = vmatprep.subr.bf16.mxu0 0
      %2771 = vmatpush1.bf16.msra.mxu0 0
      %2772 = vmatprep.subr.bf16.mxu0 0
      %2773 = vmatpush1.bf16.msra.mxu0 0
      %2774 = vmatprep.subr.bf16.mxu0 0
      %2775 = vmatpush1.bf16.msra.mxu0 0
      %2776 = vmatprep.subr.bf16.mxu0 0
      %2777 = vmatpush1.bf16.msra.mxu0 0
      %2778 = vmatprep.subr.bf16.mxu0 0
      %2779 = vmatpush1.bf16.msra.mxu0 0
      %2780 = vmatprep.subr.bf16.mxu0 0
      %2781 = vmatpush1.bf16.msra.mxu0 0
      %2782 = vmatprep.subr.bf16.mxu0 0
      %2783 = vmatpush1.bf16.msra.mxu0 0
      %2784 = vmatprep.subr.bf16.mxu0 0
      %2785 = vmatpush1.bf16.msra.mxu0 0
      %2786 = vmatprep.subr.bf16.mxu0 0
      %2787 = vmatpush1.bf16.msra.mxu0 0
      %2788 = vmatprep.subr.bf16.mxu0 0
      %2789 = vmatpush1.bf16.msra.mxu0 0
      %2790 = vmatprep.subr.bf16.mxu0 0
      %2791 = vmatpush1.bf16.msra.mxu0 0
      %2792 = vmatprep.subr.bf16.mxu0 0
      %2793 = vmatpush1.bf16.msra.mxu0 0
      %2794 = vmatprep.mubr.bf16.mxu0 0
      %2795 = vmatmul.mubr.bf16.gmra.mrb[0].mxu0 %v2760
      %v2796 = vpop.f32.mrb[0].mxu0
      %v2797 = vadd.f32 0.0, %v2796
      %v2798 = vpop.f32.mrb[0].mxu0
      %v2799 = vpop.f32.mrb[0].mxu0
      %v2800 = vpop.f32.mrb[0].mxu0
      %2801 = vdwg.mxu0
      %v2802 = vadd.f32 %v2396, %v2797
      %v2803 = vadd.f32 %v1141, %v2802
      %v2804 = vld [vmem:[%s1043] sm:$0x1]
      %v2806 = vlaneseq
      %v2807 = vshrl.u32 %v2806, 7
      %v2808 = vsub.s32 0, %v2807
      %v2809 = vrot.slane %v2804, %v2808
      %v2811 = vadd.f32 %v2803, %v2809
      %v2812 = vld [vmem:[%s1046] sm:$0x1]
      %v2813 = vld [vmem:[%s1049] sm:$0x1]
      %v2814 = vsel %vm1150, %v2811, 0.0
      %2815 = vadd.xlane.f32.xlu0 %v2814
      %v2816 = vpop.xlane.xlu0 %2815
      %v2817 = vmul.f32 %v2816, %v1154
      %v2818 = vmul.f32 %v2811, %v2811
      %v2819 = vsel %vm1150, %v2818, 0.0
      %2820 = vadd.xlane.f32.xlu0 %v2819
      %v2821 = vpop.xlane.xlu0 %2820
      %v2822 = vmul.f32 %v2821, %v1154
      %v2823 = vmul.f32 %v2817, %v2817
      %v2824 = vsub.f32 %v2822, %v2823
      %v2825 = vsub.f32 %v2811, %v2817
      %v2826 = vadd.f32 %v2824, 1e-05
      %v2827 = vrsqrt.pop %v2826
      %v2828 = vmul.f32 %v2825, %v2827
      %v2830 = vlaneseq
      %v2831 = vshrl.u32 %v2830, 7
      %v2832 = vsub.s32 0, %v2831
      %v2833 = vrot.slane %v2812, %v2832
      %v2835 = vmul.f32 %v2828, %v2833
      %v2837 = vlaneseq
      %v2838 = vshrl.u32 %v2837, 7
      %v2839 = vsub.s32 0, %v2838
      %v2840 = vrot.slane %v2813, %v2839
      %v2842 = vadd.f32 %v2835, %v2840
      %v2843 = vld [vmem:[%s1054] sm:$0xff]
      %v2844 = vld [vmem:[%s1054 + $0x8] sm:$0xff]
      %v2845 = vld [vmem:[%s1054 + $0x10] sm:$0xff]
      %v2846 = vld [vmem:[%s1054 + $0x18] sm:$0xff]
      %v2847 = vld [vmem:[%s1054 + $0x20] sm:$0xff]
      %v2848 = vld [vmem:[%s1054 + $0x28] sm:$0xff]
      %v2849 = vld [vmem:[%s1054 + $0x30] sm:$0xff]
      %v2850 = vld [vmem:[%s1054 + $0x38] sm:$0xff]
      %v2851 = vpack.c.bf16 %v2842, %v2842
      %v2852 = vld [vmem:[%s1058] sm:$0x3]
      %v2854 = vlaneseq
      %v2855 = vshrl.u32 %v2854, 7
      %v2856 = vsub.s32 0, %v2855
      %v2857 = vrot.slane %v2852, %v2856
      %v2858 = vlaneseq
      %v2859 = vshrl.u32 %v2858, 7
      %v2860 = vsub.s32 1, %v2859
      %v2861 = vrot.slane %v2852, %v2860
      %v2872 = vunpack.c.l.b16 %v2843
      %v2873 = vunpack.c.h.b16 %v2843
      %v2874 = vunpack.c.l.b16 %v2844
      %v2875 = vunpack.c.h.b16 %v2844
      %v2876 = vunpack.c.l.b16 %v2845
      %v2877 = vunpack.c.h.b16 %v2845
      %v2878 = vunpack.c.l.b16 %v2846
      %v2879 = vunpack.c.h.b16 %v2846
      %v2880 = vunpack.c.l.b16 %v2847
      %v2881 = vunpack.c.h.b16 %v2847
      %v2882 = vunpack.c.l.b16 %v2848
      %v2883 = vunpack.c.h.b16 %v2848
      %v2884 = vunpack.c.l.b16 %v2849
      %v2885 = vunpack.c.h.b16 %v2849
      %v2886 = vunpack.c.l.b16 %v2850
      %v2887 = vunpack.c.h.b16 %v2850
      %v2888 = vpack.c.b16 %v2874, %v2872
      %v2889 = vpack.c.b16 %v2875, %v2873
      %v2890 = vpack.c.b16 %v2878, %v2876
      %v2891 = vpack.c.b16 %v2879, %v2877
      %v2892 = vpack.c.b16 %v2882, %v2880
      %v2893 = vpack.c.b16 %v2883, %v2881
      %v2894 = vpack.c.b16 %v2886, %v2884
      %v2895 = vpack.c.b16 %v2887, %v2885
      %v2905 = vsel %vm1150, %v2851, 0
      %2907 = vmatprep.subr.bf16.mxu0 %v2889
      %2908 = vmatpush1.bf16.msra.mxu0 %v2888
      %2909 = vmatprep.subr.bf16.mxu0 %v2891
      %2910 = vmatpush1.bf16.msra.mxu0 %v2890
      %2911 = vmatprep.subr.bf16.mxu0 %v2893
      %2912 = vmatpush1.bf16.msra.mxu0 %v2892
      %2913 = vmatprep.subr.bf16.mxu0 %v2895
      %2914 = vmatpush1.bf16.msra.mxu0 %v2894
      %2915 = vmatprep.subr.bf16.mxu0 0
      %2916 = vmatpush1.bf16.msra.mxu0 0
      %2917 = vmatprep.subr.bf16.mxu0 0
      %2918 = vmatpush1.bf16.msra.mxu0 0
      %2919 = vmatprep.subr.bf16.mxu0 0
      %2920 = vmatpush1.bf16.msra.mxu0 0
      %2921 = vmatprep.subr.bf16.mxu0 0
      %2922 = vmatpush1.bf16.msra.mxu0 0
      %2923 = vmatprep.subr.bf16.mxu0 0
      %2924 = vmatpush1.bf16.msra.mxu0 0
      %2925 = vmatprep.subr.bf16.mxu0 0
      %2926 = vmatpush1.bf16.msra.mxu0 0
      %2927 = vmatprep.subr.bf16.mxu0 0
      %2928 = vmatpush1.bf16.msra.mxu0 0
      %2929 = vmatprep.subr.bf16.mxu0 0
      %2930 = vmatpush1.bf16.msra.mxu0 0
      %2931 = vmatprep.subr.bf16.mxu0 0
      %2932 = vmatpush1.bf16.msra.mxu0 0
      %2933 = vmatprep.subr.bf16.mxu0 0
      %2934 = vmatpush1.bf16.msra.mxu0 0
      %2935 = vmatprep.subr.bf16.mxu0 0
      %2936 = vmatpush1.bf16.msra.mxu0 0
      %2937 = vmatprep.subr.bf16.mxu0 0
      %2938 = vmatpush1.bf16.msra.mxu0 0
      %2939 = vmatprep.mubr.bf16.mxu0 0
      %2940 = vmatmul.mubr.bf16.gmra.mrb[0].mxu0 %v2905
      %v2941 = vpop.f32.mrb[0].mxu0
      %v2942 = vadd.f32 %v2857, %v2941
      %v2943 = vpop.f32.mrb[0].mxu0
      %v2944 = vadd.f32 %v2861, %v2943
      %v2945 = vpop.f32.mrb[0].mxu0
      %v2946 = vpop.f32.mrb[0].mxu0
      %2947 = vdwg.mxu0
      %v2948 = vmul.f32 %v2942, 0.5
      %v2949 = vmul.f32 %v2944, 0.5
      %v2950 = vmul.f32 %v2942, 0.044715
      %v2951 = vmul.f32 %v2944, 0.044715
      %v2952 = vmul.f32 %v2950, %v2942
      %v2953 = vmul.f32 %v2951, %v2944
      %v2954 = vmul.f32 %v2952, %v2942
      %v2955 = vmul.f32 %v2953, %v2944
      %v2956 = vadd.f32 %v2942, %v2954
      %v2957 = vadd.f32 %v2944, %v2955
      %v2958 = vmul.f32 %v2956, 0.7978846
      %v2959 = vmul.f32 %v2957, 0.7978846
      %v2960 = vtanh.pop %v2958
      %v2961 = vtanh.pop %v2959
      %v2962 = vadd.f32 %v2960, 1.0
      %v2963 = vadd.f32 %v2961, 1.0
      %v2964 = vmul.f32 %v2948, %v2962
      %v2965 = vmul.f32 %v2949, %v2963
      %v2966 = vld [vmem:[%s1063] sm:$0xf]
      %v2967 = vld [vmem:[%s1063 + $0x4] sm:$0xf]
      %v2968 = vld [vmem:[%s1063 + $0x8] sm:$0xf]
      %v2969 = vld [vmem:[%s1063 + $0xc] sm:$0xf]
      %v2970 = vld [vmem:[%s1063 + $0x10] sm:$0xf]
      %v2971 = vld [vmem:[%s1063 + $0x14] sm:$0xf]
      %v2972 = vld [vmem:[%s1063 + $0x18] sm:$0xf]
      %v2973 = vld [vmem:[%s1063 + $0x1c] sm:$0xf]
      %v2974 = vld [vmem:[%s1063 + $0x20] sm:$0xf]
      %v2975 = vld [vmem:[%s1063 + $0x24] sm:$0xf]
      %v2976 = vld [vmem:[%s1063 + $0x28] sm:$0xf]
      %v2977 = vld [vmem:[%s1063 + $0x2c] sm:$0xf]
      %v2978 = vld [vmem:[%s1063 + $0x30] sm:$0xf]
      %v2979 = vld [vmem:[%s1063 + $0x34] sm:$0xf]
      %v2980 = vld [vmem:[%s1063 + $0x38] sm:$0xf]
      %v2981 = vld [vmem:[%s1063 + $0x3c] sm:$0xf]
      %v2982 = vld [vmem:[%s1063 + $0x40] sm:$0xf]
      %v2983 = vld [vmem:[%s1063 + $0x44] sm:$0xf]
      %v2984 = vld [vmem:[%s1063 + $0x48] sm:$0xf]
      %v2985 = vld [vmem:[%s1063 + $0x4c] sm:$0xf]
      %v2986 = vld [vmem:[%s1063 + $0x50] sm:$0xf]
      %v2987 = vld [vmem:[%s1063 + $0x54] sm:$0xf]
      %v2988 = vld [vmem:[%s1063 + $0x58] sm:$0xf]
      %v2989 = vld [vmem:[%s1063 + $0x5c] sm:$0xf]
      %v2990 = vld [vmem:[%s1063 + $0x60] sm:$0xf]
      %v2991 = vld [vmem:[%s1063 + $0x64] sm:$0xf]
      %v2992 = vld [vmem:[%s1063 + $0x68] sm:$0xf]
      %v2993 = vld [vmem:[%s1063 + $0x6c] sm:$0xf]
      %v2994 = vld [vmem:[%s1063 + $0x70] sm:$0xf]
      %v2995 = vld [vmem:[%s1063 + $0x74] sm:$0xf]
      %v2996 = vld [vmem:[%s1063 + $0x78] sm:$0xf]
      %v2997 = vld [vmem:[%s1063 + $0x7c] sm:$0xf]
      %v2998 = vpack.c.bf16 %v2964, %v2964
      %v2999 = vpack.c.bf16 %v2965, %v2965
      %v3032 = vunpack.c.l.b16 %v2966
      %v3033 = vunpack.c.l.b16 %v2967
      %v3034 = vunpack.c.l.b16 %v2968
      %v3035 = vunpack.c.l.b16 %v2969
      %v3036 = vunpack.c.l.b16 %v2970
      %v3037 = vunpack.c.l.b16 %v2971
      %v3038 = vunpack.c.l.b16 %v2972
      %v3039 = vunpack.c.l.b16 %v2973
      %v3040 = vunpack.c.l.b16 %v2974
      %v3041 = vunpack.c.l.b16 %v2975
      %v3042 = vunpack.c.l.b16 %v2976
      %v3043 = vunpack.c.l.b16 %v2977
      %v3044 = vunpack.c.l.b16 %v2978
      %v3045 = vunpack.c.l.b16 %v2979
      %v3046 = vunpack.c.l.b16 %v2980
      %v3047 = vunpack.c.l.b16 %v2981
      %v3048 = vunpack.c.l.b16 %v2982
      %v3049 = vunpack.c.l.b16 %v2983
      %v3050 = vunpack.c.l.b16 %v2984
      %v3051 = vunpack.c.l.b16 %v2985
      %v3052 = vunpack.c.l.b16 %v2986
      %v3053 = vunpack.c.l.b16 %v2987
      %v3054 = vunpack.c.l.b16 %v2988
      %v3055 = vunpack.c.l.b16 %v2989
      %v3056 = vunpack.c.l.b16 %v2990
      %v3057 = vunpack.c.l.b16 %v2991
      %v3058 = vunpack.c.l.b16 %v2992
      %v3059 = vunpack.c.l.b16 %v2993
      %v3060 = vunpack.c.l.b16 %v2994
      %v3061 = vunpack.c.l.b16 %v2995
      %v3062 = vunpack.c.l.b16 %v2996
      %v3063 = vunpack.c.l.b16 %v2997
      %v3064 = vpack.c.b16 %v3033, %v3032
      %v3065 = vpack.c.b16 %v3035, %v3034
      %v3066 = vpack.c.b16 %v3037, %v3036
      %v3067 = vpack.c.b16 %v3039, %v3038
      %v3068 = vpack.c.b16 %v3041, %v3040
      %v3069 = vpack.c.b16 %v3043, %v3042
      %v3070 = vpack.c.b16 %v3045, %v3044
      %v3071 = vpack.c.b16 %v3047, %v3046
      %v3072 = vpack.c.b16 %v3049, %v3048
      %v3073 = vpack.c.b16 %v3051, %v3050
      %v3074 = vpack.c.b16 %v3053, %v3052
      %v3075 = vpack.c.b16 %v3055, %v3054
      %v3076 = vpack.c.b16 %v3057, %v3056
      %v3077 = vpack.c.b16 %v3059, %v3058
      %v3078 = vpack.c.b16 %v3061, %v3060
      %v3079 = vpack.c.b16 %v3063, %v3062
      %3096 = vmatprep.subr.bf16.mxu0 0
      %3097 = vmatpush1.bf16.msra.mxu0 %v3064
      %3098 = vmatprep.subr.bf16.mxu0 0
      %3099 = vmatpush1.bf16.msra.mxu0 %v3065
      %3100 = vmatprep.subr.bf16.mxu0 0
      %3101 = vmatpush1.bf16.msra.mxu0 %v3066
      %3102 = vmatprep.subr.bf16.mxu0 0
      %3103 = vmatpush1.bf16.msra.mxu0 %v3067
      %3104 = vmatprep.subr.bf16.mxu0 0
      %3105 = vmatpush1.bf16.msra.mxu0 %v3068
      %3106 = vmatprep.subr.bf16.mxu0 0
      %3107 = vmatpush1.bf16.msra.mxu0 %v3069
      %3108 = vmatprep.subr.bf16.mxu0 0
      %3109 = vmatpush1.bf16.msra.mxu0 %v3070
      %3110 = vmatprep.subr.bf16.mxu0 0
      %3111 = vmatpush1.bf16.msra.mxu0 %v3071
      %3112 = vmatprep.subr.bf16.mxu0 0
      %3113 = vmatpush1.bf16.msra.mxu0 %v3072
      %3114 = vmatprep.subr.bf16.mxu0 0
      %3115 = vmatpush1.bf16.msra.mxu0 %v3073
      %3116 = vmatprep.subr.bf16.mxu0 0
      %3117 = vmatpush1.bf16.msra.mxu0 %v3074
      %3118 = vmatprep.subr.bf16.mxu0 0
      %3119 = vmatpush1.bf16.msra.mxu0 %v3075
      %3120 = vmatprep.subr.bf16.mxu0 0
      %3121 = vmatpush1.bf16.msra.mxu0 %v3076
      %3122 = vmatprep.subr.bf16.mxu0 0
      %3123 = vmatpush1.bf16.msra.mxu0 %v3077
      %3124 = vmatprep.subr.bf16.mxu0 0
      %3125 = vmatpush1.bf16.msra.mxu0 %v3078
      %3126 = vmatprep.subr.bf16.mxu0 0
      %3127 = vmatpush1.bf16.msra.mxu0 %v3079
      %3128 = vmatprep.mubr.bf16.mxu0 %v2999
      %3129 = vmatmul.mubr.bf16.gmra.mrb[0].mxu0 %v2998
      %v3130 = vpop.f32.mrb[0].mxu0
      %v3131 = vadd.f32 0.0, %v3130
      %v3132 = vpop.f32.mrb[0].mxu0
      %v3133 = vpop.f32.mrb[0].mxu0
      %v3134 = vpop.f32.mrb[0].mxu0
      %3135 = vdwg.mxu0
      %v3136 = vadd.f32 %v2811, %v3131
      %v3137 = vld [vmem:[%s1066] sm:$0x1]
      %v3139 = vlaneseq
      %v3140 = vshrl.u32 %v3139, 7
      %v3141 = vsub.s32 0, %v3140
      %v3142 = vrot.slane %v3137, %v3141
      %v3144 = vadd.f32 %v3136, %v3142
      %3145 = vst.msk [vmem:[#allocation2] sm:$0xff] %vm1150, %v3144
      %p3146 = scmp.eq.s32.totalorder %s42, 1
      // Predicated region
      $region129: #{pretrained_gpt2_forward.1} parent=123 // pred_check
        %p3147 = pneg %p3146
      $region130: #{pretrained_gpt2_forward.1} parent=123 // pred_check_branch
        %3149 = sbr.rel (%p3147) target = $region132
      $region131: #{pretrained_gpt2_forward.1} parent=123 // pred_region
        %v3150 = vld [vmem:[%s20] sm:$0x1]
        %v3151 = vld [vmem:[%s21] sm:$0x1]
        %v3152 = vsel %vm1150, %v3144, 0.0
        %3153 = vadd.xlane.f32.xlu0 %v3152
        %v3154 = vpop.xlane.xlu0 %3153
        %v3155 = vmul.f32 %v3154, %v1154
        %v3156 = vmul.f32 %v3144, %v3144
        %v3157 = vsel %vm1150, %v3156, 0.0
        %3158 = vadd.xlane.f32.xlu0 %v3157
        %v3159 = vpop.xlane.xlu0 %3158
        %v3160 = vmul.f32 %v3159, %v1154
        %v3161 = vmul.f32 %v3155, %v3155
        %v3162 = vsub.f32 %v3160, %v3161
        %v3163 = vsub.f32 %v3144, %v3155
        %v3164 = vadd.f32 %v3162, 1e-05
        %v3165 = vrsqrt.pop %v3164
        %v3166 = vmul.f32 %v3163, %v3165
        %v3168 = vlaneseq
        %v3169 = vshrl.u32 %v3168, 7
        %v3170 = vsub.s32 0, %v3169
        %v3171 = vrot.slane %v3150, %v3170
        %v3173 = vmul.f32 %v3166, %v3171
        %v3175 = vlaneseq
        %v3176 = vshrl.u32 %v3175, 7
        %v3177 = vsub.s32 0, %v3176
        %v3178 = vrot.slane %v3151, %v3177
        %v3180 = vadd.f32 %v3173, %v3178
        %v3181 = vld [vmem:[%s22] sm:$0xf]
        %v3182 = vld [vmem:[%s22 + $0x4] sm:$0xf]
        %v3183 = vld [vmem:[%s22 + $0x8] sm:$0xf]
        %v3184 = vld [vmem:[%s22 + $0xc] sm:$0xf]
        %v3185 = vld [vmem:[%s22 + $0x10] sm:$0xf]
        %v3186 = vld [vmem:[%s22 + $0x14] sm:$0xf]
        %v3187 = vld [vmem:[%s22 + $0x18] sm:$0xf]
        %v3188 = vld [vmem:[%s22 + $0x1c] sm:$0xf]
        %v3189 = vpack.c.bf16 %v3180, %v3180
        %v3190 = vld [vmem:[%s23] sm:$0x1]
        %v3192 = vlaneseq
        %v3193 = vshrl.u32 %v3192, 7
        %v3194 = vsub.s32 0, %v3193
        %v3195 = vrot.slane %v3190, %v3194
        %v3205 = vunpack.c.l.b16 %v3181
        %v3206 = vunpack.c.l.b16 %v3182
        %v3207 = vunpack.c.l.b16 %v3183
        %v3208 = vunpack.c.l.b16 %v3184
        %v3209 = vunpack.c.l.b16 %v3185
        %v3210 = vunpack.c.l.b16 %v3186
        %v3211 = vunpack.c.l.b16 %v3187
        %v3212 = vunpack.c.l.b16 %v3188
        %v3213 = vpack.c.b16 %v3206, %v3205
        %v3214 = vpack.c.b16 %v3208, %v3207
        %v3215 = vpack.c.b16 %v3210, %v3209
        %v3216 = vpack.c.b16 %v3212, %v3211
        %v3222 = vsel %vm1150, %v3189, 0
        %3224 = vmatprep.subr.bf16.mxu0 0
        %3225 = vmatpush1.bf16.msra.mxu0 %v3213
        %3226 = vmatprep.subr.bf16.mxu0 0
        %3227 = vmatpush1.bf16.msra.mxu0 %v3214
        %3228 = vmatprep.subr.bf16.mxu0 0
        %3229 = vmatpush1.bf16.msra.mxu0 %v3215
        %3230 = vmatprep.subr.bf16.mxu0 0
        %3231 = vmatpush1.bf16.msra.mxu0 %v3216
        %3232 = vmatprep.subr.bf16.mxu0 0
        %3233 = vmatpush1.bf16.msra.mxu0 0
        %3234 = vmatprep.subr.bf16.mxu0 0
        %3235 = vmatpush1.bf16.msra.mxu0 0
        %3236 = vmatprep.subr.bf16.mxu0 0
        %3237 = vmatpush1.bf16.msra.mxu0 0
        %3238 = vmatprep.subr.bf16.mxu0 0
        %3239 = vmatpush1.bf16.msra.mxu0 0
        %3240 = vmatprep.subr.bf16.mxu0 0
        %3241 = vmatpush1.bf16.msra.mxu0 0
        %3242 = vmatprep.subr.bf16.mxu0 0
        %3243 = vmatpush1.bf16.msra.mxu0 0
        %3244 = vmatprep.subr.bf16.mxu0 0
        %3245 = vmatpush1.bf16.msra.mxu0 0
        %3246 = vmatprep.subr.bf16.mxu0 0
        %3247 = vmatpush1.bf16.msra.mxu0 0
        %3248 = vmatprep.subr.bf16.mxu0 0
        %3249 = vmatpush1.bf16.msra.mxu0 0
        %3250 = vmatprep.subr.bf16.mxu0 0
        %3251 = vmatpush1.bf16.msra.mxu0 0
        %3252 = vmatprep.subr.bf16.mxu0 0
        %3253 = vmatpush1.bf16.msra.mxu0 0
        %3254 = vmatprep.subr.bf16.mxu0 0
        %3255 = vmatpush1.bf16.msra.mxu0 0
        %3256 = vmatprep.mubr.bf16.mxu0 0
        %3257 = vmatmul.mubr.bf16.gmra.mrb[0].mxu0 %v3222
        %v3258 = vpop.f32.mrb[0].mxu0
        %v3259 = vadd.f32 %v3195, %v3258
        %v3260 = vpop.f32.mrb[0].mxu0
        %v3261 = vpop.f32.mrb[0].mxu0
        %v3262 = vpop.f32.mrb[0].mxu0
        %3263 = vdwg.mxu0
        %v3264 = vmax.f32 %v3259, 0.0
        %v3265 = vld [vmem:[%s24] sm:$0xf]
        %v3266 = vld [vmem:[%s24 + $0x4] sm:$0xf]
        %v3267 = vld [vmem:[%s24 + $0x8] sm:$0xf]
        %v3268 = vld [vmem:[%s24 + $0xc] sm:$0xf]
        %v3269 = vpack.c.bf16 %v3264, %v3264
        %v3270 = vld [vmem:[%s25] sm:$0x1]
        %v3272 = vlaneseq
        %v3273 = vshrl.u32 %v3272, 7
        %v3274 = vsub.s32 0, %v3273
        %v3275 = vrot.slane %v3270, %v3274
        %v3281 = vunpack.c.l.b16 %v3265
        %v3282 = vunpack.c.l.b16 %v3266
        %v3283 = vunpack.c.l.b16 %v3267
        %v3284 = vunpack.c.l.b16 %v3268
        %v3285 = vpack.c.b16 %v3282, %v3281
        %v3286 = vpack.c.b16 %v3284, %v3283
        %vm3289 = vcmask 261120
        %v3291 = vsel %vm3289, %v3269, 0
        %3293 = vmatprep.subr.bf16.mxu0 0
        %3294 = vmatpush1.bf16.msra.mxu0 %v3285
        %3295 = vmatprep.subr.bf16.mxu0 0
        %3296 = vmatpush1.bf16.msra.mxu0 %v3286
        %3297 = vmatprep.subr.bf16.mxu0 0
        %3298 = vmatpush1.bf16.msra.mxu0 0
        %3299 = vmatprep.subr.bf16.mxu0 0
        %3300 = vmatpush1.bf16.msra.mxu0 0
        %3301 = vmatprep.subr.bf16.mxu0 0
        %3302 = vmatpush1.bf16.msra.mxu0 0
        %3303 = vmatprep.subr.bf16.mxu0 0
        %3304 = vmatpush1.bf16.msra.mxu0 0
        %3305 = vmatprep.subr.bf16.mxu0 0
        %3306 = vmatpush1.bf16.msra.mxu0 0
        %3307 = vmatprep.subr.bf16.mxu0 0
        %3308 = vmatpush1.bf16.msra.mxu0 0
        %3309 = vmatprep.subr.bf16.mxu0 0
        %3310 = vmatpush1.bf16.msra.mxu0 0
        %3311 = vmatprep.subr.bf16.mxu0 0
        %3312 = vmatpush1.bf16.msra.mxu0 0
        %3313 = vmatprep.subr.bf16.mxu0 0
        %3314 = vmatpush1.bf16.msra.mxu0 0
        %3315 = vmatprep.subr.bf16.mxu0 0
        %3316 = vmatpush1.bf16.msra.mxu0 0
        %3317 = vmatprep.subr.bf16.mxu0 0
        %3318 = vmatpush1.bf16.msra.mxu0 0
        %3319 = vmatprep.subr.bf16.mxu0 0
        %3320 = vmatpush1.bf16.msra.mxu0 0
        %3321 = vmatprep.subr.bf16.mxu0 0
        %3322 = vmatpush1.bf16.msra.mxu0 0
        %3323 = vmatprep.subr.bf16.mxu0 0
        %3324 = vmatpush1.bf16.msra.mxu0 0
        %3325 = vmatprep.mubr.bf16.mxu0 0
        %3326 = vmatmul.mubr.bf16.gmra.mrb[0].mxu0 %v3291
        %v3327 = vpop.f32.mrb[0].mxu0
        %v3328 = vadd.f32 %v3275, %v3327
        %v3329 = vpop.f32.mrb[0].mxu0
        %v3330 = vpop.f32.mrb[0].mxu0
        %v3331 = vpop.f32.mrb[0].mxu0
        %3332 = vdwg.mxu0
        %3333 = vst [vmem:[%s1070] sm:$0xff] %v3328
      $region132: #{pretrained_gpt2_forward.1} parent=123 // pred_fallthru
        _
      %p3334 = scmp.lt.s32.totalorder %s41, 1
      %s3335 = scalar_select %p3334, %s41, 1
      %s3336 = smul.addr %s3335, 8
      %s3337 = scalar_lea.vmem %s26, %s3336
      // Predicated region
      $region133: #{pretrained_gpt2_forward.1} parent=123 // pred_check
        %p3338 = pneg %p698
      $region134: #{pretrained_gpt2_forward.1} parent=123 // pred_check_branch
        %3340 = sbr.rel (%p3338) target = $region136
      $region135: #{pretrained_gpt2_forward.1} parent=123 // pred_region
        _
      $region136: #{pretrained_gpt2_forward.1} parent=123 // pred_fallthru
        _
    $region124: #{pretrained_gpt2_forward.1} parent=5 // pred_fallthru
      _
    %p3341 = scmp.le.s32.totalorder 2, %s32
    // Predicated region
    $region137: #{pretrained_gpt2_forward.1} parent=5 // pred_check
      %p3342 = pneg %p3341
    $region138: #{pretrained_gpt2_forward.1} parent=5 // pred_check_branch
      %3344 = sbr.rel (%p3342) target = $region140
    $region139: #{pretrained_gpt2_forward.1} parent=5 // pred_region
      %s3345 = ssub.s32 %s32, 2
      // Predicated region
      $region141: #{pretrained_gpt2_forward.1} parent=139 // pred_check
        %p3346 = pneg %p704
      $region142: #{pretrained_gpt2_forward.1} parent=139 // pred_check_branch
        %3348 = sbr.rel (%p3346) target = $region144
      $region143: #{pretrained_gpt2_forward.1} parent=139 // pred_region
        %p3349 = scmp.lt.s32.totalorder %s43, 1
        %s3350 = scalar_select %p3349, %s43, 1
        %s3351 = smul.addr %s3350, 8
        %s3352 = scalar_lea.vmem %s26, %s3351
      $region144: #{pretrained_gpt2_forward.1} parent=139 // pred_fallthru
        _
    $region140: #{pretrained_gpt2_forward.1} parent=5 // pred_fallthru
      _
  $region6: #{pretrained_gpt2_forward.1} parent=0 // loop_footer
    %s36 = sadd.s32 1, %s32
  $region7: #{pretrained_gpt2_forward.1} parent=0 // loop_footer_branch
    %31 = sbr.rel target = $region3
  $region8: #{pretrained_gpt2_forward.1} parent=0 // loop_exit
    _

</llo_original>
